<compile_context>
chip_gen: v5e
topology: v5e:2x2
jax: 0.10.0
libtpu: 0.0.40
codegen_flags: <defaults>
</compile_context>

<pallas_src>
import functools
import math

import jax
import jax.numpy as jnp
import numpy as np
from jax.experimental import pallas as pl
from jax.experimental.pallas import tpu as pltpu


# ------------------------------ fused Pallas kernel -------------------------------

def _resnet_fused_kernel(*refs, cfg):
    """Whole ResNet forward for one batch tile (cfg['b_tile'] images)."""
    n_in = cfg["n_inputs"]
    o_ref = refs[n_in]            # (1, num_classes, b_tile) output block
    hbuf = refs[n_in + 1]         # (c_max, buf_w) f32 flat halo scratch in VMEM
    it = iter(refs[:n_in])

    x_ref = next(it)
    conv1_w = next(it)
    blk_refs = []
    for blk in cfg["blocks"]:
        w1 = next(it)
        w2 = next(it)
        wsc = next(it) if blk["has_sc"] else None
        dec = next(it) if blk["stride"] == 2 else None
        blk_refs.append((w1, w2, wsc, dec))
    mask_refs = [next(it) for _ in cfg["stages"]]
    fc_w = next(it)
    fc_b = next(it)

    stages = cfg["stages"]        # tuple of (H, W, base_lane_offset) per resolution
    rows = hbuf.shape[0]

    # Zero ONLY the pad strips of each stage's region, once per grid step.  Interiors are
    # fully overwritten by every conv before being read; pads are never written again.
    for (H, W, base) in stages:
        N, p = H * W, W + 1
        hbuf[:, base:base + p] = jnp.zeros((rows, p), jnp.float32)
        hbuf[:, base + p + N:base + 2 * p + N] = jnp.zeros((rows, p), jnp.float32)

    def conv3x3(h, w9_ref, stage):
        # h: (Cin, N) f32 value, N = H*W on lanes; returns (Cout, N) f32.
        Cin, N = h.shape
        H, W, base = stages[stage]
        start = base + W + 1
        hbuf[0:Cin, start:start + N] = h                     # interior write (pads stay 0)
        m_left = mask_refs[stage][0:1, :]                    # zero where x == 0
        m_right = mask_refs[stage][1:2, :]                   # zero where x == W-1
        acc = None
        for ky in range(3):
            for kx in range(3):
                s = (ky - 1) * W + (kx - 1)
                tap = hbuf[0:Cin, start + s:start + s + N]   # lane-offset tap load
                if kx == 0:
                    tap = tap * m_left
                elif kx == 2:
                    tap = tap * m_right
                d = jnp.dot(w9_ref[ky * 3 + kx], tap,
                            preferred_element_type=jnp.float32)
                acc = d if acc is None else acc + d
        return acc

    for b in range(cfg["b_tile"]):
        h = x_ref[0, b].astype(jnp.float32)                  # (3, H0*W0)
        h = jnp.maximum(conv3x3(h, conv1_w, 0), 0.0)         # conv1 + ReLU (reg='none')

        stage = 0
        for blk, (w1, w2, wsc, dec) in zip(cfg["blocks"], blk_refs):
            t = conv3x3(h, w1, stage)                        # block conv1 (stride-1 form)
            if blk["stride"] == 2:
                dmat = dec[...]                              # (N_in, N_out) 0/1 selector
                t = jnp.dot(t, dmat, preferred_element_type=jnp.float32)
                sc_in = jnp.dot(h, dmat, preferred_element_type=jnp.float32)
                stage += 1
            else:
                sc_in = h
            t = jnp.maximum(t, 0.0)                          # ReLU after block conv1
            t2 = conv3x3(t, w2, stage)                       # block conv2
            if wsc is not None:                              # fused 1x1 shortcut
                sc = jnp.dot(wsc[...], sc_in, preferred_element_type=jnp.float32)
            else:
                sc = sc_in
            h = jnp.maximum(t2 + sc, 0.0)                    # residual add + ReLU

        # head: fc then mean over spatial (== mean-then-fc by linearity), fused.
        Hs, Ws, _ = stages[stage]
        z = jnp.dot(fc_w[...], h, preferred_element_type=jnp.float32)   # (nc, N_last)
        logits = (jnp.sum(z, axis=1, keepdims=True) * (1.0 / float(Hs * Ws))
                  + fc_b[...])                                          # (nc, 1)
        o_ref[0, :, b:b + 1] = logits.astype(o_ref.dtype)


# ----------------------------- host-side helpers ----------------------------------

def _col_masks(H, W):
    # (2, H*W): row 0 zeroes x==0 (dx=-1 taps), row 1 zeroes x==W-1 (dx=+1 taps).
    x_idx = np.arange(H * W) % W
    m = np.stack([(x_idx != 0), (x_idx != W - 1)]).astype(np.float32)
    return jnp.asarray(m)


def _decim_matrix(H, W):
    # (H*W, Ho*Wo) 0/1 selector picking even spatial positions (stride-2 decimation).
    Ho, Wo = (H + 1) // 2, (W + 1) // 2
    d = np.zeros((H * W, Ho * Wo), np.float32)
    for yo in range(Ho):
        for xo in range(Wo):
            d[(2 * yo) * W + 2 * xo, yo * Wo + xo] = 1.0
    return jnp.asarray(d)


# --------------------------------- wrapper ----------------------------------------

def resnet_forward(x_nchw, params, b_tile=None):
    """Fused Pallas forward. Input NCHW (PyTorch convention)."""
    x = x_nchw.astype(jnp.float32)
    B, C_img, H0, W0 = x.shape
    num_classes = params["fc_w"].shape[-1]

    # Batch tiling: amortize per-step overhead but keep >=2 grid steps (two v7x TCs).
    if b_tile is None:
        b_tile = max(1, B // 2)
        while B % b_tile:
            b_tile -= 1
    num_steps = B // b_tile
    n0 = H0 * W0
    x_k = x.reshape(num_steps, b_tile, C_img, n0)            # channel-major, flat spatial

    # Walk the net once: weights in kernel layout, per-block cfg, per-stage resolutions.
    weight_arrays = [params["conv1_w9"]]
    blocks_cfg = []
    stages_hw = [(H0, W0)]
    c_max = max(8, C_img)
    H, W = H0, W0
    for sec in params["sections"]:
        for blk in sec:
            stride = blk["stride"]
            cout, cin = blk["w1_9"].shape[1], blk["w1_9"].shape[2]
            c_max = max(c_max, cin, cout)
            weight_arrays.append(blk["w1_9"])
            weight_arrays.append(blk["w2_9"])
            has_sc = blk["wsc_t"] is not None
            if has_sc:
                weight_arrays.append(blk["wsc_t"])
            if stride == 2:
                weight_arrays.append(_decim_matrix(H, W))
                H, W = (H + 1) // 2, (W + 1) // 2
                stages_hw.append((H, W))
            blocks_cfg.append(dict(stride=stride, has_sc=has_sc))

    weight_arrays += [_col_masks(h_, w_) for (h_, w_) in stages_hw]
    weight_arrays.append(jnp.transpose(params["fc_w"]))               # (nc, C_last)
    weight_arrays.append(params["fc_b"].reshape(num_classes, 1))

    # Disjoint flat-halo region per resolution stage: [pad W+1 | N | pad W+1].
    stages = []
    off = 0
    for (h_, w_) in stages_hw:
        stages.append((h_, w_, off))
        off += h_ * w_ + 2 * (w_ + 1)
    buf_w = ((off + 127) // 128) * 128

    inputs = [x_k] + weight_arrays
    in_specs = [pl.BlockSpec((1, b_tile, C_img, n0), lambda s: (s, 0, 0, 0))]
    for arr in weight_arrays:                                         # VMEM-resident consts
        in_specs.append(pl.BlockSpec(arr.shape, lambda s, n=arr.ndim: (0,) * n))

    cfg = dict(
        n_inputs=len(inputs),
        b_tile=b_tile,
        stages=tuple(stages),
        blocks=tuple(blocks_cfg),
    )

    out = pl.pallas_call(
        functools.partial(_resnet_fused_kernel, cfg=cfg),
        out_shape=jax.ShapeDtypeStruct((num_steps, num_classes, b_tile), jnp.float32),
        grid=(num_steps,),
        in_specs=in_specs,
        out_specs=pl.BlockSpec((1, num_classes, b_tile), lambda s: (s, 0, 0)),
        scratch_shapes=[pltpu.VMEM((c_max, buf_w), jnp.float32)],
        compiler_params=pltpu.CompilerParams(dimension_semantics=("parallel",)),
    )(*inputs)
    return jnp.transpose(out, (0, 2, 1)).reshape(B, num_classes)


# ---------------------------- parameters / init -----------------------------------

def _conv_init(key, kh, kw, cin, cout):
    # PyTorch init: normal(0, sqrt(2 / (k*k*out_channels))), weight shape (Cout,Cin,kh,kw).
    n = kh * kw * cout
    w = jax.random.normal(key, (cout, cin, kh, kw), jnp.float32) * math.sqrt(2.0 / n)
    return jnp.transpose(w, (2, 3, 1, 0))  # -> HWIO


def _to_tap_weight(w_hwio):
    # HWIO (3,3,Cin,Cout) -> (9, Cout, Cin): one (Cout, Cin) matrix per conv tap.
    kh, kw, cin, cout = w_hwio.shape
    return jnp.transpose(w_hwio, (0, 1, 3, 2)).reshape(kh * kw, cout, cin)


def init_params(key, layers=(1, 1, 1), filters=(4, 8, 16), num_classes=10):
    keys = iter(jax.random.split(key, 64))
    params = {}
    inplanes = filters[0]
    w1c = _conv_init(next(keys), 3, 3, 3, inplanes)
    params["conv1"] = w1c                       # HWIO (for the pure-JAX reference)
    params["conv1_w9"] = _to_tap_weight(w1c)    # (9, C0, 3)  (kernel layout)

    sections = []
    for si, (size, planes) in enumerate(zip(layers, filters)):
        sec = []
        for li in range(size):
            stride = 2 if (si != 0 and li == 0) else 1
            w1 = _conv_init(next(keys), 3, 3, inplanes, planes)
            w2 = _conv_init(next(keys), 3, 3, planes, planes)
            if stride != 1 or inplanes != planes:
                w_sc = _conv_init(next(keys), 1, 1, inplanes, planes).reshape(inplanes, planes)
                wsc_t = jnp.transpose(w_sc)     # (Cout, Cin)
            else:
                w_sc, wsc_t = None, None
            sec.append(dict(stride=stride, w1=w1, w2=w2, w_sc=w_sc,
                            w1_9=_to_tap_weight(w1), w2_9=_to_tap_weight(w2),
                            wsc_t=wsc_t))
            inplanes = planes                   # BasicBlock.expansion == 1
        sections.append(sec)
    params["sections"] = sections

    # fc: PyTorch default nn.Linear init (uniform +-1/sqrt(fan_in)).
    fan_in = filters[-1]
    bound = 1.0 / math.sqrt(fan_in)
    params["fc_w"] = jax.random.uniform(next(keys), (fan_in, num_classes),
                                        jnp.float32, -bound, bound)
    params["fc_b"] = jax.random.uniform(next(keys), (num_classes,),
                                        jnp.float32, -bound, bound)
    return params


# ------------------------------ pure-JAX reference --------------------------------

def _conv_ref(x, w, stride, padding):
    return jax.lax.conv_general_dilated(
        x, w, window_strides=(stride, stride), padding=padding,
        dimension_numbers=("NHWC", "HWIO", "NHWC"),
        precision=jax.lax.Precision.HIGHEST)


def resnet_ref(x_nchw, params):
    h = jnp.transpose(x_nchw, (0, 2, 3, 1))
    h = jax.nn.relu(_conv_ref(h, params["conv1"], 1, ((1, 1), (1, 1))))
    for sec in params["sections"]:
        for blk in sec:
            s = blk["stride"]
            t = jax.nn.relu(_conv_ref(h, blk["w1"], s, ((1, 1), (1, 1))))
            t = _conv_ref(t, blk["w2"], 1, ((1, 1), (1, 1)))
            if blk["w_sc"] is not None:
                cin, cout = blk["w_sc"].shape
                sc = _conv_ref(h, blk["w_sc"].reshape(1, 1, cin, cout), s, "VALID")
            else:
                sc = h
            h = jax.nn.relu(t + sc)
    pooled = jnp.mean(h, axis=(1, 2))
    return pooled @ params["fc_w"] + params["fc_b"]


# ---------------------------------------- main -------------------------------------

if __name__ == "__main__":
    key = jax.random.PRNGKey(0)
    kp, kx = jax.random.split(key)
    params = init_params(kp, layers=(1, 1, 1), filters=(4, 8, 16), num_classes=10)
    x = jax.random.normal(kx, (2, 3, 16, 16), jnp.float32)             # NCHW like PyTorch

    out = resnet_forward(x, params)
    out = jax.block_until_ready(out)

    assert out.shape == (2, 10), out.shape
    assert bool(jnp.all(jnp.isfinite(out)))

    ref = resnet_ref(x, params)
    assert bool(jnp.allclose(out, ref, atol=1e-2, rtol=1e-2)), (np.asarray(out), np.asarray(ref))

    print("KERNEL_OK")
</pallas_src>

<mosaic_0001>
module attributes {stable_mosaic.version = 11 : i64} {
  func.func @_resnet_fused_kernel(%arg0: i32, %arg1: memref<1x1x3x256xf32, #tpu.memory_space<vmem>>, %arg2: memref<9x4x3xf32, #tpu.memory_space<vmem>>, %arg3: memref<9x4x4xf32, #tpu.memory_space<vmem>>, %arg4: memref<9x4x4xf32, #tpu.memory_space<vmem>>, %arg5: memref<9x8x4xf32, #tpu.memory_space<vmem>>, %arg6: memref<9x8x8xf32, #tpu.memory_space<vmem>>, %arg7: memref<8x4xf32, #tpu.memory_space<vmem>>, %arg8: memref<256x64xf32, #tpu.memory_space<vmem>>, %arg9: memref<9x16x8xf32, #tpu.memory_space<vmem>>, %arg10: memref<9x16x16xf32, #tpu.memory_space<vmem>>, %arg11: memref<16x8xf32, #tpu.memory_space<vmem>>, %arg12: memref<64x16xf32, #tpu.memory_space<vmem>>, %arg13: memref<2x256xf32, #tpu.memory_space<vmem>>, %arg14: memref<2x64xf32, #tpu.memory_space<vmem>>, %arg15: memref<2x16xf32, #tpu.memory_space<vmem>>, %arg16: memref<10x16xf32, #tpu.memory_space<vmem>>, %arg17: memref<10x1xf32, #tpu.memory_space<vmem>>, %arg18: memref<1x10x1xf32, #tpu.memory_space<vmem>>, %arg19: memref<16x512xf32, #tpu.memory_space<vmem>>) attributes {dimension_semantics = [#tpu.dimension_semantics<parallel>], iteration_bounds = array<i64: 2>, scalar_prefetch = 0 : i64, scratch_operands = 1 : i64, tpu.core_type = #tpu.core_type<tc>, window_params = [{transform_indices = @transform_0, window_bounds = array<i64: 1, 1, 3, 256>}, {pipeline_mode = #tpu.pipeline_mode<synchronous>, transform_indices = @transform_1, window_bounds = array<i64: 9, 4, 3>}, {pipeline_mode = #tpu.pipeline_mode<synchronous>, transform_indices = @transform_2, window_bounds = array<i64: 9, 4, 4>}, {pipeline_mode = #tpu.pipeline_mode<synchronous>, transform_indices = @transform_3, window_bounds = array<i64: 9, 4, 4>}, {pipeline_mode = #tpu.pipeline_mode<synchronous>, transform_indices = @transform_4, window_bounds = array<i64: 9, 8, 4>}, {pipeline_mode = #tpu.pipeline_mode<synchronous>, transform_indices = @transform_5, window_bounds = array<i64: 9, 8, 8>}, {pipeline_mode = #tpu.pipeline_mode<synchronous>, transform_indices = @transform_6, window_bounds = array<i64: 8, 4>}, {pipeline_mode = #tpu.pipeline_mode<synchronous>, transform_indices = @transform_7, window_bounds = array<i64: 256, 64>}, {pipeline_mode = #tpu.pipeline_mode<synchronous>, transform_indices = @transform_8, window_bounds = array<i64: 9, 16, 8>}, {pipeline_mode = #tpu.pipeline_mode<synchronous>, transform_indices = @transform_9, window_bounds = array<i64: 9, 16, 16>}, {pipeline_mode = #tpu.pipeline_mode<synchronous>, transform_indices = @transform_10, window_bounds = array<i64: 16, 8>}, {pipeline_mode = #tpu.pipeline_mode<synchronous>, transform_indices = @transform_11, window_bounds = array<i64: 64, 16>}, {pipeline_mode = #tpu.pipeline_mode<synchronous>, transform_indices = @transform_12, window_bounds = array<i64: 2, 256>}, {pipeline_mode = #tpu.pipeline_mode<synchronous>, transform_indices = @transform_13, window_bounds = array<i64: 2, 64>}, {pipeline_mode = #tpu.pipeline_mode<synchronous>, transform_indices = @transform_14, window_bounds = array<i64: 2, 16>}, {pipeline_mode = #tpu.pipeline_mode<synchronous>, transform_indices = @transform_15, window_bounds = array<i64: 10, 16>}, {pipeline_mode = #tpu.pipeline_mode<synchronous>, transform_indices = @transform_16, window_bounds = array<i64: 10, 1>}, {transform_indices = @transform_17, window_bounds = array<i64: 1, 10, 1>}]} {
    %cst = arith.constant 0.000000e+00 : f32
    %0 = vector.broadcast %cst : f32 to vector<16x17xf32>
    %c0 = arith.constant 0 : index
    %c0_0 = arith.constant 0 : index
    %1 = vector.load %arg19[%c0, %c0_0] : memref<16x512xf32, #tpu.memory_space<vmem>>, vector<16x17xf32>
    tpu.vector_store %arg19[%c0, %c0_0], %0 {strides = array<i32>} : memref<16x512xf32, #tpu.memory_space<vmem>>, vector<16x17xf32>,
    %cst_1 = arith.constant 0.000000e+00 : f32
    %2 = vector.broadcast %cst_1 : f32 to vector<16x17xf32>
    %c0_2 = arith.constant 0 : index
    %c273 = arith.constant 273 : index
    %3 = vector.load %arg19[%c0_2, %c273] : memref<16x512xf32, #tpu.memory_space<vmem>>, vector<16x17xf32>
    tpu.vector_store %arg19[%c0_2, %c273], %2 {strides = array<i32>} : memref<16x512xf32, #tpu.memory_space<vmem>>, vector<16x17xf32>,
    %cst_3 = arith.constant 0.000000e+00 : f32
    %4 = vector.broadcast %cst_3 : f32 to vector<16x9xf32>
    %c0_4 = arith.constant 0 : index
    %c290 = arith.constant 290 : index
    %5 = vector.load %arg19[%c0_4, %c290] : memref<16x512xf32, #tpu.memory_space<vmem>>, vector<16x9xf32>
    tpu.vector_store %arg19[%c0_4, %c290], %4 {strides = array<i32>} : memref<16x512xf32, #tpu.memory_space<vmem>>, vector<16x9xf32>,
    %cst_5 = arith.constant 0.000000e+00 : f32
    %6 = vector.broadcast %cst_5 : f32 to vector<16x9xf32>
    %c0_6 = arith.constant 0 : index
    %c363 = arith.constant 363 : index
    %7 = vector.load %arg19[%c0_6, %c363] : memref<16x512xf32, #tpu.memory_space<vmem>>, vector<16x9xf32>
    tpu.vector_store %arg19[%c0_6, %c363], %6 {strides = array<i32>} : memref<16x512xf32, #tpu.memory_space<vmem>>, vector<16x9xf32>,
    %cst_7 = arith.constant 0.000000e+00 : f32
    %8 = vector.broadcast %cst_7 : f32 to vector<16x5xf32>
    %c0_8 = arith.constant 0 : index
    %c372 = arith.constant 372 : index
    %9 = vector.load %arg19[%c0_8, %c372] : memref<16x512xf32, #tpu.memory_space<vmem>>, vector<16x5xf32>
    tpu.vector_store %arg19[%c0_8, %c372], %8 {strides = array<i32>} : memref<16x512xf32, #tpu.memory_space<vmem>>, vector<16x5xf32>,
    %cst_9 = arith.constant 0.000000e+00 : f32
    %10 = vector.broadcast %cst_9 : f32 to vector<16x5xf32>
    %c0_10 = arith.constant 0 : index
    %c393 = arith.constant 393 : index
    %11 = vector.load %arg19[%c0_10, %c393] : memref<16x512xf32, #tpu.memory_space<vmem>>, vector<16x5xf32>
    tpu.vector_store %arg19[%c0_10, %c393], %10 {strides = array<i32>} : memref<16x512xf32, #tpu.memory_space<vmem>>, vector<16x5xf32>,
    %c0_11 = arith.constant 0 : index
    %c0_12 = arith.constant 0 : index
    %c0_13 = arith.constant 0 : index
    %c0_14 = arith.constant 0 : index
    %12 = vector.load %arg1[%c0_11, %c0_12, %c0_13, %c0_14] : memref<1x1x3x256xf32, #tpu.memory_space<vmem>>, vector<1x1x3x256xf32>
    %13 = vector.shape_cast %12 : vector<1x1x3x256xf32> to vector<3x256xf32>
    %c0_15 = arith.constant 0 : index
    %c17 = arith.constant 17 : index
    %14 = vector.load %arg19[%c0_15, %c17] : memref<16x512xf32, #tpu.memory_space<vmem>>, vector<3x256xf32>
    tpu.vector_store %arg19[%c0_15, %c17], %13 {strides = array<i32>} : memref<16x512xf32, #tpu.memory_space<vmem>>, vector<3x256xf32>,
    %c0_16 = arith.constant 0 : index
    %c0_17 = arith.constant 0 : index
    %15 = vector.load %arg13[%c0_16, %c0_17] : memref<2x256xf32, #tpu.memory_space<vmem>>, vector<1x256xf32>
    %c1 = arith.constant 1 : index
    %c0_18 = arith.constant 0 : index
    %16 = vector.load %arg13[%c1, %c0_18] : memref<2x256xf32, #tpu.memory_space<vmem>>, vector<1x256xf32>
    %c0_19 = arith.constant 0 : index
    %c0_20 = arith.constant 0 : index
    %17 = vector.load %arg19[%c0_19, %c0_20] : memref<16x512xf32, #tpu.memory_space<vmem>>, vector<3x256xf32>
    %18 = vector.broadcast %15 : vector<1x256xf32> to vector<3x256xf32>
    %19 = arith.mulf %17, %18 : vector<3x256xf32>
    %c0_21 = arith.constant 0 : index
    %c0_22 = arith.constant 0 : index
    %c0_23 = arith.constant 0 : index
    %20 = vector.load %arg2[%c0_21, %c0_22, %c0_23] : memref<9x4x3xf32, #tpu.memory_space<vmem>>, vector<1x4x3xf32>
    %21 = vector.shape_cast %20 : vector<1x4x3xf32> to vector<4x3xf32>
    %cst_24 = arith.constant dense<0.000000e+00> : vector<4x256xf32>
    %22 = tpu.matmul %21, %19, %cst_24 {dimension_numbers = #tpu.dot_dimension_numbers<[1], [0], [0], [1], [0, 0, 1, 1], [], []>} : vector<4x3xf32>, vector<3x256xf32>, vector<4x256xf32> -> vector<4x256xf32>
    %c0_25 = arith.constant 0 : index
    %c1_26 = arith.constant 1 : index
    %23 = vector.load %arg19[%c0_25, %c1_26] : memref<16x512xf32, #tpu.memory_space<vmem>>, vector<3x256xf32>
    %c1_27 = arith.constant 1 : index
    %c0_28 = arith.constant 0 : index
    %c0_29 = arith.constant 0 : index
    %24 = vector.load %arg2[%c1_27, %c0_28, %c0_29] : memref<9x4x3xf32, #tpu.memory_space<vmem>>, vector<1x4x3xf32>
    %25 = vector.shape_cast %24 : vector<1x4x3xf32> to vector<4x3xf32>
    %cst_30 = arith.constant dense<0.000000e+00> : vector<4x256xf32>
    %26 = tpu.matmul %25, %23, %cst_30 {dimension_numbers = #tpu.dot_dimension_numbers<[1], [0], [0], [1], [0, 0, 1, 1], [], []>} : vector<4x3xf32>, vector<3x256xf32>, vector<4x256xf32> -> vector<4x256xf32>
    %27 = arith.addf %22, %26 : vector<4x256xf32>
    %c0_31 = arith.constant 0 : index
    %c2 = arith.constant 2 : index
    %28 = vector.load %arg19[%c0_31, %c2] : memref<16x512xf32, #tpu.memory_space<vmem>>, vector<3x256xf32>
    %29 = vector.broadcast %16 : vector<1x256xf32> to vector<3x256xf32>
    %30 = arith.mulf %28, %29 : vector<3x256xf32>
    %c2_32 = arith.constant 2 : index
    %c0_33 = arith.constant 0 : index
    %c0_34 = arith.constant 0 : index
    %31 = vector.load %arg2[%c2_32, %c0_33, %c0_34] : memref<9x4x3xf32, #tpu.memory_space<vmem>>, vector<1x4x3xf32>
    %32 = vector.shape_cast %31 : vector<1x4x3xf32> to vector<4x3xf32>
    %cst_35 = arith.constant dense<0.000000e+00> : vector<4x256xf32>
    %33 = tpu.matmul %32, %30, %cst_35 {dimension_numbers = #tpu.dot_dimension_numbers<[1], [0], [0], [1], [0, 0, 1, 1], [], []>} : vector<4x3xf32>, vector<3x256xf32>, vector<4x256xf32> -> vector<4x256xf32>
    %34 = arith.addf %27, %33 : vector<4x256xf32>
    %c0_36 = arith.constant 0 : index
    %c16 = arith.constant 16 : index
    %35 = vector.load %arg19[%c0_36, %c16] : memref<16x512xf32, #tpu.memory_space<vmem>>, vector<3x256xf32>
    %36 = vector.broadcast %15 : vector<1x256xf32> to vector<3x256xf32>
    %37 = arith.mulf %35, %36 : vector<3x256xf32>
    %c3 = arith.constant 3 : index
    %c0_37 = arith.constant 0 : index
    %c0_38 = arith.constant 0 : index
    %38 = vector.load %arg2[%c3, %c0_37, %c0_38] : memref<9x4x3xf32, #tpu.memory_space<vmem>>, vector<1x4x3xf32>
    %39 = vector.shape_cast %38 : vector<1x4x3xf32> to vector<4x3xf32>
    %cst_39 = arith.constant dense<0.000000e+00> : vector<4x256xf32>
    %40 = tpu.matmul %39, %37, %cst_39 {dimension_numbers = #tpu.dot_dimension_numbers<[1], [0], [0], [1], [0, 0, 1, 1], [], []>} : vector<4x3xf32>, vector<3x256xf32>, vector<4x256xf32> -> vector<4x256xf32>
    %41 = arith.addf %34, %40 : vector<4x256xf32>
    %c0_40 = arith.constant 0 : index
    %c17_41 = arith.constant 17 : index
    %42 = vector.load %arg19[%c0_40, %c17_41] : memref<16x512xf32, #tpu.memory_space<vmem>>, vector<3x256xf32>
    %c4 = arith.constant 4 : index
    %c0_42 = arith.constant 0 : index
    %c0_43 = arith.constant 0 : index
    %43 = vector.load %arg2[%c4, %c0_42, %c0_43] : memref<9x4x3xf32, #tpu.memory_space<vmem>>, vector<1x4x3xf32>
    %44 = vector.shape_cast %43 : vector<1x4x3xf32> to vector<4x3xf32>
    %cst_44 = arith.constant dense<0.000000e+00> : vector<4x256xf32>
    %45 = tpu.matmul %44, %42, %cst_44 {dimension_numbers = #tpu.dot_dimension_numbers<[1], [0], [0], [1], [0, 0, 1, 1], [], []>} : vector<4x3xf32>, vector<3x256xf32>, vector<4x256xf32> -> vector<4x256xf32>
    %46 = arith.addf %41, %45 : vector<4x256xf32>
    %c0_45 = arith.constant 0 : index
    %c18 = arith.constant 18 : index
    %47 = vector.load %arg19[%c0_45, %c18] : memref<16x512xf32, #tpu.memory_space<vmem>>, vector<3x256xf32>
    %48 = vector.broadcast %16 : vector<1x256xf32> to vector<3x256xf32>
    %49 = arith.mulf %47, %48 : vector<3x256xf32>
    %c5 = arith.constant 5 : index
    %c0_46 = arith.constant 0 : index
    %c0_47 = arith.constant 0 : index
    %50 = vector.load %arg2[%c5, %c0_46, %c0_47] : memref<9x4x3xf32, #tpu.memory_space<vmem>>, vector<1x4x3xf32>
    %51 = vector.shape_cast %50 : vector<1x4x3xf32> to vector<4x3xf32>
    %cst_48 = arith.constant dense<0.000000e+00> : vector<4x256xf32>
    %52 = tpu.matmul %51, %49, %cst_48 {dimension_numbers = #tpu.dot_dimension_numbers<[1], [0], [0], [1], [0, 0, 1, 1], [], []>} : vector<4x3xf32>, vector<3x256xf32>, vector<4x256xf32> -> vector<4x256xf32>
    %53 = arith.addf %46, %52 : vector<4x256xf32>
    %c0_49 = arith.constant 0 : index
    %c32 = arith.constant 32 : index
    %54 = vector.load %arg19[%c0_49, %c32] : memref<16x512xf32, #tpu.memory_space<vmem>>, vector<3x256xf32>
    %55 = vector.broadcast %15 : vector<1x256xf32> to vector<3x256xf32>
    %56 = arith.mulf %54, %55 : vector<3x256xf32>
    %c6 = arith.constant 6 : index
    %c0_50 = arith.constant 0 : index
    %c0_51 = arith.constant 0 : index
    %57 = vector.load %arg2[%c6, %c0_50, %c0_51] : memref<9x4x3xf32, #tpu.memory_space<vmem>>, vector<1x4x3xf32>
    %58 = vector.shape_cast %57 : vector<1x4x3xf32> to vector<4x3xf32>
    %cst_52 = arith.constant dense<0.000000e+00> : vector<4x256xf32>
    %59 = tpu.matmul %58, %56, %cst_52 {dimension_numbers = #tpu.dot_dimension_numbers<[1], [0], [0], [1], [0, 0, 1, 1], [], []>} : vector<4x3xf32>, vector<3x256xf32>, vector<4x256xf32> -> vector<4x256xf32>
    %60 = arith.addf %53, %59 : vector<4x256xf32>
    %c0_53 = arith.constant 0 : index
    %c33 = arith.constant 33 : index
    %61 = vector.load %arg19[%c0_53, %c33] : memref<16x512xf32, #tpu.memory_space<vmem>>, vector<3x256xf32>
    %c7 = arith.constant 7 : index
    %c0_54 = arith.constant 0 : index
    %c0_55 = arith.constant 0 : index
    %62 = vector.load %arg2[%c7, %c0_54, %c0_55] : memref<9x4x3xf32, #tpu.memory_space<vmem>>, vector<1x4x3xf32>
    %63 = vector.shape_cast %62 : vector<1x4x3xf32> to vector<4x3xf32>
    %cst_56 = arith.constant dense<0.000000e+00> : vector<4x256xf32>
    %64 = tpu.matmul %63, %61, %cst_56 {dimension_numbers = #tpu.dot_dimension_numbers<[1], [0], [0], [1], [0, 0, 1, 1], [], []>} : vector<4x3xf32>, vector<3x256xf32>, vector<4x256xf32> -> vector<4x256xf32>
    %65 = arith.addf %60, %64 : vector<4x256xf32>
    %c0_57 = arith.constant 0 : index
    %c34 = arith.constant 34 : index
    %66 = vector.load %arg19[%c0_57, %c34] : memref<16x512xf32, #tpu.memory_space<vmem>>, vector<3x256xf32>
    %67 = vector.broadcast %16 : vector<1x256xf32> to vector<3x256xf32>
    %68 = arith.mulf %66, %67 : vector<3x256xf32>
    %c8 = arith.constant 8 : index
    %c0_58 = arith.constant 0 : index
    %c0_59 = arith.constant 0 : index
    %69 = vector.load %arg2[%c8, %c0_58, %c0_59] : memref<9x4x3xf32, #tpu.memory_space<vmem>>, vector<1x4x3xf32>
    %70 = vector.shape_cast %69 : vector<1x4x3xf32> to vector<4x3xf32>
    %cst_60 = arith.constant dense<0.000000e+00> : vector<4x256xf32>
    %71 = tpu.matmul %70, %68, %cst_60 {dimension_numbers = #tpu.dot_dimension_numbers<[1], [0], [0], [1], [0, 0, 1, 1], [], []>} : vector<4x3xf32>, vector<3x256xf32>, vector<4x256xf32> -> vector<4x256xf32>
    %72 = arith.addf %65, %71 : vector<4x256xf32>
    %cst_61 = arith.constant 0.000000e+00 : f32
    %73 = vector.broadcast %cst_61 : f32 to vector<4x256xf32>
    %74 = arith.maximumf %72, %73 : vector<4x256xf32>
    %c0_62 = arith.constant 0 : index
    %c17_63 = arith.constant 17 : index
    %75 = vector.load %arg19[%c0_62, %c17_63] : memref<16x512xf32, #tpu.memory_space<vmem>>, vector<4x256xf32>
    tpu.vector_store %arg19[%c0_62, %c17_63], %74 {strides = array<i32>} : memref<16x512xf32, #tpu.memory_space<vmem>>, vector<4x256xf32>,
    %c0_64 = arith.constant 0 : index
    %c0_65 = arith.constant 0 : index
    %76 = vector.load %arg13[%c0_64, %c0_65] : memref<2x256xf32, #tpu.memory_space<vmem>>, vector<1x256xf32>
    %c1_66 = arith.constant 1 : index
    %c0_67 = arith.constant 0 : index
    %77 = vector.load %arg13[%c1_66, %c0_67] : memref<2x256xf32, #tpu.memory_space<vmem>>, vector<1x256xf32>
    %c0_68 = arith.constant 0 : index
    %c0_69 = arith.constant 0 : index
    %78 = vector.load %arg19[%c0_68, %c0_69] : memref<16x512xf32, #tpu.memory_space<vmem>>, vector<4x256xf32>
    %79 = vector.broadcast %76 : vector<1x256xf32> to vector<4x256xf32>
    %80 = arith.mulf %78, %79 : vector<4x256xf32>
    %c0_70 = arith.constant 0 : index
    %c0_71 = arith.constant 0 : index
    %c0_72 = arith.constant 0 : index
    %81 = vector.load %arg3[%c0_70, %c0_71, %c0_72] : memref<9x4x4xf32, #tpu.memory_space<vmem>>, vector<1x4x4xf32>
    %82 = vector.shape_cast %81 : vector<1x4x4xf32> to vector<4x4xf32>
    %cst_73 = arith.constant dense<0.000000e+00> : vector<4x256xf32>
    %83 = tpu.matmul %82, %80, %cst_73 {dimension_numbers = #tpu.dot_dimension_numbers<[1], [0], [0], [1], [0, 0, 1, 1], [], []>} : vector<4x4xf32>, vector<4x256xf32>, vector<4x256xf32> -> vector<4x256xf32>
    %c0_74 = arith.constant 0 : index
    %c1_75 = arith.constant 1 : index
    %84 = vector.load %arg19[%c0_74, %c1_75] : memref<16x512xf32, #tpu.memory_space<vmem>>, vector<4x256xf32>
    %c1_76 = arith.constant 1 : index
    %c0_77 = arith.constant 0 : index
    %c0_78 = arith.constant 0 : index
    %85 = vector.load %arg3[%c1_76, %c0_77, %c0_78] : memref<9x4x4xf32, #tpu.memory_space<vmem>>, vector<1x4x4xf32>
    %86 = vector.shape_cast %85 : vector<1x4x4xf32> to vector<4x4xf32>
    %cst_79 = arith.constant dense<0.000000e+00> : vector<4x256xf32>
    %87 = tpu.matmul %86, %84, %cst_79 {dimension_numbers = #tpu.dot_dimension_numbers<[1], [0], [0], [1], [0, 0, 1, 1], [], []>} : vector<4x4xf32>, vector<4x256xf32>, vector<4x256xf32> -> vector<4x256xf32>
    %88 = arith.addf %83, %87 : vector<4x256xf32>
    %c0_80 = arith.constant 0 : index
    %c2_81 = arith.constant 2 : index
    %89 = vector.load %arg19[%c0_80, %c2_81] : memref<16x512xf32, #tpu.memory_space<vmem>>, vector<4x256xf32>
    %90 = vector.broadcast %77 : vector<1x256xf32> to vector<4x256xf32>
    %91 = arith.mulf %89, %90 : vector<4x256xf32>
    %c2_82 = arith.constant 2 : index
    %c0_83 = arith.constant 0 : index
    %c0_84 = arith.constant 0 : index
    %92 = vector.load %arg3[%c2_82, %c0_83, %c0_84] : memref<9x4x4xf32, #tpu.memory_space<vmem>>, vector<1x4x4xf32>
    %93 = vector.shape_cast %92 : vector<1x4x4xf32> to vector<4x4xf32>
    %cst_85 = arith.constant dense<0.000000e+00> : vector<4x256xf32>
    %94 = tpu.matmul %93, %91, %cst_85 {dimension_numbers = #tpu.dot_dimension_numbers<[1], [0], [0], [1], [0, 0, 1, 1], [], []>} : vector<4x4xf32>, vector<4x256xf32>, vector<4x256xf32> -> vector<4x256xf32>
    %95 = arith.addf %88, %94 : vector<4x256xf32>
    %c0_86 = arith.constant 0 : index
    %c16_87 = arith.constant 16 : index
    %96 = vector.load %arg19[%c0_86, %c16_87] : memref<16x512xf32, #tpu.memory_space<vmem>>, vector<4x256xf32>
    %97 = vector.broadcast %76 : vector<1x256xf32> to vector<4x256xf32>
    %98 = arith.mulf %96, %97 : vector<4x256xf32>
    %c3_88 = arith.constant 3 : index
    %c0_89 = arith.constant 0 : index
    %c0_90 = arith.constant 0 : index
    %99 = vector.load %arg3[%c3_88, %c0_89, %c0_90] : memref<9x4x4xf32, #tpu.memory_space<vmem>>, vector<1x4x4xf32>
    %100 = vector.shape_cast %99 : vector<1x4x4xf32> to vector<4x4xf32>
    %cst_91 = arith.constant dense<0.000000e+00> : vector<4x256xf32>
    %101 = tpu.matmul %100, %98, %cst_91 {dimension_numbers = #tpu.dot_dimension_numbers<[1], [0], [0], [1], [0, 0, 1, 1], [], []>} : vector<4x4xf32>, vector<4x256xf32>, vector<4x256xf32> -> vector<4x256xf32>
    %102 = arith.addf %95, %101 : vector<4x256xf32>
    %c0_92 = arith.constant 0 : index
    %c17_93 = arith.constant 17 : index
    %103 = vector.load %arg19[%c0_92, %c17_93] : memref<16x512xf32, #tpu.memory_space<vmem>>, vector<4x256xf32>
    %c4_94 = arith.constant 4 : index
    %c0_95 = arith.constant 0 : index
    %c0_96 = arith.constant 0 : index
    %104 = vector.load %arg3[%c4_94, %c0_95, %c0_96] : memref<9x4x4xf32, #tpu.memory_space<vmem>>, vector<1x4x4xf32>
    %105 = vector.shape_cast %104 : vector<1x4x4xf32> to vector<4x4xf32>
    %cst_97 = arith.constant dense<0.000000e+00> : vector<4x256xf32>
    %106 = tpu.matmul %105, %103, %cst_97 {dimension_numbers = #tpu.dot_dimension_numbers<[1], [0], [0], [1], [0, 0, 1, 1], [], []>} : vector<4x4xf32>, vector<4x256xf32>, vector<4x256xf32> -> vector<4x256xf32>
    %107 = arith.addf %102, %106 : vector<4x256xf32>
    %c0_98 = arith.constant 0 : index
    %c18_99 = arith.constant 18 : index
    %108 = vector.load %arg19[%c0_98, %c18_99] : memref<16x512xf32, #tpu.memory_space<vmem>>, vector<4x256xf32>
    %109 = vector.broadcast %77 : vector<1x256xf32> to vector<4x256xf32>
    %110 = arith.mulf %108, %109 : vector<4x256xf32>
    %c5_100 = arith.constant 5 : index
    %c0_101 = arith.constant 0 : index
    %c0_102 = arith.constant 0 : index
    %111 = vector.load %arg3[%c5_100, %c0_101, %c0_102] : memref<9x4x4xf32, #tpu.memory_space<vmem>>, vector<1x4x4xf32>
    %112 = vector.shape_cast %111 : vector<1x4x4xf32> to vector<4x4xf32>
    %cst_103 = arith.constant dense<0.000000e+00> : vector<4x256xf32>
    %113 = tpu.matmul %112, %110, %cst_103 {dimension_numbers = #tpu.dot_dimension_numbers<[1], [0], [0], [1], [0, 0, 1, 1], [], []>} : vector<4x4xf32>, vector<4x256xf32>, vector<4x256xf32> -> vector<4x256xf32>
    %114 = arith.addf %107, %113 : vector<4x256xf32>
    %c0_104 = arith.constant 0 : index
    %c32_105 = arith.constant 32 : index
    %115 = vector.load %arg19[%c0_104, %c32_105] : memref<16x512xf32, #tpu.memory_space<vmem>>, vector<4x256xf32>
    %116 = vector.broadcast %76 : vector<1x256xf32> to vector<4x256xf32>
    %117 = arith.mulf %115, %116 : vector<4x256xf32>
    %c6_106 = arith.constant 6 : index
    %c0_107 = arith.constant 0 : index
    %c0_108 = arith.constant 0 : index
    %118 = vector.load %arg3[%c6_106, %c0_107, %c0_108] : memref<9x4x4xf32, #tpu.memory_space<vmem>>, vector<1x4x4xf32>
    %119 = vector.shape_cast %118 : vector<1x4x4xf32> to vector<4x4xf32>
    %cst_109 = arith.constant dense<0.000000e+00> : vector<4x256xf32>
    %120 = tpu.matmul %119, %117, %cst_109 {dimension_numbers = #tpu.dot_dimension_numbers<[1], [0], [0], [1], [0, 0, 1, 1], [], []>} : vector<4x4xf32>, vector<4x256xf32>, vector<4x256xf32> -> vector<4x256xf32>
    %121 = arith.addf %114, %120 : vector<4x256xf32>
    %c0_110 = arith.constant 0 : index
    %c33_111 = arith.constant 33 : index
    %122 = vector.load %arg19[%c0_110, %c33_111] : memref<16x512xf32, #tpu.memory_space<vmem>>, vector<4x256xf32>
    %c7_112 = arith.constant 7 : index
    %c0_113 = arith.constant 0 : index
    %c0_114 = arith.constant 0 : index
    %123 = vector.load %arg3[%c7_112, %c0_113, %c0_114] : memref<9x4x4xf32, #tpu.memory_space<vmem>>, vector<1x4x4xf32>
    %124 = vector.shape_cast %123 : vector<1x4x4xf32> to vector<4x4xf32>
    %cst_115 = arith.constant dense<0.000000e+00> : vector<4x256xf32>
    %125 = tpu.matmul %124, %122, %cst_115 {dimension_numbers = #tpu.dot_dimension_numbers<[1], [0], [0], [1], [0, 0, 1, 1], [], []>} : vector<4x4xf32>, vector<4x256xf32>, vector<4x256xf32> -> vector<4x256xf32>
    %126 = arith.addf %121, %125 : vector<4x256xf32>
    %c0_116 = arith.constant 0 : index
    %c34_117 = arith.constant 34 : index
    %127 = vector.load %arg19[%c0_116, %c34_117] : memref<16x512xf32, #tpu.memory_space<vmem>>, vector<4x256xf32>
    %128 = vector.broadcast %77 : vector<1x256xf32> to vector<4x256xf32>
    %129 = arith.mulf %127, %128 : vector<4x256xf32>
    %c8_118 = arith.constant 8 : index
    %c0_119 = arith.constant 0 : index
    %c0_120 = arith.constant 0 : index
    %130 = vector.load %arg3[%c8_118, %c0_119, %c0_120] : memref<9x4x4xf32, #tpu.memory_space<vmem>>, vector<1x4x4xf32>
    %131 = vector.shape_cast %130 : vector<1x4x4xf32> to vector<4x4xf32>
    %cst_121 = arith.constant dense<0.000000e+00> : vector<4x256xf32>
    %132 = tpu.matmul %131, %129, %cst_121 {dimension_numbers = #tpu.dot_dimension_numbers<[1], [0], [0], [1], [0, 0, 1, 1], [], []>} : vector<4x4xf32>, vector<4x256xf32>, vector<4x256xf32> -> vector<4x256xf32>
    %133 = arith.addf %126, %132 : vector<4x256xf32>
    %cst_122 = arith.constant 0.000000e+00 : f32
    %134 = vector.broadcast %cst_122 : f32 to vector<4x256xf32>
    %135 = arith.maximumf %133, %134 : vector<4x256xf32>
    %c0_123 = arith.constant 0 : index
    %c17_124 = arith.constant 17 : index
    %136 = vector.load %arg19[%c0_123, %c17_124] : memref<16x512xf32, #tpu.memory_space<vmem>>, vector<4x256xf32>
    tpu.vector_store %arg19[%c0_123, %c17_124], %135 {strides = array<i32>} : memref<16x512xf32, #tpu.memory_space<vmem>>, vector<4x256xf32>,
    %c0_125 = arith.constant 0 : index
    %c0_126 = arith.constant 0 : index
    %137 = vector.load %arg13[%c0_125, %c0_126] : memref<2x256xf32, #tpu.memory_space<vmem>>, vector<1x256xf32>
    %c1_127 = arith.constant 1 : index
    %c0_128 = arith.constant 0 : index
    %138 = vector.load %arg13[%c1_127, %c0_128] : memref<2x256xf32, #tpu.memory_space<vmem>>, vector<1x256xf32>
    %c0_129 = arith.constant 0 : index
    %c0_130 = arith.constant 0 : index
    %139 = vector.load %arg19[%c0_129, %c0_130] : memref<16x512xf32, #tpu.memory_space<vmem>>, vector<4x256xf32>
    %140 = vector.broadcast %137 : vector<1x256xf32> to vector<4x256xf32>
    %141 = arith.mulf %139, %140 : vector<4x256xf32>
    %c0_131 = arith.constant 0 : index
    %c0_132 = arith.constant 0 : index
    %c0_133 = arith.constant 0 : index
    %142 = vector.load %arg4[%c0_131, %c0_132, %c0_133] : memref<9x4x4xf32, #tpu.memory_space<vmem>>, vector<1x4x4xf32>
    %143 = vector.shape_cast %142 : vector<1x4x4xf32> to vector<4x4xf32>
    %cst_134 = arith.constant dense<0.000000e+00> : vector<4x256xf32>
    %144 = tpu.matmul %143, %141, %cst_134 {dimension_numbers = #tpu.dot_dimension_numbers<[1], [0], [0], [1], [0, 0, 1, 1], [], []>} : vector<4x4xf32>, vector<4x256xf32>, vector<4x256xf32> -> vector<4x256xf32>
    %c0_135 = arith.constant 0 : index
    %c1_136 = arith.constant 1 : index
    %145 = vector.load %arg19[%c0_135, %c1_136] : memref<16x512xf32, #tpu.memory_space<vmem>>, vector<4x256xf32>
    %c1_137 = arith.constant 1 : index
    %c0_138 = arith.constant 0 : index
    %c0_139 = arith.constant 0 : index
    %146 = vector.load %arg4[%c1_137, %c0_138, %c0_139] : memref<9x4x4xf32, #tpu.memory_space<vmem>>, vector<1x4x4xf32>
    %147 = vector.shape_cast %146 : vector<1x4x4xf32> to vector<4x4xf32>
    %cst_140 = arith.constant dense<0.000000e+00> : vector<4x256xf32>
    %148 = tpu.matmul %147, %145, %cst_140 {dimension_numbers = #tpu.dot_dimension_numbers<[1], [0], [0], [1], [0, 0, 1, 1], [], []>} : vector<4x4xf32>, vector<4x256xf32>, vector<4x256xf32> -> vector<4x256xf32>
    %149 = arith.addf %144, %148 : vector<4x256xf32>
    %c0_141 = arith.constant 0 : index
    %c2_142 = arith.constant 2 : index
    %150 = vector.load %arg19[%c0_141, %c2_142] : memref<16x512xf32, #tpu.memory_space<vmem>>, vector<4x256xf32>
    %151 = vector.broadcast %138 : vector<1x256xf32> to vector<4x256xf32>
    %152 = arith.mulf %150, %151 : vector<4x256xf32>
    %c2_143 = arith.constant 2 : index
    %c0_144 = arith.constant 0 : index
    %c0_145 = arith.constant 0 : index
    %153 = vector.load %arg4[%c2_143, %c0_144, %c0_145] : memref<9x4x4xf32, #tpu.memory_space<vmem>>, vector<1x4x4xf32>
    %154 = vector.shape_cast %153 : vector<1x4x4xf32> to vector<4x4xf32>
    %cst_146 = arith.constant dense<0.000000e+00> : vector<4x256xf32>
    %155 = tpu.matmul %154, %152, %cst_146 {dimension_numbers = #tpu.dot_dimension_numbers<[1], [0], [0], [1], [0, 0, 1, 1], [], []>} : vector<4x4xf32>, vector<4x256xf32>, vector<4x256xf32> -> vector<4x256xf32>
    %156 = arith.addf %149, %155 : vector<4x256xf32>
    %c0_147 = arith.constant 0 : index
    %c16_148 = arith.constant 16 : index
    %157 = vector.load %arg19[%c0_147, %c16_148] : memref<16x512xf32, #tpu.memory_space<vmem>>, vector<4x256xf32>
    %158 = vector.broadcast %137 : vector<1x256xf32> to vector<4x256xf32>
    %159 = arith.mulf %157, %158 : vector<4x256xf32>
    %c3_149 = arith.constant 3 : index
    %c0_150 = arith.constant 0 : index
    %c0_151 = arith.constant 0 : index
    %160 = vector.load %arg4[%c3_149, %c0_150, %c0_151] : memref<9x4x4xf32, #tpu.memory_space<vmem>>, vector<1x4x4xf32>
    %161 = vector.shape_cast %160 : vector<1x4x4xf32> to vector<4x4xf32>
    %cst_152 = arith.constant dense<0.000000e+00> : vector<4x256xf32>
    %162 = tpu.matmul %161, %159, %cst_152 {dimension_numbers = #tpu.dot_dimension_numbers<[1], [0], [0], [1], [0, 0, 1, 1], [], []>} : vector<4x4xf32>, vector<4x256xf32>, vector<4x256xf32> -> vector<4x256xf32>
    %163 = arith.addf %156, %162 : vector<4x256xf32>
    %c0_153 = arith.constant 0 : index
    %c17_154 = arith.constant 17 : index
    %164 = vector.load %arg19[%c0_153, %c17_154] : memref<16x512xf32, #tpu.memory_space<vmem>>, vector<4x256xf32>
    %c4_155 = arith.constant 4 : index
    %c0_156 = arith.constant 0 : index
    %c0_157 = arith.constant 0 : index
    %165 = vector.load %arg4[%c4_155, %c0_156, %c0_157] : memref<9x4x4xf32, #tpu.memory_space<vmem>>, vector<1x4x4xf32>
    %166 = vector.shape_cast %165 : vector<1x4x4xf32> to vector<4x4xf32>
    %cst_158 = arith.constant dense<0.000000e+00> : vector<4x256xf32>
    %167 = tpu.matmul %166, %164, %cst_158 {dimension_numbers = #tpu.dot_dimension_numbers<[1], [0], [0], [1], [0, 0, 1, 1], [], []>} : vector<4x4xf32>, vector<4x256xf32>, vector<4x256xf32> -> vector<4x256xf32>
    %168 = arith.addf %163, %167 : vector<4x256xf32>
    %c0_159 = arith.constant 0 : index
    %c18_160 = arith.constant 18 : index
    %169 = vector.load %arg19[%c0_159, %c18_160] : memref<16x512xf32, #tpu.memory_space<vmem>>, vector<4x256xf32>
    %170 = vector.broadcast %138 : vector<1x256xf32> to vector<4x256xf32>
    %171 = arith.mulf %169, %170 : vector<4x256xf32>
    %c5_161 = arith.constant 5 : index
    %c0_162 = arith.constant 0 : index
    %c0_163 = arith.constant 0 : index
    %172 = vector.load %arg4[%c5_161, %c0_162, %c0_163] : memref<9x4x4xf32, #tpu.memory_space<vmem>>, vector<1x4x4xf32>
    %173 = vector.shape_cast %172 : vector<1x4x4xf32> to vector<4x4xf32>
    %cst_164 = arith.constant dense<0.000000e+00> : vector<4x256xf32>
    %174 = tpu.matmul %173, %171, %cst_164 {dimension_numbers = #tpu.dot_dimension_numbers<[1], [0], [0], [1], [0, 0, 1, 1], [], []>} : vector<4x4xf32>, vector<4x256xf32>, vector<4x256xf32> -> vector<4x256xf32>
    %175 = arith.addf %168, %174 : vector<4x256xf32>
    %c0_165 = arith.constant 0 : index
    %c32_166 = arith.constant 32 : index
    %176 = vector.load %arg19[%c0_165, %c32_166] : memref<16x512xf32, #tpu.memory_space<vmem>>, vector<4x256xf32>
    %177 = vector.broadcast %137 : vector<1x256xf32> to vector<4x256xf32>
    %178 = arith.mulf %176, %177 : vector<4x256xf32>
    %c6_167 = arith.constant 6 : index
    %c0_168 = arith.constant 0 : index
    %c0_169 = arith.constant 0 : index
    %179 = vector.load %arg4[%c6_167, %c0_168, %c0_169] : memref<9x4x4xf32, #tpu.memory_space<vmem>>, vector<1x4x4xf32>
    %180 = vector.shape_cast %179 : vector<1x4x4xf32> to vector<4x4xf32>
    %cst_170 = arith.constant dense<0.000000e+00> : vector<4x256xf32>
    %181 = tpu.matmul %180, %178, %cst_170 {dimension_numbers = #tpu.dot_dimension_numbers<[1], [0], [0], [1], [0, 0, 1, 1], [], []>} : vector<4x4xf32>, vector<4x256xf32>, vector<4x256xf32> -> vector<4x256xf32>
    %182 = arith.addf %175, %181 : vector<4x256xf32>
    %c0_171 = arith.constant 0 : index
    %c33_172 = arith.constant 33 : index
    %183 = vector.load %arg19[%c0_171, %c33_172] : memref<16x512xf32, #tpu.memory_space<vmem>>, vector<4x256xf32>
    %c7_173 = arith.constant 7 : index
    %c0_174 = arith.constant 0 : index
    %c0_175 = arith.constant 0 : index
    %184 = vector.load %arg4[%c7_173, %c0_174, %c0_175] : memref<9x4x4xf32, #tpu.memory_space<vmem>>, vector<1x4x4xf32>
    %185 = vector.shape_cast %184 : vector<1x4x4xf32> to vector<4x4xf32>
    %cst_176 = arith.constant dense<0.000000e+00> : vector<4x256xf32>
    %186 = tpu.matmul %185, %183, %cst_176 {dimension_numbers = #tpu.dot_dimension_numbers<[1], [0], [0], [1], [0, 0, 1, 1], [], []>} : vector<4x4xf32>, vector<4x256xf32>, vector<4x256xf32> -> vector<4x256xf32>
    %187 = arith.addf %182, %186 : vector<4x256xf32>
    %c0_177 = arith.constant 0 : index
    %c34_178 = arith.constant 34 : index
    %188 = vector.load %arg19[%c0_177, %c34_178] : memref<16x512xf32, #tpu.memory_space<vmem>>, vector<4x256xf32>
    %189 = vector.broadcast %138 : vector<1x256xf32> to vector<4x256xf32>
    %190 = arith.mulf %188, %189 : vector<4x256xf32>
    %c8_179 = arith.constant 8 : index
    %c0_180 = arith.constant 0 : index
    %c0_181 = arith.constant 0 : index
    %191 = vector.load %arg4[%c8_179, %c0_180, %c0_181] : memref<9x4x4xf32, #tpu.memory_space<vmem>>, vector<1x4x4xf32>
    %192 = vector.shape_cast %191 : vector<1x4x4xf32> to vector<4x4xf32>
    %cst_182 = arith.constant dense<0.000000e+00> : vector<4x256xf32>
    %193 = tpu.matmul %192, %190, %cst_182 {dimension_numbers = #tpu.dot_dimension_numbers<[1], [0], [0], [1], [0, 0, 1, 1], [], []>} : vector<4x4xf32>, vector<4x256xf32>, vector<4x256xf32> -> vector<4x256xf32>
    %194 = arith.addf %187, %193 : vector<4x256xf32>
    %195 = arith.addf %194, %74 : vector<4x256xf32>
    %cst_183 = arith.constant 0.000000e+00 : f32
    %196 = vector.broadcast %cst_183 : f32 to vector<4x256xf32>
    %197 = arith.maximumf %195, %196 : vector<4x256xf32>
    %c0_184 = arith.constant 0 : index
    %c17_185 = arith.constant 17 : index
    %198 = vector.load %arg19[%c0_184, %c17_185] : memref<16x512xf32, #tpu.memory_space<vmem>>, vector<4x256xf32>
    tpu.vector_store %arg19[%c0_184, %c17_185], %197 {strides = array<i32>} : memref<16x512xf32, #tpu.memory_space<vmem>>, vector<4x256xf32>,
    %c0_186 = arith.constant 0 : index
    %c0_187 = arith.constant 0 : index
    %199 = vector.load %arg13[%c0_186, %c0_187] : memref<2x256xf32, #tpu.memory_space<vmem>>, vector<1x256xf32>
    %c1_188 = arith.constant 1 : index
    %c0_189 = arith.constant 0 : index
    %200 = vector.load %arg13[%c1_188, %c0_189] : memref<2x256xf32, #tpu.memory_space<vmem>>, vector<1x256xf32>
    %c0_190 = arith.constant 0 : index
    %c0_191 = arith.constant 0 : index
    %201 = vector.load %arg19[%c0_190, %c0_191] : memref<16x512xf32, #tpu.memory_space<vmem>>, vector<4x256xf32>
    %202 = vector.broadcast %199 : vector<1x256xf32> to vector<4x256xf32>
    %203 = arith.mulf %201, %202 : vector<4x256xf32>
    %c0_192 = arith.constant 0 : index
    %c0_193 = arith.constant 0 : index
    %c0_194 = arith.constant 0 : index
    %204 = vector.load %arg5[%c0_192, %c0_193, %c0_194] : memref<9x8x4xf32, #tpu.memory_space<vmem>>, vector<1x8x4xf32>
    %205 = vector.shape_cast %204 : vector<1x8x4xf32> to vector<8x4xf32>
    %cst_195 = arith.constant dense<0.000000e+00> : vector<8x256xf32>
    %206 = tpu.matmul %205, %203, %cst_195 {dimension_numbers = #tpu.dot_dimension_numbers<[1], [0], [0], [1], [0, 0, 1, 1], [], []>} : vector<8x4xf32>, vector<4x256xf32>, vector<8x256xf32> -> vector<8x256xf32>
    %c0_196 = arith.constant 0 : index
    %c1_197 = arith.constant 1 : index
    %207 = vector.load %arg19[%c0_196, %c1_197] : memref<16x512xf32, #tpu.memory_space<vmem>>, vector<4x256xf32>
    %c1_198 = arith.constant 1 : index
    %c0_199 = arith.constant 0 : index
    %c0_200 = arith.constant 0 : index
    %208 = vector.load %arg5[%c1_198, %c0_199, %c0_200] : memref<9x8x4xf32, #tpu.memory_space<vmem>>, vector<1x8x4xf32>
    %209 = vector.shape_cast %208 : vector<1x8x4xf32> to vector<8x4xf32>
    %cst_201 = arith.constant dense<0.000000e+00> : vector<8x256xf32>
    %210 = tpu.matmul %209, %207, %cst_201 {dimension_numbers = #tpu.dot_dimension_numbers<[1], [0], [0], [1], [0, 0, 1, 1], [], []>} : vector<8x4xf32>, vector<4x256xf32>, vector<8x256xf32> -> vector<8x256xf32>
    %211 = arith.addf %206, %210 : vector<8x256xf32>
    %c0_202 = arith.constant 0 : index
    %c2_203 = arith.constant 2 : index
    %212 = vector.load %arg19[%c0_202, %c2_203] : memref<16x512xf32, #tpu.memory_space<vmem>>, vector<4x256xf32>
    %213 = vector.broadcast %200 : vector<1x256xf32> to vector<4x256xf32>
    %214 = arith.mulf %212, %213 : vector<4x256xf32>
    %c2_204 = arith.constant 2 : index
    %c0_205 = arith.constant 0 : index
    %c0_206 = arith.constant 0 : index
    %215 = vector.load %arg5[%c2_204, %c0_205, %c0_206] : memref<9x8x4xf32, #tpu.memory_space<vmem>>, vector<1x8x4xf32>
    %216 = vector.shape_cast %215 : vector<1x8x4xf32> to vector<8x4xf32>
    %cst_207 = arith.constant dense<0.000000e+00> : vector<8x256xf32>
    %217 = tpu.matmul %216, %214, %cst_207 {dimension_numbers = #tpu.dot_dimension_numbers<[1], [0], [0], [1], [0, 0, 1, 1], [], []>} : vector<8x4xf32>, vector<4x256xf32>, vector<8x256xf32> -> vector<8x256xf32>
    %218 = arith.addf %211, %217 : vector<8x256xf32>
    %c0_208 = arith.constant 0 : index
    %c16_209 = arith.constant 16 : index
    %219 = vector.load %arg19[%c0_208, %c16_209] : memref<16x512xf32, #tpu.memory_space<vmem>>, vector<4x256xf32>
    %220 = vector.broadcast %199 : vector<1x256xf32> to vector<4x256xf32>
    %221 = arith.mulf %219, %220 : vector<4x256xf32>
    %c3_210 = arith.constant 3 : index
    %c0_211 = arith.constant 0 : index
    %c0_212 = arith.constant 0 : index
    %222 = vector.load %arg5[%c3_210, %c0_211, %c0_212] : memref<9x8x4xf32, #tpu.memory_space<vmem>>, vector<1x8x4xf32>
    %223 = vector.shape_cast %222 : vector<1x8x4xf32> to vector<8x4xf32>
    %cst_213 = arith.constant dense<0.000000e+00> : vector<8x256xf32>
    %224 = tpu.matmul %223, %221, %cst_213 {dimension_numbers = #tpu.dot_dimension_numbers<[1], [0], [0], [1], [0, 0, 1, 1], [], []>} : vector<8x4xf32>, vector<4x256xf32>, vector<8x256xf32> -> vector<8x256xf32>
    %225 = arith.addf %218, %224 : vector<8x256xf32>
    %c0_214 = arith.constant 0 : index
    %c17_215 = arith.constant 17 : index
    %226 = vector.load %arg19[%c0_214, %c17_215] : memref<16x512xf32, #tpu.memory_space<vmem>>, vector<4x256xf32>
    %c4_216 = arith.constant 4 : index
    %c0_217 = arith.constant 0 : index
    %c0_218 = arith.constant 0 : index
    %227 = vector.load %arg5[%c4_216, %c0_217, %c0_218] : memref<9x8x4xf32, #tpu.memory_space<vmem>>, vector<1x8x4xf32>
    %228 = vector.shape_cast %227 : vector<1x8x4xf32> to vector<8x4xf32>
    %cst_219 = arith.constant dense<0.000000e+00> : vector<8x256xf32>
    %229 = tpu.matmul %228, %226, %cst_219 {dimension_numbers = #tpu.dot_dimension_numbers<[1], [0], [0], [1], [0, 0, 1, 1], [], []>} : vector<8x4xf32>, vector<4x256xf32>, vector<8x256xf32> -> vector<8x256xf32>
    %230 = arith.addf %225, %229 : vector<8x256xf32>
    %c0_220 = arith.constant 0 : index
    %c18_221 = arith.constant 18 : index
    %231 = vector.load %arg19[%c0_220, %c18_221] : memref<16x512xf32, #tpu.memory_space<vmem>>, vector<4x256xf32>
    %232 = vector.broadcast %200 : vector<1x256xf32> to vector<4x256xf32>
    %233 = arith.mulf %231, %232 : vector<4x256xf32>
    %c5_222 = arith.constant 5 : index
    %c0_223 = arith.constant 0 : index
    %c0_224 = arith.constant 0 : index
    %234 = vector.load %arg5[%c5_222, %c0_223, %c0_224] : memref<9x8x4xf32, #tpu.memory_space<vmem>>, vector<1x8x4xf32>
    %235 = vector.shape_cast %234 : vector<1x8x4xf32> to vector<8x4xf32>
    %cst_225 = arith.constant dense<0.000000e+00> : vector<8x256xf32>
    %236 = tpu.matmul %235, %233, %cst_225 {dimension_numbers = #tpu.dot_dimension_numbers<[1], [0], [0], [1], [0, 0, 1, 1], [], []>} : vector<8x4xf32>, vector<4x256xf32>, vector<8x256xf32> -> vector<8x256xf32>
    %237 = arith.addf %230, %236 : vector<8x256xf32>
    %c0_226 = arith.constant 0 : index
    %c32_227 = arith.constant 32 : index
    %238 = vector.load %arg19[%c0_226, %c32_227] : memref<16x512xf32, #tpu.memory_space<vmem>>, vector<4x256xf32>
    %239 = vector.broadcast %199 : vector<1x256xf32> to vector<4x256xf32>
    %240 = arith.mulf %238, %239 : vector<4x256xf32>
    %c6_228 = arith.constant 6 : index
    %c0_229 = arith.constant 0 : index
    %c0_230 = arith.constant 0 : index
    %241 = vector.load %arg5[%c6_228, %c0_229, %c0_230] : memref<9x8x4xf32, #tpu.memory_space<vmem>>, vector<1x8x4xf32>
    %242 = vector.shape_cast %241 : vector<1x8x4xf32> to vector<8x4xf32>
    %cst_231 = arith.constant dense<0.000000e+00> : vector<8x256xf32>
    %243 = tpu.matmul %242, %240, %cst_231 {dimension_numbers = #tpu.dot_dimension_numbers<[1], [0], [0], [1], [0, 0, 1, 1], [], []>} : vector<8x4xf32>, vector<4x256xf32>, vector<8x256xf32> -> vector<8x256xf32>
    %244 = arith.addf %237, %243 : vector<8x256xf32>
    %c0_232 = arith.constant 0 : index
    %c33_233 = arith.constant 33 : index
    %245 = vector.load %arg19[%c0_232, %c33_233] : memref<16x512xf32, #tpu.memory_space<vmem>>, vector<4x256xf32>
    %c7_234 = arith.constant 7 : index
    %c0_235 = arith.constant 0 : index
    %c0_236 = arith.constant 0 : index
    %246 = vector.load %arg5[%c7_234, %c0_235, %c0_236] : memref<9x8x4xf32, #tpu.memory_space<vmem>>, vector<1x8x4xf32>
    %247 = vector.shape_cast %246 : vector<1x8x4xf32> to vector<8x4xf32>
    %cst_237 = arith.constant dense<0.000000e+00> : vector<8x256xf32>
    %248 = tpu.matmul %247, %245, %cst_237 {dimension_numbers = #tpu.dot_dimension_numbers<[1], [0], [0], [1], [0, 0, 1, 1], [], []>} : vector<8x4xf32>, vector<4x256xf32>, vector<8x256xf32> -> vector<8x256xf32>
    %249 = arith.addf %244, %248 : vector<8x256xf32>
    %c0_238 = arith.constant 0 : index
    %c34_239 = arith.constant 34 : index
    %250 = vector.load %arg19[%c0_238, %c34_239] : memref<16x512xf32, #tpu.memory_space<vmem>>, vector<4x256xf32>
    %251 = vector.broadcast %200 : vector<1x256xf32> to vector<4x256xf32>
    %252 = arith.mulf %250, %251 : vector<4x256xf32>
    %c8_240 = arith.constant 8 : index
    %c0_241 = arith.constant 0 : index
    %c0_242 = arith.constant 0 : index
    %253 = vector.load %arg5[%c8_240, %c0_241, %c0_242] : memref<9x8x4xf32, #tpu.memory_space<vmem>>, vector<1x8x4xf32>
    %254 = vector.shape_cast %253 : vector<1x8x4xf32> to vector<8x4xf32>
    %cst_243 = arith.constant dense<0.000000e+00> : vector<8x256xf32>
    %255 = tpu.matmul %254, %252, %cst_243 {dimension_numbers = #tpu.dot_dimension_numbers<[1], [0], [0], [1], [0, 0, 1, 1], [], []>} : vector<8x4xf32>, vector<4x256xf32>, vector<8x256xf32> -> vector<8x256xf32>
    %256 = arith.addf %249, %255 : vector<8x256xf32>
    %c0_244 = arith.constant 0 : index
    %c0_245 = arith.constant 0 : index
    %257 = vector.load %arg8[%c0_244, %c0_245] : memref<256x64xf32, #tpu.memory_space<vmem>>, vector<256x64xf32>
    %cst_246 = arith.constant dense<0.000000e+00> : vector<8x64xf32>
    %258 = tpu.matmul %256, %257, %cst_246 {dimension_numbers = #tpu.dot_dimension_numbers<[1], [0], [0], [1], [0, 0, 1, 1], [], []>} : vector<8x256xf32>, vector<256x64xf32>, vector<8x64xf32> -> vector<8x64xf32>
    %cst_247 = arith.constant dense<0.000000e+00> : vector<4x64xf32>
    %259 = tpu.matmul %197, %257, %cst_247 {dimension_numbers = #tpu.dot_dimension_numbers<[1], [0], [0], [1], [0, 0, 1, 1], [], []>} : vector<4x256xf32>, vector<256x64xf32>, vector<4x64xf32> -> vector<4x64xf32>
    %cst_248 = arith.constant 0.000000e+00 : f32
    %260 = vector.broadcast %cst_248 : f32 to vector<8x64xf32>
    %261 = arith.maximumf %258, %260 : vector<8x64xf32>
    %c0_249 = arith.constant 0 : index
    %c299 = arith.constant 299 : index
    %262 = vector.load %arg19[%c0_249, %c299] : memref<16x512xf32, #tpu.memory_space<vmem>>, vector<8x64xf32>
    tpu.vector_store %arg19[%c0_249, %c299], %261 {strides = array<i32>} : memref<16x512xf32, #tpu.memory_space<vmem>>, vector<8x64xf32>,
    %c0_250 = arith.constant 0 : index
    %c0_251 = arith.constant 0 : index
    %263 = vector.load %arg14[%c0_250, %c0_251] : memref<2x64xf32, #tpu.memory_space<vmem>>, vector<1x64xf32>
    %c1_252 = arith.constant 1 : index
    %c0_253 = arith.constant 0 : index
    %264 = vector.load %arg14[%c1_252, %c0_253] : memref<2x64xf32, #tpu.memory_space<vmem>>, vector<1x64xf32>
    %c0_254 = arith.constant 0 : index
    %c290_255 = arith.constant 290 : index
    %265 = vector.load %arg19[%c0_254, %c290_255] : memref<16x512xf32, #tpu.memory_space<vmem>>, vector<8x64xf32>
    %266 = vector.broadcast %263 : vector<1x64xf32> to vector<8x64xf32>
    %267 = arith.mulf %265, %266 : vector<8x64xf32>
    %c0_256 = arith.constant 0 : index
    %c0_257 = arith.constant 0 : index
    %c0_258 = arith.constant 0 : index
    %268 = vector.load %arg6[%c0_256, %c0_257, %c0_258] : memref<9x8x8xf32, #tpu.memory_space<vmem>>, vector<1x8x8xf32>
    %269 = vector.shape_cast %268 : vector<1x8x8xf32> to vector<8x8xf32>
    %cst_259 = arith.constant dense<0.000000e+00> : vector<8x64xf32>
    %270 = tpu.matmul %269, %267, %cst_259 {dimension_numbers = #tpu.dot_dimension_numbers<[1], [0], [0], [1], [0, 0, 1, 1], [], []>} : vector<8x8xf32>, vector<8x64xf32>, vector<8x64xf32> -> vector<8x64xf32>
    %c0_260 = arith.constant 0 : index
    %c291 = arith.constant 291 : index
    %271 = vector.load %arg19[%c0_260, %c291] : memref<16x512xf32, #tpu.memory_space<vmem>>, vector<8x64xf32>
    %c1_261 = arith.constant 1 : index
    %c0_262 = arith.constant 0 : index
    %c0_263 = arith.constant 0 : index
    %272 = vector.load %arg6[%c1_261, %c0_262, %c0_263] : memref<9x8x8xf32, #tpu.memory_space<vmem>>, vector<1x8x8xf32>
    %273 = vector.shape_cast %272 : vector<1x8x8xf32> to vector<8x8xf32>
    %cst_264 = arith.constant dense<0.000000e+00> : vector<8x64xf32>
    %274 = tpu.matmul %273, %271, %cst_264 {dimension_numbers = #tpu.dot_dimension_numbers<[1], [0], [0], [1], [0, 0, 1, 1], [], []>} : vector<8x8xf32>, vector<8x64xf32>, vector<8x64xf32> -> vector<8x64xf32>
    %275 = arith.addf %270, %274 : vector<8x64xf32>
    %c0_265 = arith.constant 0 : index
    %c292 = arith.constant 292 : index
    %276 = vector.load %arg19[%c0_265, %c292] : memref<16x512xf32, #tpu.memory_space<vmem>>, vector<8x64xf32>
    %277 = vector.broadcast %264 : vector<1x64xf32> to vector<8x64xf32>
    %278 = arith.mulf %276, %277 : vector<8x64xf32>
    %c2_266 = arith.constant 2 : index
    %c0_267 = arith.constant 0 : index
    %c0_268 = arith.constant 0 : index
    %279 = vector.load %arg6[%c2_266, %c0_267, %c0_268] : memref<9x8x8xf32, #tpu.memory_space<vmem>>, vector<1x8x8xf32>
    %280 = vector.shape_cast %279 : vector<1x8x8xf32> to vector<8x8xf32>
    %cst_269 = arith.constant dense<0.000000e+00> : vector<8x64xf32>
    %281 = tpu.matmul %280, %278, %cst_269 {dimension_numbers = #tpu.dot_dimension_numbers<[1], [0], [0], [1], [0, 0, 1, 1], [], []>} : vector<8x8xf32>, vector<8x64xf32>, vector<8x64xf32> -> vector<8x64xf32>
    %282 = arith.addf %275, %281 : vector<8x64xf32>
    %c0_270 = arith.constant 0 : index
    %c298 = arith.constant 298 : index
    %283 = vector.load %arg19[%c0_270, %c298] : memref<16x512xf32, #tpu.memory_space<vmem>>, vector<8x64xf32>
    %284 = vector.broadcast %263 : vector<1x64xf32> to vector<8x64xf32>
    %285 = arith.mulf %283, %284 : vector<8x64xf32>
    %c3_271 = arith.constant 3 : index
    %c0_272 = arith.constant 0 : index
    %c0_273 = arith.constant 0 : index
    %286 = vector.load %arg6[%c3_271, %c0_272, %c0_273] : memref<9x8x8xf32, #tpu.memory_space<vmem>>, vector<1x8x8xf32>
    %287 = vector.shape_cast %286 : vector<1x8x8xf32> to vector<8x8xf32>
    %cst_274 = arith.constant dense<0.000000e+00> : vector<8x64xf32>
    %288 = tpu.matmul %287, %285, %cst_274 {dimension_numbers = #tpu.dot_dimension_numbers<[1], [0], [0], [1], [0, 0, 1, 1], [], []>} : vector<8x8xf32>, vector<8x64xf32>, vector<8x64xf32> -> vector<8x64xf32>
    %289 = arith.addf %282, %288 : vector<8x64xf32>
    %c0_275 = arith.constant 0 : index
    %c299_276 = arith.constant 299 : index
    %290 = vector.load %arg19[%c0_275, %c299_276] : memref<16x512xf32, #tpu.memory_space<vmem>>, vector<8x64xf32>
    %c4_277 = arith.constant 4 : index
    %c0_278 = arith.constant 0 : index
    %c0_279 = arith.constant 0 : index
    %291 = vector.load %arg6[%c4_277, %c0_278, %c0_279] : memref<9x8x8xf32, #tpu.memory_space<vmem>>, vector<1x8x8xf32>
    %292 = vector.shape_cast %291 : vector<1x8x8xf32> to vector<8x8xf32>
    %cst_280 = arith.constant dense<0.000000e+00> : vector<8x64xf32>
    %293 = tpu.matmul %292, %290, %cst_280 {dimension_numbers = #tpu.dot_dimension_numbers<[1], [0], [0], [1], [0, 0, 1, 1], [], []>} : vector<8x8xf32>, vector<8x64xf32>, vector<8x64xf32> -> vector<8x64xf32>
    %294 = arith.addf %289, %293 : vector<8x64xf32>
    %c0_281 = arith.constant 0 : index
    %c300 = arith.constant 300 : index
    %295 = vector.load %arg19[%c0_281, %c300] : memref<16x512xf32, #tpu.memory_space<vmem>>, vector<8x64xf32>
    %296 = vector.broadcast %264 : vector<1x64xf32> to vector<8x64xf32>
    %297 = arith.mulf %295, %296 : vector<8x64xf32>
    %c5_282 = arith.constant 5 : index
    %c0_283 = arith.constant 0 : index
    %c0_284 = arith.constant 0 : index
    %298 = vector.load %arg6[%c5_282, %c0_283, %c0_284] : memref<9x8x8xf32, #tpu.memory_space<vmem>>, vector<1x8x8xf32>
    %299 = vector.shape_cast %298 : vector<1x8x8xf32> to vector<8x8xf32>
    %cst_285 = arith.constant dense<0.000000e+00> : vector<8x64xf32>
    %300 = tpu.matmul %299, %297, %cst_285 {dimension_numbers = #tpu.dot_dimension_numbers<[1], [0], [0], [1], [0, 0, 1, 1], [], []>} : vector<8x8xf32>, vector<8x64xf32>, vector<8x64xf32> -> vector<8x64xf32>
    %301 = arith.addf %294, %300 : vector<8x64xf32>
    %c0_286 = arith.constant 0 : index
    %c306 = arith.constant 306 : index
    %302 = vector.load %arg19[%c0_286, %c306] : memref<16x512xf32, #tpu.memory_space<vmem>>, vector<8x64xf32>
    %303 = vector.broadcast %263 : vector<1x64xf32> to vector<8x64xf32>
    %304 = arith.mulf %302, %303 : vector<8x64xf32>
    %c6_287 = arith.constant 6 : index
    %c0_288 = arith.constant 0 : index
    %c0_289 = arith.constant 0 : index
    %305 = vector.load %arg6[%c6_287, %c0_288, %c0_289] : memref<9x8x8xf32, #tpu.memory_space<vmem>>, vector<1x8x8xf32>
    %306 = vector.shape_cast %305 : vector<1x8x8xf32> to vector<8x8xf32>
    %cst_290 = arith.constant dense<0.000000e+00> : vector<8x64xf32>
    %307 = tpu.matmul %306, %304, %cst_290 {dimension_numbers = #tpu.dot_dimension_numbers<[1], [0], [0], [1], [0, 0, 1, 1], [], []>} : vector<8x8xf32>, vector<8x64xf32>, vector<8x64xf32> -> vector<8x64xf32>
    %308 = arith.addf %301, %307 : vector<8x64xf32>
    %c0_291 = arith.constant 0 : index
    %c307 = arith.constant 307 : index
    %309 = vector.load %arg19[%c0_291, %c307] : memref<16x512xf32, #tpu.memory_space<vmem>>, vector<8x64xf32>
    %c7_292 = arith.constant 7 : index
    %c0_293 = arith.constant 0 : index
    %c0_294 = arith.constant 0 : index
    %310 = vector.load %arg6[%c7_292, %c0_293, %c0_294] : memref<9x8x8xf32, #tpu.memory_space<vmem>>, vector<1x8x8xf32>
    %311 = vector.shape_cast %310 : vector<1x8x8xf32> to vector<8x8xf32>
    %cst_295 = arith.constant dense<0.000000e+00> : vector<8x64xf32>
    %312 = tpu.matmul %311, %309, %cst_295 {dimension_numbers = #tpu.dot_dimension_numbers<[1], [0], [0], [1], [0, 0, 1, 1], [], []>} : vector<8x8xf32>, vector<8x64xf32>, vector<8x64xf32> -> vector<8x64xf32>
    %313 = arith.addf %308, %312 : vector<8x64xf32>
    %c0_296 = arith.constant 0 : index
    %c308 = arith.constant 308 : index
    %314 = vector.load %arg19[%c0_296, %c308] : memref<16x512xf32, #tpu.memory_space<vmem>>, vector<8x64xf32>
    %315 = vector.broadcast %264 : vector<1x64xf32> to vector<8x64xf32>
    %316 = arith.mulf %314, %315 : vector<8x64xf32>
    %c8_297 = arith.constant 8 : index
    %c0_298 = arith.constant 0 : index
    %c0_299 = arith.constant 0 : index
    %317 = vector.load %arg6[%c8_297, %c0_298, %c0_299] : memref<9x8x8xf32, #tpu.memory_space<vmem>>, vector<1x8x8xf32>
    %318 = vector.shape_cast %317 : vector<1x8x8xf32> to vector<8x8xf32>
    %cst_300 = arith.constant dense<0.000000e+00> : vector<8x64xf32>
    %319 = tpu.matmul %318, %316, %cst_300 {dimension_numbers = #tpu.dot_dimension_numbers<[1], [0], [0], [1], [0, 0, 1, 1], [], []>} : vector<8x8xf32>, vector<8x64xf32>, vector<8x64xf32> -> vector<8x64xf32>
    %320 = arith.addf %313, %319 : vector<8x64xf32>
    %c0_301 = arith.constant 0 : index
    %c0_302 = arith.constant 0 : index
    %321 = vector.load %arg7[%c0_301, %c0_302] : memref<8x4xf32, #tpu.memory_space<vmem>>, vector<8x4xf32>
    %cst_303 = arith.constant dense<0.000000e+00> : vector<8x64xf32>
    %322 = tpu.matmul %321, %259, %cst_303 {dimension_numbers = #tpu.dot_dimension_numbers<[1], [0], [0], [1], [0, 0, 1, 1], [], []>} : vector<8x4xf32>, vector<4x64xf32>, vector<8x64xf32> -> vector<8x64xf32>
    %323 = arith.addf %320, %322 : vector<8x64xf32>
    %cst_304 = arith.constant 0.000000e+00 : f32
    %324 = vector.broadcast %cst_304 : f32 to vector<8x64xf32>
    %325 = arith.maximumf %323, %324 : vector<8x64xf32>
    %c0_305 = arith.constant 0 : index
    %c299_306 = arith.constant 299 : index
    %326 = vector.load %arg19[%c0_305, %c299_306] : memref<16x512xf32, #tpu.memory_space<vmem>>, vector<8x64xf32>
    tpu.vector_store %arg19[%c0_305, %c299_306], %325 {strides = array<i32>} : memref<16x512xf32, #tpu.memory_space<vmem>>, vector<8x64xf32>,
    %c0_307 = arith.constant 0 : index
    %c0_308 = arith.constant 0 : index
    %327 = vector.load %arg14[%c0_307, %c0_308] : memref<2x64xf32, #tpu.memory_space<vmem>>, vector<1x64xf32>
    %c1_309 = arith.constant 1 : index
    %c0_310 = arith.constant 0 : index
    %328 = vector.load %arg14[%c1_309, %c0_310] : memref<2x64xf32, #tpu.memory_space<vmem>>, vector<1x64xf32>
    %c0_311 = arith.constant 0 : index
    %c290_312 = arith.constant 290 : index
    %329 = vector.load %arg19[%c0_311, %c290_312] : memref<16x512xf32, #tpu.memory_space<vmem>>, vector<8x64xf32>
    %330 = vector.broadcast %327 : vector<1x64xf32> to vector<8x64xf32>
    %331 = arith.mulf %329, %330 : vector<8x64xf32>
    %c0_313 = arith.constant 0 : index
    %c0_314 = arith.constant 0 : index
    %c0_315 = arith.constant 0 : index
    %332 = vector.load %arg9[%c0_313, %c0_314, %c0_315] : memref<9x16x8xf32, #tpu.memory_space<vmem>>, vector<1x16x8xf32>
    %333 = vector.shape_cast %332 : vector<1x16x8xf32> to vector<16x8xf32>
    %cst_316 = arith.constant dense<0.000000e+00> : vector<16x64xf32>
    %334 = tpu.matmul %333, %331, %cst_316 {dimension_numbers = #tpu.dot_dimension_numbers<[1], [0], [0], [1], [0, 0, 1, 1], [], []>} : vector<16x8xf32>, vector<8x64xf32>, vector<16x64xf32> -> vector<16x64xf32>
    %c0_317 = arith.constant 0 : index
    %c291_318 = arith.constant 291 : index
    %335 = vector.load %arg19[%c0_317, %c291_318] : memref<16x512xf32, #tpu.memory_space<vmem>>, vector<8x64xf32>
    %c1_319 = arith.constant 1 : index
    %c0_320 = arith.constant 0 : index
    %c0_321 = arith.constant 0 : index
    %336 = vector.load %arg9[%c1_319, %c0_320, %c0_321] : memref<9x16x8xf32, #tpu.memory_space<vmem>>, vector<1x16x8xf32>
    %337 = vector.shape_cast %336 : vector<1x16x8xf32> to vector<16x8xf32>
    %cst_322 = arith.constant dense<0.000000e+00> : vector<16x64xf32>
    %338 = tpu.matmul %337, %335, %cst_322 {dimension_numbers = #tpu.dot_dimension_numbers<[1], [0], [0], [1], [0, 0, 1, 1], [], []>} : vector<16x8xf32>, vector<8x64xf32>, vector<16x64xf32> -> vector<16x64xf32>
    %339 = arith.addf %334, %338 : vector<16x64xf32>
    %c0_323 = arith.constant 0 : index
    %c292_324 = arith.constant 292 : index
    %340 = vector.load %arg19[%c0_323, %c292_324] : memref<16x512xf32, #tpu.memory_space<vmem>>, vector<8x64xf32>
    %341 = vector.broadcast %328 : vector<1x64xf32> to vector<8x64xf32>
    %342 = arith.mulf %340, %341 : vector<8x64xf32>
    %c2_325 = arith.constant 2 : index
    %c0_326 = arith.constant 0 : index
    %c0_327 = arith.constant 0 : index
    %343 = vector.load %arg9[%c2_325, %c0_326, %c0_327] : memref<9x16x8xf32, #tpu.memory_space<vmem>>, vector<1x16x8xf32>
    %344 = vector.shape_cast %343 : vector<1x16x8xf32> to vector<16x8xf32>
    %cst_328 = arith.constant dense<0.000000e+00> : vector<16x64xf32>
    %345 = tpu.matmul %344, %342, %cst_328 {dimension_numbers = #tpu.dot_dimension_numbers<[1], [0], [0], [1], [0, 0, 1, 1], [], []>} : vector<16x8xf32>, vector<8x64xf32>, vector<16x64xf32> -> vector<16x64xf32>
    %346 = arith.addf %339, %345 : vector<16x64xf32>
    %c0_329 = arith.constant 0 : index
    %c298_330 = arith.constant 298 : index
    %347 = vector.load %arg19[%c0_329, %c298_330] : memref<16x512xf32, #tpu.memory_space<vmem>>, vector<8x64xf32>
    %348 = vector.broadcast %327 : vector<1x64xf32> to vector<8x64xf32>
    %349 = arith.mulf %347, %348 : vector<8x64xf32>
    %c3_331 = arith.constant 3 : index
    %c0_332 = arith.constant 0 : index
    %c0_333 = arith.constant 0 : index
    %350 = vector.load %arg9[%c3_331, %c0_332, %c0_333] : memref<9x16x8xf32, #tpu.memory_space<vmem>>, vector<1x16x8xf32>
    %351 = vector.shape_cast %350 : vector<1x16x8xf32> to vector<16x8xf32>
    %cst_334 = arith.constant dense<0.000000e+00> : vector<16x64xf32>
    %352 = tpu.matmul %351, %349, %cst_334 {dimension_numbers = #tpu.dot_dimension_numbers<[1], [0], [0], [1], [0, 0, 1, 1], [], []>} : vector<16x8xf32>, vector<8x64xf32>, vector<16x64xf32> -> vector<16x64xf32>
    %353 = arith.addf %346, %352 : vector<16x64xf32>
    %c0_335 = arith.constant 0 : index
    %c299_336 = arith.constant 299 : index
    %354 = vector.load %arg19[%c0_335, %c299_336] : memref<16x512xf32, #tpu.memory_space<vmem>>, vector<8x64xf32>
    %c4_337 = arith.constant 4 : index
    %c0_338 = arith.constant 0 : index
    %c0_339 = arith.constant 0 : index
    %355 = vector.load %arg9[%c4_337, %c0_338, %c0_339] : memref<9x16x8xf32, #tpu.memory_space<vmem>>, vector<1x16x8xf32>
    %356 = vector.shape_cast %355 : vector<1x16x8xf32> to vector<16x8xf32>
    %cst_340 = arith.constant dense<0.000000e+00> : vector<16x64xf32>
    %357 = tpu.matmul %356, %354, %cst_340 {dimension_numbers = #tpu.dot_dimension_numbers<[1], [0], [0], [1], [0, 0, 1, 1], [], []>} : vector<16x8xf32>, vector<8x64xf32>, vector<16x64xf32> -> vector<16x64xf32>
    %358 = arith.addf %353, %357 : vector<16x64xf32>
    %c0_341 = arith.constant 0 : index
    %c300_342 = arith.constant 300 : index
    %359 = vector.load %arg19[%c0_341, %c300_342] : memref<16x512xf32, #tpu.memory_space<vmem>>, vector<8x64xf32>
    %360 = vector.broadcast %328 : vector<1x64xf32> to vector<8x64xf32>
    %361 = arith.mulf %359, %360 : vector<8x64xf32>
    %c5_343 = arith.constant 5 : index
    %c0_344 = arith.constant 0 : index
    %c0_345 = arith.constant 0 : index
    %362 = vector.load %arg9[%c5_343, %c0_344, %c0_345] : memref<9x16x8xf32, #tpu.memory_space<vmem>>, vector<1x16x8xf32>
    %363 = vector.shape_cast %362 : vector<1x16x8xf32> to vector<16x8xf32>
    %cst_346 = arith.constant dense<0.000000e+00> : vector<16x64xf32>
    %364 = tpu.matmul %363, %361, %cst_346 {dimension_numbers = #tpu.dot_dimension_numbers<[1], [0], [0], [1], [0, 0, 1, 1], [], []>} : vector<16x8xf32>, vector<8x64xf32>, vector<16x64xf32> -> vector<16x64xf32>
    %365 = arith.addf %358, %364 : vector<16x64xf32>
    %c0_347 = arith.constant 0 : index
    %c306_348 = arith.constant 306 : index
    %366 = vector.load %arg19[%c0_347, %c306_348] : memref<16x512xf32, #tpu.memory_space<vmem>>, vector<8x64xf32>
    %367 = vector.broadcast %327 : vector<1x64xf32> to vector<8x64xf32>
    %368 = arith.mulf %366, %367 : vector<8x64xf32>
    %c6_349 = arith.constant 6 : index
    %c0_350 = arith.constant 0 : index
    %c0_351 = arith.constant 0 : index
    %369 = vector.load %arg9[%c6_349, %c0_350, %c0_351] : memref<9x16x8xf32, #tpu.memory_space<vmem>>, vector<1x16x8xf32>
    %370 = vector.shape_cast %369 : vector<1x16x8xf32> to vector<16x8xf32>
    %cst_352 = arith.constant dense<0.000000e+00> : vector<16x64xf32>
    %371 = tpu.matmul %370, %368, %cst_352 {dimension_numbers = #tpu.dot_dimension_numbers<[1], [0], [0], [1], [0, 0, 1, 1], [], []>} : vector<16x8xf32>, vector<8x64xf32>, vector<16x64xf32> -> vector<16x64xf32>
    %372 = arith.addf %365, %371 : vector<16x64xf32>
    %c0_353 = arith.constant 0 : index
    %c307_354 = arith.constant 307 : index
    %373 = vector.load %arg19[%c0_353, %c307_354] : memref<16x512xf32, #tpu.memory_space<vmem>>, vector<8x64xf32>
    %c7_355 = arith.constant 7 : index
    %c0_356 = arith.constant 0 : index
    %c0_357 = arith.constant 0 : index
    %374 = vector.load %arg9[%c7_355, %c0_356, %c0_357] : memref<9x16x8xf32, #tpu.memory_space<vmem>>, vector<1x16x8xf32>
    %375 = vector.shape_cast %374 : vector<1x16x8xf32> to vector<16x8xf32>
    %cst_358 = arith.constant dense<0.000000e+00> : vector<16x64xf32>
    %376 = tpu.matmul %375, %373, %cst_358 {dimension_numbers = #tpu.dot_dimension_numbers<[1], [0], [0], [1], [0, 0, 1, 1], [], []>} : vector<16x8xf32>, vector<8x64xf32>, vector<16x64xf32> -> vector<16x64xf32>
    %377 = arith.addf %372, %376 : vector<16x64xf32>
    %c0_359 = arith.constant 0 : index
    %c308_360 = arith.constant 308 : index
    %378 = vector.load %arg19[%c0_359, %c308_360] : memref<16x512xf32, #tpu.memory_space<vmem>>, vector<8x64xf32>
    %379 = vector.broadcast %328 : vector<1x64xf32> to vector<8x64xf32>
    %380 = arith.mulf %378, %379 : vector<8x64xf32>
    %c8_361 = arith.constant 8 : index
    %c0_362 = arith.constant 0 : index
    %c0_363 = arith.constant 0 : index
    %381 = vector.load %arg9[%c8_361, %c0_362, %c0_363] : memref<9x16x8xf32, #tpu.memory_space<vmem>>, vector<1x16x8xf32>
    %382 = vector.shape_cast %381 : vector<1x16x8xf32> to vector<16x8xf32>
    %cst_364 = arith.constant dense<0.000000e+00> : vector<16x64xf32>
    %383 = tpu.matmul %382, %380, %cst_364 {dimension_numbers = #tpu.dot_dimension_numbers<[1], [0], [0], [1], [0, 0, 1, 1], [], []>} : vector<16x8xf32>, vector<8x64xf32>, vector<16x64xf32> -> vector<16x64xf32>
    %384 = arith.addf %377, %383 : vector<16x64xf32>
    %c0_365 = arith.constant 0 : index
    %c0_366 = arith.constant 0 : index
    %385 = vector.load %arg12[%c0_365, %c0_366] : memref<64x16xf32, #tpu.memory_space<vmem>>, vector<64x16xf32>
    %cst_367 = arith.constant dense<0.000000e+00> : vector<16x16xf32>
    %386 = tpu.matmul %384, %385, %cst_367 {dimension_numbers = #tpu.dot_dimension_numbers<[1], [0], [0], [1], [0, 0, 1, 1], [], []>} : vector<16x64xf32>, vector<64x16xf32>, vector<16x16xf32> -> vector<16x16xf32>
    %cst_368 = arith.constant dense<0.000000e+00> : vector<8x16xf32>
    %387 = tpu.matmul %325, %385, %cst_368 {dimension_numbers = #tpu.dot_dimension_numbers<[1], [0], [0], [1], [0, 0, 1, 1], [], []>} : vector<8x64xf32>, vector<64x16xf32>, vector<8x16xf32> -> vector<8x16xf32>
    %cst_369 = arith.constant 0.000000e+00 : f32
    %388 = vector.broadcast %cst_369 : f32 to vector<16x16xf32>
    %389 = arith.maximumf %386, %388 : vector<16x16xf32>
    %c0_370 = arith.constant 0 : index
    %c377 = arith.constant 377 : index
    %390 = vector.load %arg19[%c0_370, %c377] : memref<16x512xf32, #tpu.memory_space<vmem>>, vector<16x16xf32>
    tpu.vector_store %arg19[%c0_370, %c377], %389 {strides = array<i32>} : memref<16x512xf32, #tpu.memory_space<vmem>>, vector<16x16xf32>,
    %c0_371 = arith.constant 0 : index
    %c0_372 = arith.constant 0 : index
    %391 = vector.load %arg15[%c0_371, %c0_372] : memref<2x16xf32, #tpu.memory_space<vmem>>, vector<1x16xf32>
    %c1_373 = arith.constant 1 : index
    %c0_374 = arith.constant 0 : index
    %392 = vector.load %arg15[%c1_373, %c0_374] : memref<2x16xf32, #tpu.memory_space<vmem>>, vector<1x16xf32>
    %c0_375 = arith.constant 0 : index
    %c372_376 = arith.constant 372 : index
    %393 = vector.load %arg19[%c0_375, %c372_376] : memref<16x512xf32, #tpu.memory_space<vmem>>, vector<16x16xf32>
    %394 = vector.broadcast %391 : vector<1x16xf32> to vector<16x16xf32>
    %395 = arith.mulf %393, %394 : vector<16x16xf32>
    %c0_377 = arith.constant 0 : index
    %c0_378 = arith.constant 0 : index
    %c0_379 = arith.constant 0 : index
    %396 = vector.load %arg10[%c0_377, %c0_378, %c0_379] : memref<9x16x16xf32, #tpu.memory_space<vmem>>, vector<1x16x16xf32>
    %397 = vector.shape_cast %396 : vector<1x16x16xf32> to vector<16x16xf32>
    %cst_380 = arith.constant dense<0.000000e+00> : vector<16x16xf32>
    %398 = tpu.matmul %397, %395, %cst_380 {dimension_numbers = #tpu.dot_dimension_numbers<[1], [0], [0], [1], [0, 0, 1, 1], [], []>} : vector<16x16xf32>, vector<16x16xf32>, vector<16x16xf32> -> vector<16x16xf32>
    %c0_381 = arith.constant 0 : index
    %c373 = arith.constant 373 : index
    %399 = vector.load %arg19[%c0_381, %c373] : memref<16x512xf32, #tpu.memory_space<vmem>>, vector<16x16xf32>
    %c1_382 = arith.constant 1 : index
    %c0_383 = arith.constant 0 : index
    %c0_384 = arith.constant 0 : index
    %400 = vector.load %arg10[%c1_382, %c0_383, %c0_384] : memref<9x16x16xf32, #tpu.memory_space<vmem>>, vector<1x16x16xf32>
    %401 = vector.shape_cast %400 : vector<1x16x16xf32> to vector<16x16xf32>
    %cst_385 = arith.constant dense<0.000000e+00> : vector<16x16xf32>
    %402 = tpu.matmul %401, %399, %cst_385 {dimension_numbers = #tpu.dot_dimension_numbers<[1], [0], [0], [1], [0, 0, 1, 1], [], []>} : vector<16x16xf32>, vector<16x16xf32>, vector<16x16xf32> -> vector<16x16xf32>
    %403 = arith.addf %398, %402 : vector<16x16xf32>
    %c0_386 = arith.constant 0 : index
    %c374 = arith.constant 374 : index
    %404 = vector.load %arg19[%c0_386, %c374] : memref<16x512xf32, #tpu.memory_space<vmem>>, vector<16x16xf32>
    %405 = vector.broadcast %392 : vector<1x16xf32> to vector<16x16xf32>
    %406 = arith.mulf %404, %405 : vector<16x16xf32>
    %c2_387 = arith.constant 2 : index
    %c0_388 = arith.constant 0 : index
    %c0_389 = arith.constant 0 : index
    %407 = vector.load %arg10[%c2_387, %c0_388, %c0_389] : memref<9x16x16xf32, #tpu.memory_space<vmem>>, vector<1x16x16xf32>
    %408 = vector.shape_cast %407 : vector<1x16x16xf32> to vector<16x16xf32>
    %cst_390 = arith.constant dense<0.000000e+00> : vector<16x16xf32>
    %409 = tpu.matmul %408, %406, %cst_390 {dimension_numbers = #tpu.dot_dimension_numbers<[1], [0], [0], [1], [0, 0, 1, 1], [], []>} : vector<16x16xf32>, vector<16x16xf32>, vector<16x16xf32> -> vector<16x16xf32>
    %410 = arith.addf %403, %409 : vector<16x16xf32>
    %c0_391 = arith.constant 0 : index
    %c376 = arith.constant 376 : index
    %411 = vector.load %arg19[%c0_391, %c376] : memref<16x512xf32, #tpu.memory_space<vmem>>, vector<16x16xf32>
    %412 = vector.broadcast %391 : vector<1x16xf32> to vector<16x16xf32>
    %413 = arith.mulf %411, %412 : vector<16x16xf32>
    %c3_392 = arith.constant 3 : index
    %c0_393 = arith.constant 0 : index
    %c0_394 = arith.constant 0 : index
    %414 = vector.load %arg10[%c3_392, %c0_393, %c0_394] : memref<9x16x16xf32, #tpu.memory_space<vmem>>, vector<1x16x16xf32>
    %415 = vector.shape_cast %414 : vector<1x16x16xf32> to vector<16x16xf32>
    %cst_395 = arith.constant dense<0.000000e+00> : vector<16x16xf32>
    %416 = tpu.matmul %415, %413, %cst_395 {dimension_numbers = #tpu.dot_dimension_numbers<[1], [0], [0], [1], [0, 0, 1, 1], [], []>} : vector<16x16xf32>, vector<16x16xf32>, vector<16x16xf32> -> vector<16x16xf32>
    %417 = arith.addf %410, %416 : vector<16x16xf32>
    %c0_396 = arith.constant 0 : index
    %c377_397 = arith.constant 377 : index
    %418 = vector.load %arg19[%c0_396, %c377_397] : memref<16x512xf32, #tpu.memory_space<vmem>>, vector<16x16xf32>
    %c4_398 = arith.constant 4 : index
    %c0_399 = arith.constant 0 : index
    %c0_400 = arith.constant 0 : index
    %419 = vector.load %arg10[%c4_398, %c0_399, %c0_400] : memref<9x16x16xf32, #tpu.memory_space<vmem>>, vector<1x16x16xf32>
    %420 = vector.shape_cast %419 : vector<1x16x16xf32> to vector<16x16xf32>
    %cst_401 = arith.constant dense<0.000000e+00> : vector<16x16xf32>
    %421 = tpu.matmul %420, %418, %cst_401 {dimension_numbers = #tpu.dot_dimension_numbers<[1], [0], [0], [1], [0, 0, 1, 1], [], []>} : vector<16x16xf32>, vector<16x16xf32>, vector<16x16xf32> -> vector<16x16xf32>
    %422 = arith.addf %417, %421 : vector<16x16xf32>
    %c0_402 = arith.constant 0 : index
    %c378 = arith.constant 378 : index
    %423 = vector.load %arg19[%c0_402, %c378] : memref<16x512xf32, #tpu.memory_space<vmem>>, vector<16x16xf32>
    %424 = vector.broadcast %392 : vector<1x16xf32> to vector<16x16xf32>
    %425 = arith.mulf %423, %424 : vector<16x16xf32>
    %c5_403 = arith.constant 5 : index
    %c0_404 = arith.constant 0 : index
    %c0_405 = arith.constant 0 : index
    %426 = vector.load %arg10[%c5_403, %c0_404, %c0_405] : memref<9x16x16xf32, #tpu.memory_space<vmem>>, vector<1x16x16xf32>
    %427 = vector.shape_cast %426 : vector<1x16x16xf32> to vector<16x16xf32>
    %cst_406 = arith.constant dense<0.000000e+00> : vector<16x16xf32>
    %428 = tpu.matmul %427, %425, %cst_406 {dimension_numbers = #tpu.dot_dimension_numbers<[1], [0], [0], [1], [0, 0, 1, 1], [], []>} : vector<16x16xf32>, vector<16x16xf32>, vector<16x16xf32> -> vector<16x16xf32>
    %429 = arith.addf %422, %428 : vector<16x16xf32>
    %c0_407 = arith.constant 0 : index
    %c380 = arith.constant 380 : index
    %430 = vector.load %arg19[%c0_407, %c380] : memref<16x512xf32, #tpu.memory_space<vmem>>, vector<16x16xf32>
    %431 = vector.broadcast %391 : vector<1x16xf32> to vector<16x16xf32>
    %432 = arith.mulf %430, %431 : vector<16x16xf32>
    %c6_408 = arith.constant 6 : index
    %c0_409 = arith.constant 0 : index
    %c0_410 = arith.constant 0 : index
    %433 = vector.load %arg10[%c6_408, %c0_409, %c0_410] : memref<9x16x16xf32, #tpu.memory_space<vmem>>, vector<1x16x16xf32>
    %434 = vector.shape_cast %433 : vector<1x16x16xf32> to vector<16x16xf32>
    %cst_411 = arith.constant dense<0.000000e+00> : vector<16x16xf32>
    %435 = tpu.matmul %434, %432, %cst_411 {dimension_numbers = #tpu.dot_dimension_numbers<[1], [0], [0], [1], [0, 0, 1, 1], [], []>} : vector<16x16xf32>, vector<16x16xf32>, vector<16x16xf32> -> vector<16x16xf32>
    %436 = arith.addf %429, %435 : vector<16x16xf32>
    %c0_412 = arith.constant 0 : index
    %c381 = arith.constant 381 : index
    %437 = vector.load %arg19[%c0_412, %c381] : memref<16x512xf32, #tpu.memory_space<vmem>>, vector<16x16xf32>
    %c7_413 = arith.constant 7 : index
    %c0_414 = arith.constant 0 : index
    %c0_415 = arith.constant 0 : index
    %438 = vector.load %arg10[%c7_413, %c0_414, %c0_415] : memref<9x16x16xf32, #tpu.memory_space<vmem>>, vector<1x16x16xf32>
    %439 = vector.shape_cast %438 : vector<1x16x16xf32> to vector<16x16xf32>
    %cst_416 = arith.constant dense<0.000000e+00> : vector<16x16xf32>
    %440 = tpu.matmul %439, %437, %cst_416 {dimension_numbers = #tpu.dot_dimension_numbers<[1], [0], [0], [1], [0, 0, 1, 1], [], []>} : vector<16x16xf32>, vector<16x16xf32>, vector<16x16xf32> -> vector<16x16xf32>
    %441 = arith.addf %436, %440 : vector<16x16xf32>
    %c0_417 = arith.constant 0 : index
    %c382 = arith.constant 382 : index
    %442 = vector.load %arg19[%c0_417, %c382] : memref<16x512xf32, #tpu.memory_space<vmem>>, vector<16x16xf32>
    %443 = vector.broadcast %392 : vector<1x16xf32> to vector<16x16xf32>
    %444 = arith.mulf %442, %443 : vector<16x16xf32>
    %c8_418 = arith.constant 8 : index
    %c0_419 = arith.constant 0 : index
    %c0_420 = arith.constant 0 : index
    %445 = vector.load %arg10[%c8_418, %c0_419, %c0_420] : memref<9x16x16xf32, #tpu.memory_space<vmem>>, vector<1x16x16xf32>
    %446 = vector.shape_cast %445 : vector<1x16x16xf32> to vector<16x16xf32>
    %cst_421 = arith.constant dense<0.000000e+00> : vector<16x16xf32>
    %447 = tpu.matmul %446, %444, %cst_421 {dimension_numbers = #tpu.dot_dimension_numbers<[1], [0], [0], [1], [0, 0, 1, 1], [], []>} : vector<16x16xf32>, vector<16x16xf32>, vector<16x16xf32> -> vector<16x16xf32>
    %448 = arith.addf %441, %447 : vector<16x16xf32>
    %c0_422 = arith.constant 0 : index
    %c0_423 = arith.constant 0 : index
    %449 = vector.load %arg11[%c0_422, %c0_423] : memref<16x8xf32, #tpu.memory_space<vmem>>, vector<16x8xf32>
    %cst_424 = arith.constant dense<0.000000e+00> : vector<16x16xf32>
    %450 = tpu.matmul %449, %387, %cst_424 {dimension_numbers = #tpu.dot_dimension_numbers<[1], [0], [0], [1], [0, 0, 1, 1], [], []>} : vector<16x8xf32>, vector<8x16xf32>, vector<16x16xf32> -> vector<16x16xf32>
    %451 = arith.addf %448, %450 : vector<16x16xf32>
    %cst_425 = arith.constant 0.000000e+00 : f32
    %452 = vector.broadcast %cst_425 : f32 to vector<16x16xf32>
    %453 = arith.maximumf %451, %452 : vector<16x16xf32>
    %c0_426 = arith.constant 0 : index
    %c0_427 = arith.constant 0 : index
    %454 = vector.load %arg16[%c0_426, %c0_427] : memref<10x16xf32, #tpu.memory_space<vmem>>, vector<10x16xf32>
    %cst_428 = arith.constant dense<0.000000e+00> : vector<10x16xf32>
    %455 = tpu.matmul %454, %453, %cst_428 {dimension_numbers = #tpu.dot_dimension_numbers<[1], [0], [0], [1], [0, 0, 1, 1], [], []>} : vector<10x16xf32>, vector<16x16xf32>, vector<10x16xf32> -> vector<10x16xf32>
    %cst_429 = arith.constant dense<0.000000e+00> : vector<10xf32>
    %456 = vector.multi_reduction <add>, %455, %cst_429 [1] : vector<10x16xf32> to vector<10xf32>
    %457 = vector.shape_cast %456 : vector<10xf32> to vector<10x1xf32>
    %cst_430 = arith.constant 6.250000e-02 : f32
    %458 = vector.broadcast %cst_430 : f32 to vector<10x1xf32>
    %459 = arith.mulf %457, %458 : vector<10x1xf32>
    %c0_431 = arith.constant 0 : index
    %c0_432 = arith.constant 0 : index
    %460 = vector.load %arg17[%c0_431, %c0_432] : memref<10x1xf32, #tpu.memory_space<vmem>>, vector<10x1xf32>
    %461 = arith.addf %459, %460 : vector<10x1xf32>
    %c0_433 = arith.constant 0 : index
    %c0_434 = arith.constant 0 : index
    %c0_435 = arith.constant 0 : index
    %462 = vector.load %arg18[%c0_433, %c0_434, %c0_435] : memref<1x10x1xf32, #tpu.memory_space<vmem>>, vector<1x10x1xf32>
    %463 = vector.shape_cast %462 : vector<1x10x1xf32> to vector<10x1xf32>
    %464 = vector.shape_cast %461 : vector<10x1xf32> to vector<1x10x1xf32>
    tpu.vector_store %arg18[%c0_433, %c0_434, %c0_435], %464 {strides = array<i32>} : memref<1x10x1xf32, #tpu.memory_space<vmem>>, vector<1x10x1xf32>,
    return
  }
  func.func @transform_0(%arg0: i32) -> (i32, i32, i32, i32) {
    %c0_i32 = arith.constant 0 : i32
    %c0_i32_0 = arith.constant 0 : i32
    %c0_i32_1 = arith.constant 0 : i32
    %c0_i32_2 = arith.constant 0 : i32
    return %arg0, %c0_i32, %c0_i32_0, %c0_i32_1 : i32, i32, i32, i32
  }
  func.func @transform_1(%arg0: i32) -> (i32, i32, i32) {
    %c0_i32 = arith.constant 0 : i32
    %c0_i32_0 = arith.constant 0 : i32
    %c0_i32_1 = arith.constant 0 : i32
    %c0_i32_2 = arith.constant 0 : i32
    return %c0_i32, %c0_i32_0, %c0_i32_1 : i32, i32, i32
  }
  func.func @transform_2(%arg0: i32) -> (i32, i32, i32) {
    %c0_i32 = arith.constant 0 : i32
    %c0_i32_0 = arith.constant 0 : i32
    %c0_i32_1 = arith.constant 0 : i32
    %c0_i32_2 = arith.constant 0 : i32
    return %c0_i32, %c0_i32_0, %c0_i32_1 : i32, i32, i32
  }
  func.func @transform_3(%arg0: i32) -> (i32, i32, i32) {
    %c0_i32 = arith.constant 0 : i32
    %c0_i32_0 = arith.constant 0 : i32
    %c0_i32_1 = arith.constant 0 : i32
    %c0_i32_2 = arith.constant 0 : i32
    return %c0_i32, %c0_i32_0, %c0_i32_1 : i32, i32, i32
  }
  func.func @transform_4(%arg0: i32) -> (i32, i32, i32) {
    %c0_i32 = arith.constant 0 : i32
    %c0_i32_0 = arith.constant 0 : i32
    %c0_i32_1 = arith.constant 0 : i32
    %c0_i32_2 = arith.constant 0 : i32
    return %c0_i32, %c0_i32_0, %c0_i32_1 : i32, i32, i32
  }
  func.func @transform_5(%arg0: i32) -> (i32, i32, i32) {
    %c0_i32 = arith.constant 0 : i32
    %c0_i32_0 = arith.constant 0 : i32
    %c0_i32_1 = arith.constant 0 : i32
    %c0_i32_2 = arith.constant 0 : i32
    return %c0_i32, %c0_i32_0, %c0_i32_1 : i32, i32, i32
  }
  func.func @transform_6(%arg0: i32) -> (i32, i32) {
    %c0_i32 = arith.constant 0 : i32
    %c0_i32_0 = arith.constant 0 : i32
    %c0_i32_1 = arith.constant 0 : i32
    return %c0_i32, %c0_i32_0 : i32, i32
  }
  func.func @transform_7(%arg0: i32) -> (i32, i32) {
    %c0_i32 = arith.constant 0 : i32
    %c0_i32_0 = arith.constant 0 : i32
    %c0_i32_1 = arith.constant 0 : i32
    return %c0_i32, %c0_i32_0 : i32, i32
  }
  func.func @transform_8(%arg0: i32) -> (i32, i32, i32) {
    %c0_i32 = arith.constant 0 : i32
    %c0_i32_0 = arith.constant 0 : i32
    %c0_i32_1 = arith.constant 0 : i32
    %c0_i32_2 = arith.constant 0 : i32
    return %c0_i32, %c0_i32_0, %c0_i32_1 : i32, i32, i32
  }
  func.func @transform_9(%arg0: i32) -> (i32, i32, i32) {
    %c0_i32 = arith.constant 0 : i32
    %c0_i32_0 = arith.constant 0 : i32
    %c0_i32_1 = arith.constant 0 : i32
    %c0_i32_2 = arith.constant 0 : i32
    return %c0_i32, %c0_i32_0, %c0_i32_1 : i32, i32, i32
  }
  func.func @transform_10(%arg0: i32) -> (i32, i32) {
    %c0_i32 = arith.constant 0 : i32
    %c0_i32_0 = arith.constant 0 : i32
    %c0_i32_1 = arith.constant 0 : i32
    return %c0_i32, %c0_i32_0 : i32, i32
  }
  func.func @transform_11(%arg0: i32) -> (i32, i32) {
    %c0_i32 = arith.constant 0 : i32
    %c0_i32_0 = arith.constant 0 : i32
    %c0_i32_1 = arith.constant 0 : i32
    return %c0_i32, %c0_i32_0 : i32, i32
  }
  func.func @transform_12(%arg0: i32) -> (i32, i32) {
    %c0_i32 = arith.constant 0 : i32
    %c0_i32_0 = arith.constant 0 : i32
    %c0_i32_1 = arith.constant 0 : i32
    return %c0_i32, %c0_i32_0 : i32, i32
  }
  func.func @transform_13(%arg0: i32) -> (i32, i32) {
    %c0_i32 = arith.constant 0 : i32
    %c0_i32_0 = arith.constant 0 : i32
    %c0_i32_1 = arith.constant 0 : i32
    return %c0_i32, %c0_i32_0 : i32, i32
  }
  func.func @transform_14(%arg0: i32) -> (i32, i32) {
    %c0_i32 = arith.constant 0 : i32
    %c0_i32_0 = arith.constant 0 : i32
    %c0_i32_1 = arith.constant 0 : i32
    return %c0_i32, %c0_i32_0 : i32, i32
  }
  func.func @transform_15(%arg0: i32) -> (i32, i32) {
    %c0_i32 = arith.constant 0 : i32
    %c0_i32_0 = arith.constant 0 : i32
    %c0_i32_1 = arith.constant 0 : i32
    return %c0_i32, %c0_i32_0 : i32, i32
  }
  func.func @transform_16(%arg0: i32) -> (i32, i32) {
    %c0_i32 = arith.constant 0 : i32
    %c0_i32_0 = arith.constant 0 : i32
    %c0_i32_1 = arith.constant 0 : i32
    return %c0_i32, %c0_i32_0 : i32, i32
  }
  func.func @transform_17(%arg0: i32) -> (i32, i32, i32) {
    %c0_i32 = arith.constant 0 : i32
    %c0_i32_0 = arith.constant 0 : i32
    %c0_i32_1 = arith.constant 0 : i32
    return %arg0, %c0_i32, %c0_i32_0 : i32, i32, i32
  }
}

</mosaic_0001>

<llo_original>
// kernel: tpu_custom_call.1
$region0: #{tpu_custom_call.1}
  #allocation0 [shape = 'u32[]', space=smem, size = 0x4, offset = 0x4, fixed_abs, tag = 'smem constant byte address 0x4 - core index']
  #allocation1 [shape = 'u32[72,128]{1,0:T(1,128)}', space=vmem, size = 0x9000, scoped, tag = 'internal scratch']
  #allocation2 [shape = 'f32[16,512]{1,0:T(8,128)}', space=vmem, size = 0x8000, scoped, tag = 'scratch operand']
  %s0 = inlined_call_operand.vmem [shape: f32[2,1,3,256], index: 0, kind: input, shape index: {}]
  %s1 = inlined_call_operand.vmem [shape: f32[9,4,3], index: 1, kind: input, shape index: {}]
  %s2 = inlined_call_operand.vmem [shape: f32[9,4,4], index: 2, kind: input, shape index: {}]
  %s3 = inlined_call_operand.vmem [shape: f32[9,4,4], index: 3, kind: input, shape index: {}]
  %s4 = inlined_call_operand.vmem [shape: f32[9,8,4], index: 4, kind: input, shape index: {}]
  %s5 = inlined_call_operand.vmem [shape: f32[9,8,8], index: 5, kind: input, shape index: {}]
  %s6 = inlined_call_operand.vmem [shape: f32[8,4], index: 6, kind: input, shape index: {}]
  %s7 = inlined_call_operand.vmem [shape: f32[256,64], index: 7, kind: input, shape index: {}]
  %s8 = inlined_call_operand.vmem [shape: f32[9,16,8], index: 8, kind: input, shape index: {}]
  %s9 = inlined_call_operand.vmem [shape: f32[9,16,16], index: 9, kind: input, shape index: {}]
  %s10 = inlined_call_operand.vmem [shape: f32[16,8], index: 10, kind: input, shape index: {}]
  %s11 = inlined_call_operand.vmem [shape: f32[64,16], index: 11, kind: input, shape index: {}]
  %s12 = inlined_call_operand.vmem [shape: f32[2,256], index: 12, kind: input, shape index: {}]
  %s13 = inlined_call_operand.vmem [shape: f32[2,64], index: 13, kind: input, shape index: {}]
  %s14 = inlined_call_operand.vmem [shape: f32[2,16], index: 14, kind: input, shape index: {}]
  %s15 = inlined_call_operand.vmem [shape: f32[10,16], index: 15, kind: input, shape index: {}]
  %s16 = inlined_call_operand.vmem [shape: f32[10,1], index: 16, kind: input, shape index: {}]
  %s17 = inlined_call_operand.vmem [shape: f32[2,10,1], index: 17, kind: output, shape index: {}]
  %s18 = sld [smem:[#allocation0]]
  $region101: #{tpu_custom_call.1} parent=0
    _
  %s20 = ssub.s32 1, %s18
  %s21 = scalar_select 0, %s20, %s18
  loop: start=0, step=1, limit=4
  $region2: #{tpu_custom_call.1} parent=0 // loop_pre_header
    _
  $region3: #{tpu_custom_call.1} parent=0 // loop_header
    %s23 = sphi 0, %s27
    %p24 = scmp.ge.s32.totalorder %s23, 4
    %s33 = sphi 0, %s35
    %s36 = sphi 0, %s33
    %s37 = sphi 0, %s36
    %s53 = sphi 0, %s37
    %s57 = sphi 0, %s57
    %s59 = sphi 0, %s57
    %s60 = sphi 0, %s59
    %s74 = sphi 0, %s60
    %s78 = sphi 0, %s78
    %s80 = sphi 0, %s78
    %s81 = sphi 0, %s80
    %s95 = sphi 0, %s81
    %s99 = sphi 0, %s99
    %s101 = sphi 0, %s99
    %s102 = sphi 0, %s101
    %s116 = sphi 0, %s102
    %s120 = sphi 0, %s120
    %s122 = sphi 0, %s120
    %s123 = sphi 0, %s122
    %s137 = sphi 0, %s123
    %s141 = sphi 0, %s141
    %s143 = sphi 0, %s141
    %s144 = sphi 0, %s143
    %s158 = sphi 0, %s144
    %s162 = sphi 0, %s162
    %s164 = sphi 0, %s162
    %s165 = sphi 0, %s164
    %s179 = sphi 0, %s165
    %s183 = sphi 0, %s183
    %s185 = sphi 0, %s183
    %s186 = sphi 0, %s185
    %s200 = sphi 0, %s186
    %s204 = sphi 0, %s204
    %s206 = sphi 0, %s204
    %s207 = sphi 0, %s206
    %s221 = sphi 0, %s207
    %s225 = sphi 0, %s225
    %s227 = sphi 0, %s225
    %s228 = sphi 0, %s227
    %s242 = sphi 0, %s228
    %s246 = sphi 0, %s246
    %s248 = sphi 0, %s246
    %s249 = sphi 0, %s248
    %s263 = sphi 0, %s249
    %s267 = sphi 0, %s267
    %s269 = sphi 0, %s267
    %s270 = sphi 0, %s269
    %s284 = sphi 0, %s270
    %s288 = sphi 0, %s288
    %s290 = sphi 0, %s288
    %s291 = sphi 0, %s290
    %s305 = sphi 0, %s291
    %s309 = sphi 0, %s309
    %s311 = sphi 0, %s309
    %s312 = sphi 0, %s311
    %s326 = sphi 0, %s312
    %s330 = sphi 0, %s330
    %s332 = sphi 0, %s330
    %s333 = sphi 0, %s332
    %s347 = sphi 0, %s333
    %s351 = sphi 0, %s351
    %s353 = sphi 0, %s351
    %s354 = sphi 0, %s353
    %s368 = sphi 0, %s354
    %s372 = sphi 0, %s372
    %s374 = sphi 0, %s372
    %s375 = sphi 0, %s374
    %s389 = sphi 0, %s375
    %s395 = sphi 0, %s397
    %s398 = sphi 0, %s395
    %s399 = sphi 0, %s398
    %s415 = sphi 0, %s399
  $region4: #{tpu_custom_call.1} parent=0 // loop_header_branch
    %26 = sbr.rel (%p24) target = $region8
  $region5: #{tpu_custom_call.1} parent=0 // loop_body
    %s28 = ssub.s32 %s23, 1
    %s29 = ssub.s32 %s23, 2
    %s30 = sadd.s32 %s23, 1
    %s31 = ssub.s32 %s23, %s30
    %p32 = scmp.eq.s32.totalorder %s31, 0
    %s34 = sadd.s32 %s33, 1
    %s35 = scalar_select %p32, %s33, %s34
    %p38 = pneg %p32
    %p39 = scmp.eq.s32.totalorder %s23, 1
    %p40 = por %p38, %p39
    %p41 = scmp.ne.s32.totalorder %s33, %s36
    %p42 = scmp.eq.s32.totalorder %s23, 0
    %p43 = por %p41, %p42
    %p44 = scmp.ne.s32.totalorder %s33, %s36
    %p45 = scmp.eq.s32.totalorder %s28, 1
    %p46 = por %p44, %p45
    %p47 = scmp.ne.s32.totalorder %s36, %s37
    %p48 = scmp.eq.s32.totalorder %s28, 0
    %p49 = por %p47, %p48
    %p50 = scmp.ne.s32.totalorder %s36, %s37
    %p51 = scmp.eq.s32.totalorder %s29, 1
    %p52 = por %p50, %p51
    %p54 = scmp.ne.s32.totalorder %s37, %s53
    %p55 = scmp.eq.s32.totalorder %s29, 0
    %p56 = por %p54, %p55
    %s58 = sadd.s32 %s57, 1
    %p61 = scmp.eq.s32.totalorder %s23, 1
    %p62 = scmp.ne.s32.totalorder %s57, %s59
    %p63 = scmp.eq.s32.totalorder %s23, 0
    %p64 = por %p62, %p63
    %p65 = scmp.ne.s32.totalorder %s57, %s59
    %p66 = scmp.eq.s32.totalorder %s28, 1
    %p67 = por %p65, %p66
    %p68 = scmp.ne.s32.totalorder %s59, %s60
    %p69 = scmp.eq.s32.totalorder %s28, 0
    %p70 = por %p68, %p69
    %p71 = scmp.ne.s32.totalorder %s59, %s60
    %p72 = scmp.eq.s32.totalorder %s29, 1
    %p73 = por %p71, %p72
    %p75 = scmp.ne.s32.totalorder %s60, %s74
    %p76 = scmp.eq.s32.totalorder %s29, 0
    %p77 = por %p75, %p76
    %s79 = sadd.s32 %s78, 1
    %p82 = scmp.eq.s32.totalorder %s23, 1
    %p83 = scmp.ne.s32.totalorder %s78, %s80
    %p84 = scmp.eq.s32.totalorder %s23, 0
    %p85 = por %p83, %p84
    %p86 = scmp.ne.s32.totalorder %s78, %s80
    %p87 = scmp.eq.s32.totalorder %s28, 1
    %p88 = por %p86, %p87
    %p89 = scmp.ne.s32.totalorder %s80, %s81
    %p90 = scmp.eq.s32.totalorder %s28, 0
    %p91 = por %p89, %p90
    %p92 = scmp.ne.s32.totalorder %s80, %s81
    %p93 = scmp.eq.s32.totalorder %s29, 1
    %p94 = por %p92, %p93
    %p96 = scmp.ne.s32.totalorder %s81, %s95
    %p97 = scmp.eq.s32.totalorder %s29, 0
    %p98 = por %p96, %p97
    %s100 = sadd.s32 %s99, 1
    %p103 = scmp.eq.s32.totalorder %s23, 1
    %p104 = scmp.ne.s32.totalorder %s99, %s101
    %p105 = scmp.eq.s32.totalorder %s23, 0
    %p106 = por %p104, %p105
    %p107 = scmp.ne.s32.totalorder %s99, %s101
    %p108 = scmp.eq.s32.totalorder %s28, 1
    %p109 = por %p107, %p108
    %p110 = scmp.ne.s32.totalorder %s101, %s102
    %p111 = scmp.eq.s32.totalorder %s28, 0
    %p112 = por %p110, %p111
    %p113 = scmp.ne.s32.totalorder %s101, %s102
    %p114 = scmp.eq.s32.totalorder %s29, 1
    %p115 = por %p113, %p114
    %p117 = scmp.ne.s32.totalorder %s102, %s116
    %p118 = scmp.eq.s32.totalorder %s29, 0
    %p119 = por %p117, %p118
    %s121 = sadd.s32 %s120, 1
    %p124 = scmp.eq.s32.totalorder %s23, 1
    %p125 = scmp.ne.s32.totalorder %s120, %s122
    %p126 = scmp.eq.s32.totalorder %s23, 0
    %p127 = por %p125, %p126
    %p128 = scmp.ne.s32.totalorder %s120, %s122
    %p129 = scmp.eq.s32.totalorder %s28, 1
    %p130 = por %p128, %p129
    %p131 = scmp.ne.s32.totalorder %s122, %s123
    %p132 = scmp.eq.s32.totalorder %s28, 0
    %p133 = por %p131, %p132
    %p134 = scmp.ne.s32.totalorder %s122, %s123
    %p135 = scmp.eq.s32.totalorder %s29, 1
    %p136 = por %p134, %p135
    %p138 = scmp.ne.s32.totalorder %s123, %s137
    %p139 = scmp.eq.s32.totalorder %s29, 0
    %p140 = por %p138, %p139
    %s142 = sadd.s32 %s141, 1
    %p145 = scmp.eq.s32.totalorder %s23, 1
    %p146 = scmp.ne.s32.totalorder %s141, %s143
    %p147 = scmp.eq.s32.totalorder %s23, 0
    %p148 = por %p146, %p147
    %p149 = scmp.ne.s32.totalorder %s141, %s143
    %p150 = scmp.eq.s32.totalorder %s28, 1
    %p151 = por %p149, %p150
    %p152 = scmp.ne.s32.totalorder %s143, %s144
    %p153 = scmp.eq.s32.totalorder %s28, 0
    %p154 = por %p152, %p153
    %p155 = scmp.ne.s32.totalorder %s143, %s144
    %p156 = scmp.eq.s32.totalorder %s29, 1
    %p157 = por %p155, %p156
    %p159 = scmp.ne.s32.totalorder %s144, %s158
    %p160 = scmp.eq.s32.totalorder %s29, 0
    %p161 = por %p159, %p160
    %s163 = sadd.s32 %s162, 1
    %p166 = scmp.eq.s32.totalorder %s23, 1
    %p167 = scmp.ne.s32.totalorder %s162, %s164
    %p168 = scmp.eq.s32.totalorder %s23, 0
    %p169 = por %p167, %p168
    %p170 = scmp.ne.s32.totalorder %s162, %s164
    %p171 = scmp.eq.s32.totalorder %s28, 1
    %p172 = por %p170, %p171
    %p173 = scmp.ne.s32.totalorder %s164, %s165
    %p174 = scmp.eq.s32.totalorder %s28, 0
    %p175 = por %p173, %p174
    %p176 = scmp.ne.s32.totalorder %s164, %s165
    %p177 = scmp.eq.s32.totalorder %s29, 1
    %p178 = por %p176, %p177
    %p180 = scmp.ne.s32.totalorder %s165, %s179
    %p181 = scmp.eq.s32.totalorder %s29, 0
    %p182 = por %p180, %p181
    %s184 = sadd.s32 %s183, 1
    %p187 = scmp.eq.s32.totalorder %s23, 1
    %p188 = scmp.ne.s32.totalorder %s183, %s185
    %p189 = scmp.eq.s32.totalorder %s23, 0
    %p190 = por %p188, %p189
    %p191 = scmp.ne.s32.totalorder %s183, %s185
    %p192 = scmp.eq.s32.totalorder %s28, 1
    %p193 = por %p191, %p192
    %p194 = scmp.ne.s32.totalorder %s185, %s186
    %p195 = scmp.eq.s32.totalorder %s28, 0
    %p196 = por %p194, %p195
    %p197 = scmp.ne.s32.totalorder %s185, %s186
    %p198 = scmp.eq.s32.totalorder %s29, 1
    %p199 = por %p197, %p198
    %p201 = scmp.ne.s32.totalorder %s186, %s200
    %p202 = scmp.eq.s32.totalorder %s29, 0
    %p203 = por %p201, %p202
    %s205 = sadd.s32 %s204, 1
    %p208 = scmp.eq.s32.totalorder %s23, 1
    %p209 = scmp.ne.s32.totalorder %s204, %s206
    %p210 = scmp.eq.s32.totalorder %s23, 0
    %p211 = por %p209, %p210
    %p212 = scmp.ne.s32.totalorder %s204, %s206
    %p213 = scmp.eq.s32.totalorder %s28, 1
    %p214 = por %p212, %p213
    %p215 = scmp.ne.s32.totalorder %s206, %s207
    %p216 = scmp.eq.s32.totalorder %s28, 0
    %p217 = por %p215, %p216
    %p218 = scmp.ne.s32.totalorder %s206, %s207
    %p219 = scmp.eq.s32.totalorder %s29, 1
    %p220 = por %p218, %p219
    %p222 = scmp.ne.s32.totalorder %s207, %s221
    %p223 = scmp.eq.s32.totalorder %s29, 0
    %p224 = por %p222, %p223
    %s226 = sadd.s32 %s225, 1
    %p229 = scmp.eq.s32.totalorder %s23, 1
    %p230 = scmp.ne.s32.totalorder %s225, %s227
    %p231 = scmp.eq.s32.totalorder %s23, 0
    %p232 = por %p230, %p231
    %p233 = scmp.ne.s32.totalorder %s225, %s227
    %p234 = scmp.eq.s32.totalorder %s28, 1
    %p235 = por %p233, %p234
    %p236 = scmp.ne.s32.totalorder %s227, %s228
    %p237 = scmp.eq.s32.totalorder %s28, 0
    %p238 = por %p236, %p237
    %p239 = scmp.ne.s32.totalorder %s227, %s228
    %p240 = scmp.eq.s32.totalorder %s29, 1
    %p241 = por %p239, %p240
    %p243 = scmp.ne.s32.totalorder %s228, %s242
    %p244 = scmp.eq.s32.totalorder %s29, 0
    %p245 = por %p243, %p244
    %s247 = sadd.s32 %s246, 1
    %p250 = scmp.eq.s32.totalorder %s23, 1
    %p251 = scmp.ne.s32.totalorder %s246, %s248
    %p252 = scmp.eq.s32.totalorder %s23, 0
    %p253 = por %p251, %p252
    %p254 = scmp.ne.s32.totalorder %s246, %s248
    %p255 = scmp.eq.s32.totalorder %s28, 1
    %p256 = por %p254, %p255
    %p257 = scmp.ne.s32.totalorder %s248, %s249
    %p258 = scmp.eq.s32.totalorder %s28, 0
    %p259 = por %p257, %p258
    %p260 = scmp.ne.s32.totalorder %s248, %s249
    %p261 = scmp.eq.s32.totalorder %s29, 1
    %p262 = por %p260, %p261
    %p264 = scmp.ne.s32.totalorder %s249, %s263
    %p265 = scmp.eq.s32.totalorder %s29, 0
    %p266 = por %p264, %p265
    %s268 = sadd.s32 %s267, 1
    %p271 = scmp.eq.s32.totalorder %s23, 1
    %p272 = scmp.ne.s32.totalorder %s267, %s269
    %p273 = scmp.eq.s32.totalorder %s23, 0
    %p274 = por %p272, %p273
    %p275 = scmp.ne.s32.totalorder %s267, %s269
    %p276 = scmp.eq.s32.totalorder %s28, 1
    %p277 = por %p275, %p276
    %p278 = scmp.ne.s32.totalorder %s269, %s270
    %p279 = scmp.eq.s32.totalorder %s28, 0
    %p280 = por %p278, %p279
    %p281 = scmp.ne.s32.totalorder %s269, %s270
    %p282 = scmp.eq.s32.totalorder %s29, 1
    %p283 = por %p281, %p282
    %p285 = scmp.ne.s32.totalorder %s270, %s284
    %p286 = scmp.eq.s32.totalorder %s29, 0
    %p287 = por %p285, %p286
    %s289 = sadd.s32 %s288, 1
    %p292 = scmp.eq.s32.totalorder %s23, 1
    %p293 = scmp.ne.s32.totalorder %s288, %s290
    %p294 = scmp.eq.s32.totalorder %s23, 0
    %p295 = por %p293, %p294
    %p296 = scmp.ne.s32.totalorder %s288, %s290
    %p297 = scmp.eq.s32.totalorder %s28, 1
    %p298 = por %p296, %p297
    %p299 = scmp.ne.s32.totalorder %s290, %s291
    %p300 = scmp.eq.s32.totalorder %s28, 0
    %p301 = por %p299, %p300
    %p302 = scmp.ne.s32.totalorder %s290, %s291
    %p303 = scmp.eq.s32.totalorder %s29, 1
    %p304 = por %p302, %p303
    %p306 = scmp.ne.s32.totalorder %s291, %s305
    %p307 = scmp.eq.s32.totalorder %s29, 0
    %p308 = por %p306, %p307
    %s310 = sadd.s32 %s309, 1
    %p313 = scmp.eq.s32.totalorder %s23, 1
    %p314 = scmp.ne.s32.totalorder %s309, %s311
    %p315 = scmp.eq.s32.totalorder %s23, 0
    %p316 = por %p314, %p315
    %p317 = scmp.ne.s32.totalorder %s309, %s311
    %p318 = scmp.eq.s32.totalorder %s28, 1
    %p319 = por %p317, %p318
    %p320 = scmp.ne.s32.totalorder %s311, %s312
    %p321 = scmp.eq.s32.totalorder %s28, 0
    %p322 = por %p320, %p321
    %p323 = scmp.ne.s32.totalorder %s311, %s312
    %p324 = scmp.eq.s32.totalorder %s29, 1
    %p325 = por %p323, %p324
    %p327 = scmp.ne.s32.totalorder %s312, %s326
    %p328 = scmp.eq.s32.totalorder %s29, 0
    %p329 = por %p327, %p328
    %s331 = sadd.s32 %s330, 1
    %p334 = scmp.eq.s32.totalorder %s23, 1
    %p335 = scmp.ne.s32.totalorder %s330, %s332
    %p336 = scmp.eq.s32.totalorder %s23, 0
    %p337 = por %p335, %p336
    %p338 = scmp.ne.s32.totalorder %s330, %s332
    %p339 = scmp.eq.s32.totalorder %s28, 1
    %p340 = por %p338, %p339
    %p341 = scmp.ne.s32.totalorder %s332, %s333
    %p342 = scmp.eq.s32.totalorder %s28, 0
    %p343 = por %p341, %p342
    %p344 = scmp.ne.s32.totalorder %s332, %s333
    %p345 = scmp.eq.s32.totalorder %s29, 1
    %p346 = por %p344, %p345
    %p348 = scmp.ne.s32.totalorder %s333, %s347
    %p349 = scmp.eq.s32.totalorder %s29, 0
    %p350 = por %p348, %p349
    %s352 = sadd.s32 %s351, 1
    %p355 = scmp.eq.s32.totalorder %s23, 1
    %p356 = scmp.ne.s32.totalorder %s351, %s353
    %p357 = scmp.eq.s32.totalorder %s23, 0
    %p358 = por %p356, %p357
    %p359 = scmp.ne.s32.totalorder %s351, %s353
    %p360 = scmp.eq.s32.totalorder %s28, 1
    %p361 = por %p359, %p360
    %p362 = scmp.ne.s32.totalorder %s353, %s354
    %p363 = scmp.eq.s32.totalorder %s28, 0
    %p364 = por %p362, %p363
    %p365 = scmp.ne.s32.totalorder %s353, %s354
    %p366 = scmp.eq.s32.totalorder %s29, 1
    %p367 = por %p365, %p366
    %p369 = scmp.ne.s32.totalorder %s354, %s368
    %p370 = scmp.eq.s32.totalorder %s29, 0
    %p371 = por %p369, %p370
    %s373 = sadd.s32 %s372, 1
    %p376 = scmp.eq.s32.totalorder %s23, 1
    %p377 = scmp.ne.s32.totalorder %s372, %s374
    %p378 = scmp.eq.s32.totalorder %s23, 0
    %p379 = por %p377, %p378
    %p380 = scmp.ne.s32.totalorder %s372, %s374
    %p381 = scmp.eq.s32.totalorder %s28, 1
    %p382 = por %p380, %p381
    %p383 = scmp.ne.s32.totalorder %s374, %s375
    %p384 = scmp.eq.s32.totalorder %s28, 0
    %p385 = por %p383, %p384
    %p386 = scmp.ne.s32.totalorder %s374, %s375
    %p387 = scmp.eq.s32.totalorder %s29, 1
    %p388 = por %p386, %p387
    %p390 = scmp.ne.s32.totalorder %s375, %s389
    %p391 = scmp.eq.s32.totalorder %s29, 0
    %p392 = por %p390, %p391
    %s393 = ssub.s32 %s23, %s30
    %p394 = scmp.eq.s32.totalorder %s393, 0
    %s396 = sadd.s32 %s395, 1
    %s397 = scalar_select %p394, %s395, %s396
    %p400 = pneg %p394
    %p401 = scmp.eq.s32.totalorder %s23, 1
    %p402 = por %p400, %p401
    %p403 = scmp.ne.s32.totalorder %s395, %s398
    %p404 = scmp.eq.s32.totalorder %s23, 0
    %p405 = por %p403, %p404
    %p406 = scmp.ne.s32.totalorder %s395, %s398
    %p407 = scmp.eq.s32.totalorder %s28, 1
    %p408 = por %p406, %p407
    %p409 = scmp.ne.s32.totalorder %s398, %s399
    %p410 = scmp.eq.s32.totalorder %s28, 0
    %p411 = por %p409, %p410
    %p412 = scmp.ne.s32.totalorder %s398, %s399
    %p413 = scmp.eq.s32.totalorder %s29, 1
    %p414 = por %p412, %p413
    %p416 = scmp.ne.s32.totalorder %s399, %s415
    %p417 = scmp.eq.s32.totalorder %s29, 0
    %p418 = por %p416, %p417
    %p419 = scmp.le.s32.totalorder 1, %s23
    %p420 = scmp.lt.s32.totalorder %s23, 3
    %p421 = pnand %p419, %p420
    %p422 = pneg %p421
    // Predicated region
    $region9: #{tpu_custom_call.1} parent=5 // pred_check
      _
    $region10: #{tpu_custom_call.1} parent=5 // pred_check_branch
      %424 = sbr.rel (%p421) target = $region12
    $region11: #{tpu_custom_call.1} parent=5 // pred_region
      %s425 = ssub.s32 %s23, 1
      // Predicated region
      $region13: #{tpu_custom_call.1} parent=11 // pred_check
        %p426 = pneg %p70
      $region14: #{tpu_custom_call.1} parent=11 // pred_check_branch
        %428 = sbr.rel (%p426) target = $region16
      $region15: #{tpu_custom_call.1} parent=11 // pred_region
        _
      $region16: #{tpu_custom_call.1} parent=11 // pred_fallthru
        _
      // Predicated region
      $region17: #{tpu_custom_call.1} parent=11 // pred_check
        %p429 = pneg %p91
      $region18: #{tpu_custom_call.1} parent=11 // pred_check_branch
        %431 = sbr.rel (%p429) target = $region20
      $region19: #{tpu_custom_call.1} parent=11 // pred_region
        _
      $region20: #{tpu_custom_call.1} parent=11 // pred_fallthru
        _
      // Predicated region
      $region21: #{tpu_custom_call.1} parent=11 // pred_check
        %p432 = pneg %p112
      $region22: #{tpu_custom_call.1} parent=11 // pred_check_branch
        %434 = sbr.rel (%p432) target = $region24
      $region23: #{tpu_custom_call.1} parent=11 // pred_region
        _
      $region24: #{tpu_custom_call.1} parent=11 // pred_fallthru
        _
      // Predicated region
      $region25: #{tpu_custom_call.1} parent=11 // pred_check
        %p435 = pneg %p133
      $region26: #{tpu_custom_call.1} parent=11 // pred_check_branch
        %437 = sbr.rel (%p435) target = $region28
      $region27: #{tpu_custom_call.1} parent=11 // pred_region
        _
      $region28: #{tpu_custom_call.1} parent=11 // pred_fallthru
        _
      // Predicated region
      $region29: #{tpu_custom_call.1} parent=11 // pred_check
        %p438 = pneg %p154
      $region30: #{tpu_custom_call.1} parent=11 // pred_check_branch
        %440 = sbr.rel (%p438) target = $region32
      $region31: #{tpu_custom_call.1} parent=11 // pred_region
        _
      $region32: #{tpu_custom_call.1} parent=11 // pred_fallthru
        _
      // Predicated region
      $region33: #{tpu_custom_call.1} parent=11 // pred_check
        %p441 = pneg %p175
      $region34: #{tpu_custom_call.1} parent=11 // pred_check_branch
        %443 = sbr.rel (%p441) target = $region36
      $region35: #{tpu_custom_call.1} parent=11 // pred_region
        _
      $region36: #{tpu_custom_call.1} parent=11 // pred_fallthru
        _
      // Predicated region
      $region37: #{tpu_custom_call.1} parent=11 // pred_check
        %p444 = pneg %p196
      $region38: #{tpu_custom_call.1} parent=11 // pred_check_branch
        %446 = sbr.rel (%p444) target = $region40
      $region39: #{tpu_custom_call.1} parent=11 // pred_region
        _
      $region40: #{tpu_custom_call.1} parent=11 // pred_fallthru
        _
      // Predicated region
      $region41: #{tpu_custom_call.1} parent=11 // pred_check
        %p447 = pneg %p217
      $region42: #{tpu_custom_call.1} parent=11 // pred_check_branch
        %449 = sbr.rel (%p447) target = $region44
      $region43: #{tpu_custom_call.1} parent=11 // pred_region
        _
      $region44: #{tpu_custom_call.1} parent=11 // pred_fallthru
        _
      // Predicated region
      $region45: #{tpu_custom_call.1} parent=11 // pred_check
        %p450 = pneg %p238
      $region46: #{tpu_custom_call.1} parent=11 // pred_check_branch
        %452 = sbr.rel (%p450) target = $region48
      $region47: #{tpu_custom_call.1} parent=11 // pred_region
        _
      $region48: #{tpu_custom_call.1} parent=11 // pred_fallthru
        _
      // Predicated region
      $region49: #{tpu_custom_call.1} parent=11 // pred_check
        %p453 = pneg %p259
      $region50: #{tpu_custom_call.1} parent=11 // pred_check_branch
        %455 = sbr.rel (%p453) target = $region52
      $region51: #{tpu_custom_call.1} parent=11 // pred_region
        _
      $region52: #{tpu_custom_call.1} parent=11 // pred_fallthru
        _
      // Predicated region
      $region53: #{tpu_custom_call.1} parent=11 // pred_check
        %p456 = pneg %p280
      $region54: #{tpu_custom_call.1} parent=11 // pred_check_branch
        %458 = sbr.rel (%p456) target = $region56
      $region55: #{tpu_custom_call.1} parent=11 // pred_region
        _
      $region56: #{tpu_custom_call.1} parent=11 // pred_fallthru
        _
      // Predicated region
      $region57: #{tpu_custom_call.1} parent=11 // pred_check
        %p459 = pneg %p301
      $region58: #{tpu_custom_call.1} parent=11 // pred_check_branch
        %461 = sbr.rel (%p459) target = $region60
      $region59: #{tpu_custom_call.1} parent=11 // pred_region
        _
      $region60: #{tpu_custom_call.1} parent=11 // pred_fallthru
        _
      // Predicated region
      $region61: #{tpu_custom_call.1} parent=11 // pred_check
        %p462 = pneg %p322
      $region62: #{tpu_custom_call.1} parent=11 // pred_check_branch
        %464 = sbr.rel (%p462) target = $region64
      $region63: #{tpu_custom_call.1} parent=11 // pred_region
        _
      $region64: #{tpu_custom_call.1} parent=11 // pred_fallthru
        _
      // Predicated region
      $region65: #{tpu_custom_call.1} parent=11 // pred_check
        %p465 = pneg %p343
      $region66: #{tpu_custom_call.1} parent=11 // pred_check_branch
        %467 = sbr.rel (%p465) target = $region68
      $region67: #{tpu_custom_call.1} parent=11 // pred_region
        _
      $region68: #{tpu_custom_call.1} parent=11 // pred_fallthru
        _
      // Predicated region
      $region69: #{tpu_custom_call.1} parent=11 // pred_check
        %p468 = pneg %p364
      $region70: #{tpu_custom_call.1} parent=11 // pred_check_branch
        %470 = sbr.rel (%p468) target = $region72
      $region71: #{tpu_custom_call.1} parent=11 // pred_region
        _
      $region72: #{tpu_custom_call.1} parent=11 // pred_fallthru
        _
      // Predicated region
      $region73: #{tpu_custom_call.1} parent=11 // pred_check
        %p471 = pneg %p385
      $region74: #{tpu_custom_call.1} parent=11 // pred_check_branch
        %473 = sbr.rel (%p471) target = $region76
      $region75: #{tpu_custom_call.1} parent=11 // pred_region
        _
      $region76: #{tpu_custom_call.1} parent=11 // pred_fallthru
        _
    $region12: #{tpu_custom_call.1} parent=5 // pred_fallthru
      _
    %p474 = scmp.lt.s32.totalorder %s23, 2
    // Predicated region
    $region77: #{tpu_custom_call.1} parent=5 // pred_check
      %p475 = pneg %p474
    $region78: #{tpu_custom_call.1} parent=5 // pred_check_branch
      %477 = sbr.rel (%p475) target = $region80
    $region79: #{tpu_custom_call.1} parent=5 // pred_region
      // Predicated region
      $region81: #{tpu_custom_call.1} parent=79 // pred_check
        %p478 = pneg %p43
      $region82: #{tpu_custom_call.1} parent=79 // pred_check_branch
        %480 = sbr.rel (%p478) target = $region84
      $region83: #{tpu_custom_call.1} parent=79 // pred_region
        %p481 = scmp.lt.s32.totalorder %s23, 1
        %s482 = scalar_select %p481, %s23, 1
        %s483 = smul.addr %s482, 2
        %s484 = smul.addr %s483, 4
        %s485 = scalar_lea.vmem %s0, %s484
      $region84: #{tpu_custom_call.1} parent=79 // pred_fallthru
        _
    $region80: #{tpu_custom_call.1} parent=5 // pred_fallthru
      _
    %p486 = scmp.le.s32.totalorder 1, %s23
    %p487 = scmp.lt.s32.totalorder %s23, 3
    %p488 = pnand %p486, %p487
    %p489 = pneg %p488
    // Predicated region
    $region85: #{tpu_custom_call.1} parent=5 // pred_check
      _
    $region86: #{tpu_custom_call.1} parent=5 // pred_check_branch
      %491 = sbr.rel (%p488) target = $region88
    $region87: #{tpu_custom_call.1} parent=5 // pred_region
      %s492 = ssub.s32 %s23, 1
      %p493 = scmp.lt.s32.totalorder %s28, 1
      %s494 = scalar_select %p493, %s28, 1
      %s495 = smul.addr %s494, 2
      %s496 = smul.addr %s495, 4
      %s497 = scalar_lea.vmem %s0, %s496
      %p498 = pneg %p49
      %p499 = pneg %p46
      %p500 = pneg %p70
      %p501 = pneg %p67
      %p502 = pneg %p91
      %p503 = pneg %p88
      %p504 = pneg %p112
      %p505 = pneg %p109
      %p506 = pneg %p133
      %p507 = pneg %p130
      %p508 = pneg %p154
      %p509 = pneg %p151
      %p510 = pneg %p175
      %p511 = pneg %p172
      %p512 = pneg %p196
      %p513 = pneg %p193
      %p514 = pneg %p217
      %p515 = pneg %p214
      %p516 = pneg %p238
      %p517 = pneg %p235
      %p518 = pneg %p259
      %p519 = pneg %p256
      %p520 = pneg %p280
      %p521 = pneg %p277
      %p522 = pneg %p301
      %p523 = pneg %p298
      %p524 = pneg %p322
      %p525 = pneg %p319
      %p526 = pneg %p343
      %p527 = pneg %p340
      %p528 = pneg %p364
      %p529 = pneg %p361
      %p530 = pneg %p385
      %p531 = pneg %p382
      %p532 = pneg %p411
      %p533 = pneg %p408
      %p534 = scmp.lt.s32.totalorder %s28, 1
      %s535 = scalar_select %p534, %s28, 1
      %s536 = smul.addr %s535, 2
      %s537 = smul.addr %s536, 8
      %s538 = scalar_lea.vmem %s17, %s537
      %p539 = scmp.lt.s32.totalorder %s28, 1
      %s540 = scalar_select %p539, %s28, 1
      %s541 = smul.addr %s540, 2
      %s542 = smul.addr %s541, 4
      %s543 = scalar_lea.vmem %s0, %s542
      %p544 = scmp.lt.s32.totalorder %s28, 1
      %s545 = scalar_select %p544, %s28, 1
      %s546 = smul.addr %s545, 2
      %s547 = smul.addr %s546, 8
      %s548 = scalar_lea.vmem %s17, %s547
      %vm549 = vcmask 138240
      %550 = vst.msk [vmem:[#allocation2] sm:$0xff] %vm549, 0.0
      %551 = vst.msk [vmem:[#allocation2 + $0x20] sm:$0xff] %vm549, 0.0
      %vm552 = vcmask 277640
      %553 = vst.msk [vmem:[#allocation2 + $0x10] sm:$0xff] %vm552, 0.0
      %554 = vst.msk [vmem:[#allocation2 + $0x30] sm:$0xff] %vm552, 0.0
      %vm555 = vcmask 351504
      %556 = vst.msk [vmem:[#allocation2 + $0x10] sm:$0xff] %vm555, 0.0
      %557 = vst.msk [vmem:[#allocation2 + $0x30] sm:$0xff] %vm555, 0.0
      %vm558 = vcmask 950104
      %559 = vst.msk [vmem:[#allocation2 + $0x10] sm:$0xff] %vm558, 0.0
      %560 = vst.msk [vmem:[#allocation2 + $0x30] sm:$0xff] %vm558, 0.0
      %vm561 = vcmask 991136
      %562 = vst.msk [vmem:[#allocation2 + $0x10] sm:$0xff] %vm561, 0.0
      %563 = vst.msk [vmem:[#allocation2 + $0x30] sm:$0xff] %vm561, 0.0
      %vm564 = vcmask 113736
      %565 = vst.msk [vmem:[#allocation2 + $0x18] sm:$0xff] %vm564, 0.0
      %566 = vst.msk [vmem:[#allocation2 + $0x38] sm:$0xff] %vm564, 0.0
      %v567 = vld [vmem:[%s543] sm:$0x77]
      %569 = vst [vmem:[#allocation1] ss:$2 sm:$0xff] %v567
      %v570 = vld.sshfl [vmem:[#allocation1] sm:$0xff pattern:$0x75316420]
      %v571 = vld.sshfl [vmem:[#allocation1 + $0x8] sm:$0xff pattern:$0x75316420]
      %572 = vrot.lane.b32.xlu0 %v570, 17
      %v573 = vpop.permute.xlu0 %572
      %574 = vrot.lane.b32.xlu0 %v571, 17
      %v575 = vpop.permute.xlu0 %574
      %v576 = vsel %vm549, %v573, %v575
      %vm580 = vcmask 1042568
      %581 = vst.msk [vmem:[#allocation2] sm:$0x7] %vm580, %v573
      %582 = vst [vmem:[#allocation2 + $0x8] sm:$0x7] %v576
      %vm583 = vcmask 133120
      %584 = vst.msk [vmem:[#allocation2 + $0x10] sm:$0x7] %vm583, %v575
      %v585 = vld [vmem:[%s12] ss:$2 sm:$0x3]
      %s586 = scalar_lea.vmem %s12, 1
      %v587 = vld [vmem:[%s586] ss:$2 sm:$0x3]
      %v588 = vld [vmem:[#allocation2] sm:$0x7]
      %v589 = vld [vmem:[#allocation2 + $0x8] sm:$0x7]
      %v591 = vperm.slane %v585, 0
      %v592 = vperm.slane %v585, 1
      %v595 = vmul.f32 %v588, %v591
      %v596 = vmul.f32 %v589, %v592
      %v597 = vld [vmem:[%s1] sm:$0xf]
      %v598 = vld [vmem:[#allocation2 + $0x10] sm:$0x7]
      %s599 = scalar_lea.vmem %s1, 4
      %v600 = vld [vmem:[%s599] sm:$0xf]
      %604 = vrot.lane.b32.xlu0 %v588, 127
      %v605 = vpop.permute.xlu0 %604
      %606 = vrot.lane.b32.xlu0 %v589, 127
      %v607 = vpop.permute.xlu0 %606
      %608 = vrot.lane.b32.xlu0 %v598, 127
      %v609 = vpop.permute.xlu0 %608
      %vm610 = vcmask 1039360
      %v611 = vsel %vm610, %v605, %v607
      %v612 = vsel %vm610, %v607, %v609
      %vm613 = vcmask 23552
      %v615 = vsel %vm613, %v600, 0
      %vm617 = vcmask 1042432
      %v618 = vsel %vm617, %v611, 0
      %v620 = vsel %vm617, %v612, 0
      %622 = vmatpush.msra.mxu0 0.0
      %623 = vmatpush.msra.mxu0 0.0
      %624 = vmatpush.msra.mxu0 0.0
      %625 = vmatpush.msra.mxu0 0.0
      %626 = vmatpush.msra.mxu0 0.0
      %627 = vmatpush.msra.mxu0 0.0
      %628 = vmatpush.msra.mxu0 0.0
      %629 = vmatpush.msra.mxu0 0.0
      %630 = vmatpush.msra.mxu0 0.0
      %631 = vmatpush.msra.mxu0 0.0
      %632 = vmatpush.msra.mxu0 0.0
      %633 = vmatpush.msra.mxu0 0.0
      %634 = vmatpush.msra.mxu0 0.0
      %635 = vmatpush.msra.mxu0 0.0
      %636 = vmatpush.msra.mxu0 0.0
      %637 = vmatpush.msra.mxu0 %v618
      %638 = vmatmul.f32.gmra.mxu0 %v615
      %v639 = vpop.f32.mrf.mxu0
      %v640 = vadd.f32 0.0, %v639
      %641 = vdwg.mxu0
      %642 = vmatpush.msra.mxu0 0.0
      %643 = vmatpush.msra.mxu0 0.0
      %644 = vmatpush.msra.mxu0 0.0
      %645 = vmatpush.msra.mxu0 0.0
      %646 = vmatpush.msra.mxu0 0.0
      %647 = vmatpush.msra.mxu0 0.0
      %648 = vmatpush.msra.mxu0 0.0
      %649 = vmatpush.msra.mxu0 0.0
      %650 = vmatpush.msra.mxu0 0.0
      %651 = vmatpush.msra.mxu0 0.0
      %652 = vmatpush.msra.mxu0 0.0
      %653 = vmatpush.msra.mxu0 0.0
      %654 = vmatpush.msra.mxu0 0.0
      %655 = vmatpush.msra.mxu0 0.0
      %656 = vmatpush.msra.mxu0 0.0
      %657 = vmatpush.msra.mxu0 %v620
      %658 = vmatmul.f32.gmra.mxu0 %v615
      %v659 = vpop.f32.mrf.mxu0
      %v660 = vadd.f32 0.0, %v659
      %661 = vdwg.mxu0
      %v663 = vsel %vm613, %v597, 0
      %v666 = vsel %vm617, %v595, 0
      %v669 = vsel %vm617, %v596, 0
      %671 = vmatpush.msra.mxu0 0.0
      %672 = vmatpush.msra.mxu0 0.0
      %673 = vmatpush.msra.mxu0 0.0
      %674 = vmatpush.msra.mxu0 0.0
      %675 = vmatpush.msra.mxu0 0.0
      %676 = vmatpush.msra.mxu0 0.0
      %677 = vmatpush.msra.mxu0 0.0
      %678 = vmatpush.msra.mxu0 0.0
      %679 = vmatpush.msra.mxu0 0.0
      %680 = vmatpush.msra.mxu0 0.0
      %681 = vmatpush.msra.mxu0 0.0
      %682 = vmatpush.msra.mxu0 0.0
      %683 = vmatpush.msra.mxu0 0.0
      %684 = vmatpush.msra.mxu0 0.0
      %685 = vmatpush.msra.mxu0 0.0
      %686 = vmatpush.msra.mxu0 %v666
      %687 = vmatmul.f32.gmra.mxu0 %v663
      %v688 = vpop.f32.mrf.mxu0
      %v689 = vadd.f32 %v640, %v688
      %690 = vdwg.mxu0
      %691 = vmatpush.msra.mxu0 0.0
      %692 = vmatpush.msra.mxu0 0.0
      %693 = vmatpush.msra.mxu0 0.0
      %694 = vmatpush.msra.mxu0 0.0
      %695 = vmatpush.msra.mxu0 0.0
      %696 = vmatpush.msra.mxu0 0.0
      %697 = vmatpush.msra.mxu0 0.0
      %698 = vmatpush.msra.mxu0 0.0
      %699 = vmatpush.msra.mxu0 0.0
      %700 = vmatpush.msra.mxu0 0.0
      %701 = vmatpush.msra.mxu0 0.0
      %702 = vmatpush.msra.mxu0 0.0
      %703 = vmatpush.msra.mxu0 0.0
      %704 = vmatpush.msra.mxu0 0.0
      %705 = vmatpush.msra.mxu0 0.0
      %706 = vmatpush.msra.mxu0 %v669
      %707 = vmatmul.f32.gmra.mxu0 %v663
      %v708 = vpop.f32.mrf.mxu0
      %v709 = vadd.f32 %v660, %v708
      %710 = vdwg.mxu0
      %v712 = vperm.slane %v587, 0
      %v713 = vperm.slane %v587, 1
      %714 = vrot.lane.b32.xlu0 %v712, 2
      %v715 = vpop.permute.xlu0 %714
      %716 = vrot.lane.b32.xlu0 %v713, 2
      %v717 = vpop.permute.xlu0 %716
      %vm718 = vcmask 15360
      %v719 = vsel %vm718, %v715, %v717
      %v723 = vmul.f32 %v588, %v715
      %v724 = vmul.f32 %v589, %v719
      %v725 = vmul.f32 %v598, %v717
      %s726 = scalar_lea.vmem %s1, 8
      %v727 = vld [vmem:[%s726] sm:$0xf]
      %731 = vrot.lane.b32.xlu0 %v723, 126
      %v732 = vpop.permute.xlu0 %731
      %733 = vrot.lane.b32.xlu0 %v724, 126
      %v734 = vpop.permute.xlu0 %733
      %735 = vrot.lane.b32.xlu0 %v725, 126
      %v736 = vpop.permute.xlu0 %735
      %vm737 = vcmask 1031168
      %v738 = vsel %vm737, %v732, %v734
      %v739 = vsel %vm737, %v734, %v736
      %v741 = vsel %vm613, %v727, 0
      %v743 = vsel %vm617, %v738, 0
      %v745 = vsel %vm617, %v739, 0
      %747 = vmatpush.msra.mxu0 0.0
      %748 = vmatpush.msra.mxu0 0.0
      %749 = vmatpush.msra.mxu0 0.0
      %750 = vmatpush.msra.mxu0 0.0
      %751 = vmatpush.msra.mxu0 0.0
      %752 = vmatpush.msra.mxu0 0.0
      %753 = vmatpush.msra.mxu0 0.0
      %754 = vmatpush.msra.mxu0 0.0
      %755 = vmatpush.msra.mxu0 0.0
      %756 = vmatpush.msra.mxu0 0.0
      %757 = vmatpush.msra.mxu0 0.0
      %758 = vmatpush.msra.mxu0 0.0
      %759 = vmatpush.msra.mxu0 0.0
      %760 = vmatpush.msra.mxu0 0.0
      %761 = vmatpush.msra.mxu0 0.0
      %762 = vmatpush.msra.mxu0 %v743
      %763 = vmatmul.f32.gmra.mxu0 %v741
      %v764 = vpop.f32.mrf.mxu0
      %v765 = vadd.f32 0.0, %v764
      %766 = vdwg.mxu0
      %767 = vmatpush.msra.mxu0 0.0
      %768 = vmatpush.msra.mxu0 0.0
      %769 = vmatpush.msra.mxu0 0.0
      %770 = vmatpush.msra.mxu0 0.0
      %771 = vmatpush.msra.mxu0 0.0
      %772 = vmatpush.msra.mxu0 0.0
      %773 = vmatpush.msra.mxu0 0.0
      %774 = vmatpush.msra.mxu0 0.0
      %775 = vmatpush.msra.mxu0 0.0
      %776 = vmatpush.msra.mxu0 0.0
      %777 = vmatpush.msra.mxu0 0.0
      %778 = vmatpush.msra.mxu0 0.0
      %779 = vmatpush.msra.mxu0 0.0
      %780 = vmatpush.msra.mxu0 0.0
      %781 = vmatpush.msra.mxu0 0.0
      %782 = vmatpush.msra.mxu0 %v745
      %783 = vmatmul.f32.gmra.mxu0 %v741
      %v784 = vpop.f32.mrf.mxu0
      %v785 = vadd.f32 0.0, %v784
      %786 = vdwg.mxu0
      %v787 = vadd.f32 %v689, %v765
      %v788 = vadd.f32 %v709, %v785
      %789 = vrot.lane.b32.xlu0 %v591, 16
      %v790 = vpop.permute.xlu0 %789
      %791 = vrot.lane.b32.xlu0 %v592, 16
      %v792 = vpop.permute.xlu0 %791
      %vm793 = vcmask 130048
      %v794 = vsel %vm793, %v790, %v792
      %v798 = vmul.f32 %v588, %v790
      %v799 = vmul.f32 %v589, %v794
      %v800 = vmul.f32 %v598, %v792
      %s801 = scalar_lea.vmem %s1, 12
      %v802 = vld [vmem:[%s801] sm:$0xf]
      %806 = vrot.lane.b32.xlu0 %v798, 112
      %v807 = vpop.permute.xlu0 %806
      %808 = vrot.lane.b32.xlu0 %v799, 112
      %v809 = vpop.permute.xlu0 %808
      %810 = vrot.lane.b32.xlu0 %v800, 112
      %v811 = vpop.permute.xlu0 %810
      %vm812 = vcmask 916480
      %v813 = vsel %vm812, %v807, %v809
      %v814 = vsel %vm812, %v809, %v811
      %v816 = vsel %vm613, %v802, 0
      %v818 = vsel %vm617, %v813, 0
      %v820 = vsel %vm617, %v814, 0
      %822 = vmatpush.msra.mxu0 0.0
      %823 = vmatpush.msra.mxu0 0.0
      %824 = vmatpush.msra.mxu0 0.0
      %825 = vmatpush.msra.mxu0 0.0
      %826 = vmatpush.msra.mxu0 0.0
      %827 = vmatpush.msra.mxu0 0.0
      %828 = vmatpush.msra.mxu0 0.0
      %829 = vmatpush.msra.mxu0 0.0
      %830 = vmatpush.msra.mxu0 0.0
      %831 = vmatpush.msra.mxu0 0.0
      %832 = vmatpush.msra.mxu0 0.0
      %833 = vmatpush.msra.mxu0 0.0
      %834 = vmatpush.msra.mxu0 0.0
      %835 = vmatpush.msra.mxu0 0.0
      %836 = vmatpush.msra.mxu0 0.0
      %837 = vmatpush.msra.mxu0 %v818
      %838 = vmatmul.f32.gmra.mxu0 %v816
      %v839 = vpop.f32.mrf.mxu0
      %v840 = vadd.f32 0.0, %v839
      %841 = vdwg.mxu0
      %842 = vmatpush.msra.mxu0 0.0
      %843 = vmatpush.msra.mxu0 0.0
      %844 = vmatpush.msra.mxu0 0.0
      %845 = vmatpush.msra.mxu0 0.0
      %846 = vmatpush.msra.mxu0 0.0
      %847 = vmatpush.msra.mxu0 0.0
      %848 = vmatpush.msra.mxu0 0.0
      %849 = vmatpush.msra.mxu0 0.0
      %850 = vmatpush.msra.mxu0 0.0
      %851 = vmatpush.msra.mxu0 0.0
      %852 = vmatpush.msra.mxu0 0.0
      %853 = vmatpush.msra.mxu0 0.0
      %854 = vmatpush.msra.mxu0 0.0
      %855 = vmatpush.msra.mxu0 0.0
      %856 = vmatpush.msra.mxu0 0.0
      %857 = vmatpush.msra.mxu0 %v820
      %858 = vmatmul.f32.gmra.mxu0 %v816
      %v859 = vpop.f32.mrf.mxu0
      %v860 = vadd.f32 0.0, %v859
      %861 = vdwg.mxu0
      %v862 = vadd.f32 %v787, %v840
      %v863 = vadd.f32 %v788, %v860
      %s864 = scalar_lea.vmem %s1, 16
      %v865 = vld [vmem:[%s864] sm:$0xf]
      %866 = vrot.lane.b32.xlu0 %v588, 111
      %v867 = vpop.permute.xlu0 %866
      %868 = vrot.lane.b32.xlu0 %v589, 111
      %v869 = vpop.permute.xlu0 %868
      %870 = vrot.lane.b32.xlu0 %v598, 111
      %v871 = vpop.permute.xlu0 %870
      %vm872 = vcmask 908288
      %v873 = vsel %vm872, %v867, %v869
      %v874 = vsel %vm872, %v869, %v871
      %v876 = vsel %vm613, %v865, 0
      %v878 = vsel %vm617, %v873, 0
      %v880 = vsel %vm617, %v874, 0
      %882 = vmatpush.msra.mxu0 0.0
      %883 = vmatpush.msra.mxu0 0.0
      %884 = vmatpush.msra.mxu0 0.0
      %885 = vmatpush.msra.mxu0 0.0
      %886 = vmatpush.msra.mxu0 0.0
      %887 = vmatpush.msra.mxu0 0.0
      %888 = vmatpush.msra.mxu0 0.0
      %889 = vmatpush.msra.mxu0 0.0
      %890 = vmatpush.msra.mxu0 0.0
      %891 = vmatpush.msra.mxu0 0.0
      %892 = vmatpush.msra.mxu0 0.0
      %893 = vmatpush.msra.mxu0 0.0
      %894 = vmatpush.msra.mxu0 0.0
      %895 = vmatpush.msra.mxu0 0.0
      %896 = vmatpush.msra.mxu0 0.0
      %897 = vmatpush.msra.mxu0 %v878
      %898 = vmatmul.f32.gmra.mxu0 %v876
      %v899 = vpop.f32.mrf.mxu0
      %v900 = vadd.f32 0.0, %v899
      %901 = vdwg.mxu0
      %902 = vmatpush.msra.mxu0 0.0
      %903 = vmatpush.msra.mxu0 0.0
      %904 = vmatpush.msra.mxu0 0.0
      %905 = vmatpush.msra.mxu0 0.0
      %906 = vmatpush.msra.mxu0 0.0
      %907 = vmatpush.msra.mxu0 0.0
      %908 = vmatpush.msra.mxu0 0.0
      %909 = vmatpush.msra.mxu0 0.0
      %910 = vmatpush.msra.mxu0 0.0
      %911 = vmatpush.msra.mxu0 0.0
      %912 = vmatpush.msra.mxu0 0.0
      %913 = vmatpush.msra.mxu0 0.0
      %914 = vmatpush.msra.mxu0 0.0
      %915 = vmatpush.msra.mxu0 0.0
      %916 = vmatpush.msra.mxu0 0.0
      %917 = vmatpush.msra.mxu0 %v880
      %918 = vmatmul.f32.gmra.mxu0 %v876
      %v919 = vpop.f32.mrf.mxu0
      %v920 = vadd.f32 0.0, %v919
      %921 = vdwg.mxu0
      %v922 = vadd.f32 %v862, %v900
      %v923 = vadd.f32 %v863, %v920
      %924 = vrot.lane.b32.xlu0 %v712, 18
      %v925 = vpop.permute.xlu0 %924
      %926 = vrot.lane.b32.xlu0 %v713, 18
      %v927 = vpop.permute.xlu0 %926
      %vm928 = vcmask 146432
      %v929 = vsel %vm928, %v925, %v927
      %v933 = vmul.f32 %v588, %v925
      %v934 = vmul.f32 %v589, %v929
      %v935 = vmul.f32 %v598, %v927
      %s936 = scalar_lea.vmem %s1, 20
      %v937 = vld [vmem:[%s936] sm:$0xf]
      %941 = vrot.lane.b32.xlu0 %v933, 110
      %v942 = vpop.permute.xlu0 %941
      %943 = vrot.lane.b32.xlu0 %v934, 110
      %v944 = vpop.permute.xlu0 %943
      %945 = vrot.lane.b32.xlu0 %v935, 110
      %v946 = vpop.permute.xlu0 %945
      %vm947 = vcmask 900096
      %v948 = vsel %vm947, %v942, %v944
      %v949 = vsel %vm947, %v944, %v946
      %v951 = vsel %vm613, %v937, 0
      %v953 = vsel %vm617, %v948, 0
      %v955 = vsel %vm617, %v949, 0
      %957 = vmatpush.msra.mxu0 0.0
      %958 = vmatpush.msra.mxu0 0.0
      %959 = vmatpush.msra.mxu0 0.0
      %960 = vmatpush.msra.mxu0 0.0
      %961 = vmatpush.msra.mxu0 0.0
      %962 = vmatpush.msra.mxu0 0.0
      %963 = vmatpush.msra.mxu0 0.0
      %964 = vmatpush.msra.mxu0 0.0
      %965 = vmatpush.msra.mxu0 0.0
      %966 = vmatpush.msra.mxu0 0.0
      %967 = vmatpush.msra.mxu0 0.0
      %968 = vmatpush.msra.mxu0 0.0
      %969 = vmatpush.msra.mxu0 0.0
      %970 = vmatpush.msra.mxu0 0.0
      %971 = vmatpush.msra.mxu0 0.0
      %972 = vmatpush.msra.mxu0 %v953
      %973 = vmatmul.f32.gmra.mxu0 %v951
      %v974 = vpop.f32.mrf.mxu0
      %v975 = vadd.f32 0.0, %v974
      %976 = vdwg.mxu0
      %977 = vmatpush.msra.mxu0 0.0
      %978 = vmatpush.msra.mxu0 0.0
      %979 = vmatpush.msra.mxu0 0.0
      %980 = vmatpush.msra.mxu0 0.0
      %981 = vmatpush.msra.mxu0 0.0
      %982 = vmatpush.msra.mxu0 0.0
      %983 = vmatpush.msra.mxu0 0.0
      %984 = vmatpush.msra.mxu0 0.0
      %985 = vmatpush.msra.mxu0 0.0
      %986 = vmatpush.msra.mxu0 0.0
      %987 = vmatpush.msra.mxu0 0.0
      %988 = vmatpush.msra.mxu0 0.0
      %989 = vmatpush.msra.mxu0 0.0
      %990 = vmatpush.msra.mxu0 0.0
      %991 = vmatpush.msra.mxu0 0.0
      %992 = vmatpush.msra.mxu0 %v955
      %993 = vmatmul.f32.gmra.mxu0 %v951
      %v994 = vpop.f32.mrf.mxu0
      %v995 = vadd.f32 0.0, %v994
      %996 = vdwg.mxu0
      %v997 = vadd.f32 %v922, %v975
      %v998 = vadd.f32 %v923, %v995
      %999 = vrot.lane.b32.xlu0 %v591, 32
      %v1000 = vpop.permute.xlu0 %999
      %1001 = vrot.lane.b32.xlu0 %v592, 32
      %v1002 = vpop.permute.xlu0 %1001
      %vm1003 = vcmask 261120
      %v1004 = vsel %vm1003, %v1000, %v1002
      %v1008 = vmul.f32 %v588, %v1000
      %v1009 = vmul.f32 %v589, %v1004
      %v1010 = vmul.f32 %v598, %v1002
      %s1011 = scalar_lea.vmem %s1, 24
      %v1012 = vld [vmem:[%s1011] sm:$0xf]
      %1016 = vrot.lane.b32.xlu0 %v1008, 96
      %v1017 = vpop.permute.xlu0 %1016
      %1018 = vrot.lane.b32.xlu0 %v1009, 96
      %v1019 = vpop.permute.xlu0 %1018
      %1020 = vrot.lane.b32.xlu0 %v1010, 96
      %v1021 = vpop.permute.xlu0 %1020
      %vm1022 = vcmask 785408
      %v1023 = vsel %vm1022, %v1017, %v1019
      %v1024 = vsel %vm1022, %v1019, %v1021
      %v1026 = vsel %vm613, %v1012, 0
      %v1028 = vsel %vm617, %v1023, 0
      %v1030 = vsel %vm617, %v1024, 0
      %1032 = vmatpush.msra.mxu0 0.0
      %1033 = vmatpush.msra.mxu0 0.0
      %1034 = vmatpush.msra.mxu0 0.0
      %1035 = vmatpush.msra.mxu0 0.0
      %1036 = vmatpush.msra.mxu0 0.0
      %1037 = vmatpush.msra.mxu0 0.0
      %1038 = vmatpush.msra.mxu0 0.0
      %1039 = vmatpush.msra.mxu0 0.0
      %1040 = vmatpush.msra.mxu0 0.0
      %1041 = vmatpush.msra.mxu0 0.0
      %1042 = vmatpush.msra.mxu0 0.0
      %1043 = vmatpush.msra.mxu0 0.0
      %1044 = vmatpush.msra.mxu0 0.0
      %1045 = vmatpush.msra.mxu0 0.0
      %1046 = vmatpush.msra.mxu0 0.0
      %1047 = vmatpush.msra.mxu0 %v1028
      %1048 = vmatmul.f32.gmra.mxu0 %v1026
      %v1049 = vpop.f32.mrf.mxu0
      %v1050 = vadd.f32 0.0, %v1049
      %1051 = vdwg.mxu0
      %1052 = vmatpush.msra.mxu0 0.0
      %1053 = vmatpush.msra.mxu0 0.0
      %1054 = vmatpush.msra.mxu0 0.0
      %1055 = vmatpush.msra.mxu0 0.0
      %1056 = vmatpush.msra.mxu0 0.0
      %1057 = vmatpush.msra.mxu0 0.0
      %1058 = vmatpush.msra.mxu0 0.0
      %1059 = vmatpush.msra.mxu0 0.0
      %1060 = vmatpush.msra.mxu0 0.0
      %1061 = vmatpush.msra.mxu0 0.0
      %1062 = vmatpush.msra.mxu0 0.0
      %1063 = vmatpush.msra.mxu0 0.0
      %1064 = vmatpush.msra.mxu0 0.0
      %1065 = vmatpush.msra.mxu0 0.0
      %1066 = vmatpush.msra.mxu0 0.0
      %1067 = vmatpush.msra.mxu0 %v1030
      %1068 = vmatmul.f32.gmra.mxu0 %v1026
      %v1069 = vpop.f32.mrf.mxu0
      %v1070 = vadd.f32 0.0, %v1069
      %1071 = vdwg.mxu0
      %v1072 = vadd.f32 %v997, %v1050
      %v1073 = vadd.f32 %v998, %v1070
      %s1074 = scalar_lea.vmem %s1, 28
      %v1075 = vld [vmem:[%s1074] sm:$0xf]
      %1076 = vrot.lane.b32.xlu0 %v588, 95
      %v1077 = vpop.permute.xlu0 %1076
      %1078 = vrot.lane.b32.xlu0 %v589, 95
      %v1079 = vpop.permute.xlu0 %1078
      %1080 = vrot.lane.b32.xlu0 %v598, 95
      %v1081 = vpop.permute.xlu0 %1080
      %vm1082 = vcmask 777216
      %v1083 = vsel %vm1082, %v1077, %v1079
      %v1084 = vsel %vm1082, %v1079, %v1081
      %v1086 = vsel %vm613, %v1075, 0
      %v1088 = vsel %vm617, %v1083, 0
      %v1090 = vsel %vm617, %v1084, 0
      %1092 = vmatpush.msra.mxu0 0.0
      %1093 = vmatpush.msra.mxu0 0.0
      %1094 = vmatpush.msra.mxu0 0.0
      %1095 = vmatpush.msra.mxu0 0.0
      %1096 = vmatpush.msra.mxu0 0.0
      %1097 = vmatpush.msra.mxu0 0.0
      %1098 = vmatpush.msra.mxu0 0.0
      %1099 = vmatpush.msra.mxu0 0.0
      %1100 = vmatpush.msra.mxu0 0.0
      %1101 = vmatpush.msra.mxu0 0.0
      %1102 = vmatpush.msra.mxu0 0.0
      %1103 = vmatpush.msra.mxu0 0.0
      %1104 = vmatpush.msra.mxu0 0.0
      %1105 = vmatpush.msra.mxu0 0.0
      %1106 = vmatpush.msra.mxu0 0.0
      %1107 = vmatpush.msra.mxu0 %v1088
      %1108 = vmatmul.f32.gmra.mxu0 %v1086
      %v1109 = vpop.f32.mrf.mxu0
      %v1110 = vadd.f32 0.0, %v1109
      %1111 = vdwg.mxu0
      %1112 = vmatpush.msra.mxu0 0.0
      %1113 = vmatpush.msra.mxu0 0.0
      %1114 = vmatpush.msra.mxu0 0.0
      %1115 = vmatpush.msra.mxu0 0.0
      %1116 = vmatpush.msra.mxu0 0.0
      %1117 = vmatpush.msra.mxu0 0.0
      %1118 = vmatpush.msra.mxu0 0.0
      %1119 = vmatpush.msra.mxu0 0.0
      %1120 = vmatpush.msra.mxu0 0.0
      %1121 = vmatpush.msra.mxu0 0.0
      %1122 = vmatpush.msra.mxu0 0.0
      %1123 = vmatpush.msra.mxu0 0.0
      %1124 = vmatpush.msra.mxu0 0.0
      %1125 = vmatpush.msra.mxu0 0.0
      %1126 = vmatpush.msra.mxu0 0.0
      %1127 = vmatpush.msra.mxu0 %v1090
      %1128 = vmatmul.f32.gmra.mxu0 %v1086
      %v1129 = vpop.f32.mrf.mxu0
      %v1130 = vadd.f32 0.0, %v1129
      %1131 = vdwg.mxu0
      %v1132 = vadd.f32 %v1072, %v1110
      %v1133 = vadd.f32 %v1073, %v1130
      %1134 = vrot.lane.b32.xlu0 %v712, 34
      %v1135 = vpop.permute.xlu0 %1134
      %1136 = vrot.lane.b32.xlu0 %v713, 34
      %v1137 = vpop.permute.xlu0 %1136
      %vm1138 = vcmask 277504
      %v1139 = vsel %vm1138, %v1135, %v1137
      %v1143 = vmul.f32 %v588, %v1135
      %v1144 = vmul.f32 %v589, %v1139
      %v1145 = vmul.f32 %v598, %v1137
      %s1146 = scalar_lea.vmem %s1, 32
      %v1147 = vld [vmem:[%s1146] sm:$0xf]
      %1151 = vrot.lane.b32.xlu0 %v1143, 94
      %v1152 = vpop.permute.xlu0 %1151
      %1153 = vrot.lane.b32.xlu0 %v1144, 94
      %v1154 = vpop.permute.xlu0 %1153
      %1155 = vrot.lane.b32.xlu0 %v1145, 94
      %v1156 = vpop.permute.xlu0 %1155
      %vm1157 = vcmask 769024
      %v1158 = vsel %vm1157, %v1152, %v1154
      %v1159 = vsel %vm1157, %v1154, %v1156
      %v1161 = vsel %vm613, %v1147, 0
      %v1163 = vsel %vm617, %v1158, 0
      %v1165 = vsel %vm617, %v1159, 0
      %1167 = vmatpush.msra.mxu0 0.0
      %1168 = vmatpush.msra.mxu0 0.0
      %1169 = vmatpush.msra.mxu0 0.0
      %1170 = vmatpush.msra.mxu0 0.0
      %1171 = vmatpush.msra.mxu0 0.0
      %1172 = vmatpush.msra.mxu0 0.0
      %1173 = vmatpush.msra.mxu0 0.0
      %1174 = vmatpush.msra.mxu0 0.0
      %1175 = vmatpush.msra.mxu0 0.0
      %1176 = vmatpush.msra.mxu0 0.0
      %1177 = vmatpush.msra.mxu0 0.0
      %1178 = vmatpush.msra.mxu0 0.0
      %1179 = vmatpush.msra.mxu0 0.0
      %1180 = vmatpush.msra.mxu0 0.0
      %1181 = vmatpush.msra.mxu0 0.0
      %1182 = vmatpush.msra.mxu0 %v1163
      %1183 = vmatmul.f32.gmra.mxu0 %v1161
      %v1184 = vpop.f32.mrf.mxu0
      %v1185 = vadd.f32 0.0, %v1184
      %1186 = vdwg.mxu0
      %1187 = vmatpush.msra.mxu0 0.0
      %1188 = vmatpush.msra.mxu0 0.0
      %1189 = vmatpush.msra.mxu0 0.0
      %1190 = vmatpush.msra.mxu0 0.0
      %1191 = vmatpush.msra.mxu0 0.0
      %1192 = vmatpush.msra.mxu0 0.0
      %1193 = vmatpush.msra.mxu0 0.0
      %1194 = vmatpush.msra.mxu0 0.0
      %1195 = vmatpush.msra.mxu0 0.0
      %1196 = vmatpush.msra.mxu0 0.0
      %1197 = vmatpush.msra.mxu0 0.0
      %1198 = vmatpush.msra.mxu0 0.0
      %1199 = vmatpush.msra.mxu0 0.0
      %1200 = vmatpush.msra.mxu0 0.0
      %1201 = vmatpush.msra.mxu0 0.0
      %1202 = vmatpush.msra.mxu0 %v1165
      %1203 = vmatmul.f32.gmra.mxu0 %v1161
      %v1204 = vpop.f32.mrf.mxu0
      %v1205 = vadd.f32 0.0, %v1204
      %1206 = vdwg.mxu0
      %v1207 = vadd.f32 %v1132, %v1185
      %v1208 = vadd.f32 %v1133, %v1205
      %v1209 = vmax.f32 %v1207, 0.0
      %v1210 = vmax.f32 %v1208, 0.0
      %1213 = vrot.lane.b32.xlu0 %v1209, 17
      %v1214 = vpop.permute.xlu0 %1213
      %1215 = vrot.lane.b32.xlu0 %v1210, 17
      %v1216 = vpop.permute.xlu0 %1215
      %v1217 = vsel %vm549, %v1214, %v1216
      %vm1221 = vcmask 1043592
      %1222 = vst.msk [vmem:[#allocation2] sm:$0xf] %vm1221, %v1214
      %1223 = vst [vmem:[#allocation2 + $0x8] sm:$0xf] %v1217
      %vm1224 = vcmask 134144
      %1225 = vst.msk [vmem:[#allocation2 + $0x10] sm:$0xf] %vm1224, %v1216
      %v1226 = vld [vmem:[%s12] ss:$2 sm:$0x3]
      %v1227 = vld [vmem:[%s586] ss:$2 sm:$0x3]
      %v1228 = vld [vmem:[#allocation2] sm:$0xf]
      %v1229 = vld [vmem:[#allocation2 + $0x8] sm:$0xf]
      %v1231 = vperm.slane %v1226, 0
      %v1232 = vperm.slane %v1226, 1
      %v1235 = vmul.f32 %v1228, %v1231
      %v1236 = vmul.f32 %v1229, %v1232
      %v1237 = vld [vmem:[%s2] sm:$0xf]
      %v1238 = vld [vmem:[#allocation2 + $0x10] sm:$0xf]
      %s1239 = scalar_lea.vmem %s2, 4
      %v1240 = vld [vmem:[%s1239] sm:$0xf]
      %1244 = vrot.lane.b32.xlu0 %v1228, 127
      %v1245 = vpop.permute.xlu0 %1244
      %1246 = vrot.lane.b32.xlu0 %v1229, 127
      %v1247 = vpop.permute.xlu0 %1246
      %1248 = vrot.lane.b32.xlu0 %v1238, 127
      %v1249 = vpop.permute.xlu0 %1248
      %v1250 = vsel %vm610, %v1245, %v1247
      %v1251 = vsel %vm610, %v1247, %v1249
      %vm1252 = vcmask 31744
      %v1254 = vsel %vm1252, %v1240, 0
      %vm1256 = vcmask 1043456
      %v1257 = vsel %vm1256, %v1250, 0
      %v1259 = vsel %vm1256, %v1251, 0
      %1261 = vmatpush.msra.mxu0 0.0
      %1262 = vmatpush.msra.mxu0 0.0
      %1263 = vmatpush.msra.mxu0 0.0
      %1264 = vmatpush.msra.mxu0 0.0
      %1265 = vmatpush.msra.mxu0 0.0
      %1266 = vmatpush.msra.mxu0 0.0
      %1267 = vmatpush.msra.mxu0 0.0
      %1268 = vmatpush.msra.mxu0 0.0
      %1269 = vmatpush.msra.mxu0 0.0
      %1270 = vmatpush.msra.mxu0 0.0
      %1271 = vmatpush.msra.mxu0 0.0
      %1272 = vmatpush.msra.mxu0 0.0
      %1273 = vmatpush.msra.mxu0 0.0
      %1274 = vmatpush.msra.mxu0 0.0
      %1275 = vmatpush.msra.mxu0 0.0
      %1276 = vmatpush.msra.mxu0 %v1257
      %1277 = vmatmul.f32.gmra.mxu0 %v1254
      %v1278 = vpop.f32.mrf.mxu0
      %v1279 = vadd.f32 0.0, %v1278
      %1280 = vdwg.mxu0
      %1281 = vmatpush.msra.mxu0 0.0
      %1282 = vmatpush.msra.mxu0 0.0
      %1283 = vmatpush.msra.mxu0 0.0
      %1284 = vmatpush.msra.mxu0 0.0
      %1285 = vmatpush.msra.mxu0 0.0
      %1286 = vmatpush.msra.mxu0 0.0
      %1287 = vmatpush.msra.mxu0 0.0
      %1288 = vmatpush.msra.mxu0 0.0
      %1289 = vmatpush.msra.mxu0 0.0
      %1290 = vmatpush.msra.mxu0 0.0
      %1291 = vmatpush.msra.mxu0 0.0
      %1292 = vmatpush.msra.mxu0 0.0
      %1293 = vmatpush.msra.mxu0 0.0
      %1294 = vmatpush.msra.mxu0 0.0
      %1295 = vmatpush.msra.mxu0 0.0
      %1296 = vmatpush.msra.mxu0 %v1259
      %1297 = vmatmul.f32.gmra.mxu0 %v1254
      %v1298 = vpop.f32.mrf.mxu0
      %v1299 = vadd.f32 0.0, %v1298
      %1300 = vdwg.mxu0
      %v1302 = vsel %vm1252, %v1237, 0
      %v1305 = vsel %vm1256, %v1235, 0
      %v1308 = vsel %vm1256, %v1236, 0
      %1310 = vmatpush.msra.mxu0 0.0
      %1311 = vmatpush.msra.mxu0 0.0
      %1312 = vmatpush.msra.mxu0 0.0
      %1313 = vmatpush.msra.mxu0 0.0
      %1314 = vmatpush.msra.mxu0 0.0
      %1315 = vmatpush.msra.mxu0 0.0
      %1316 = vmatpush.msra.mxu0 0.0
      %1317 = vmatpush.msra.mxu0 0.0
      %1318 = vmatpush.msra.mxu0 0.0
      %1319 = vmatpush.msra.mxu0 0.0
      %1320 = vmatpush.msra.mxu0 0.0
      %1321 = vmatpush.msra.mxu0 0.0
      %1322 = vmatpush.msra.mxu0 0.0
      %1323 = vmatpush.msra.mxu0 0.0
      %1324 = vmatpush.msra.mxu0 0.0
      %1325 = vmatpush.msra.mxu0 %v1305
      %1326 = vmatmul.f32.gmra.mxu0 %v1302
      %v1327 = vpop.f32.mrf.mxu0
      %v1328 = vadd.f32 %v1279, %v1327
      %1329 = vdwg.mxu0
      %1330 = vmatpush.msra.mxu0 0.0
      %1331 = vmatpush.msra.mxu0 0.0
      %1332 = vmatpush.msra.mxu0 0.0
      %1333 = vmatpush.msra.mxu0 0.0
      %1334 = vmatpush.msra.mxu0 0.0
      %1335 = vmatpush.msra.mxu0 0.0
      %1336 = vmatpush.msra.mxu0 0.0
      %1337 = vmatpush.msra.mxu0 0.0
      %1338 = vmatpush.msra.mxu0 0.0
      %1339 = vmatpush.msra.mxu0 0.0
      %1340 = vmatpush.msra.mxu0 0.0
      %1341 = vmatpush.msra.mxu0 0.0
      %1342 = vmatpush.msra.mxu0 0.0
      %1343 = vmatpush.msra.mxu0 0.0
      %1344 = vmatpush.msra.mxu0 0.0
      %1345 = vmatpush.msra.mxu0 %v1308
      %1346 = vmatmul.f32.gmra.mxu0 %v1302
      %v1347 = vpop.f32.mrf.mxu0
      %v1348 = vadd.f32 %v1299, %v1347
      %1349 = vdwg.mxu0
      %v1351 = vperm.slane %v1227, 0
      %v1352 = vperm.slane %v1227, 1
      %1353 = vrot.lane.b32.xlu0 %v1351, 2
      %v1354 = vpop.permute.xlu0 %1353
      %1355 = vrot.lane.b32.xlu0 %v1352, 2
      %v1356 = vpop.permute.xlu0 %1355
      %v1357 = vsel %vm718, %v1354, %v1356
      %v1361 = vmul.f32 %v1228, %v1354
      %v1362 = vmul.f32 %v1229, %v1357
      %v1363 = vmul.f32 %v1238, %v1356
      %s1364 = scalar_lea.vmem %s2, 8
      %v1365 = vld [vmem:[%s1364] sm:$0xf]
      %1369 = vrot.lane.b32.xlu0 %v1361, 126
      %v1370 = vpop.permute.xlu0 %1369
      %1371 = vrot.lane.b32.xlu0 %v1362, 126
      %v1372 = vpop.permute.xlu0 %1371
      %1373 = vrot.lane.b32.xlu0 %v1363, 126
      %v1374 = vpop.permute.xlu0 %1373
      %v1375 = vsel %vm737, %v1370, %v1372
      %v1376 = vsel %vm737, %v1372, %v1374
      %v1378 = vsel %vm1252, %v1365, 0
      %v1380 = vsel %vm1256, %v1375, 0
      %v1382 = vsel %vm1256, %v1376, 0
      %1384 = vmatpush.msra.mxu0 0.0
      %1385 = vmatpush.msra.mxu0 0.0
      %1386 = vmatpush.msra.mxu0 0.0
      %1387 = vmatpush.msra.mxu0 0.0
      %1388 = vmatpush.msra.mxu0 0.0
      %1389 = vmatpush.msra.mxu0 0.0
      %1390 = vmatpush.msra.mxu0 0.0
      %1391 = vmatpush.msra.mxu0 0.0
      %1392 = vmatpush.msra.mxu0 0.0
      %1393 = vmatpush.msra.mxu0 0.0
      %1394 = vmatpush.msra.mxu0 0.0
      %1395 = vmatpush.msra.mxu0 0.0
      %1396 = vmatpush.msra.mxu0 0.0
      %1397 = vmatpush.msra.mxu0 0.0
      %1398 = vmatpush.msra.mxu0 0.0
      %1399 = vmatpush.msra.mxu0 %v1380
      %1400 = vmatmul.f32.gmra.mxu0 %v1378
      %v1401 = vpop.f32.mrf.mxu0
      %v1402 = vadd.f32 0.0, %v1401
      %1403 = vdwg.mxu0
      %1404 = vmatpush.msra.mxu0 0.0
      %1405 = vmatpush.msra.mxu0 0.0
      %1406 = vmatpush.msra.mxu0 0.0
      %1407 = vmatpush.msra.mxu0 0.0
      %1408 = vmatpush.msra.mxu0 0.0
      %1409 = vmatpush.msra.mxu0 0.0
      %1410 = vmatpush.msra.mxu0 0.0
      %1411 = vmatpush.msra.mxu0 0.0
      %1412 = vmatpush.msra.mxu0 0.0
      %1413 = vmatpush.msra.mxu0 0.0
      %1414 = vmatpush.msra.mxu0 0.0
      %1415 = vmatpush.msra.mxu0 0.0
      %1416 = vmatpush.msra.mxu0 0.0
      %1417 = vmatpush.msra.mxu0 0.0
      %1418 = vmatpush.msra.mxu0 0.0
      %1419 = vmatpush.msra.mxu0 %v1382
      %1420 = vmatmul.f32.gmra.mxu0 %v1378
      %v1421 = vpop.f32.mrf.mxu0
      %v1422 = vadd.f32 0.0, %v1421
      %1423 = vdwg.mxu0
      %v1424 = vadd.f32 %v1328, %v1402
      %v1425 = vadd.f32 %v1348, %v1422
      %1426 = vrot.lane.b32.xlu0 %v1231, 16
      %v1427 = vpop.permute.xlu0 %1426
      %1428 = vrot.lane.b32.xlu0 %v1232, 16
      %v1429 = vpop.permute.xlu0 %1428
      %v1430 = vsel %vm793, %v1427, %v1429
      %v1434 = vmul.f32 %v1228, %v1427
      %v1435 = vmul.f32 %v1229, %v1430
      %v1436 = vmul.f32 %v1238, %v1429
      %s1437 = scalar_lea.vmem %s2, 12
      %v1438 = vld [vmem:[%s1437] sm:$0xf]
      %1442 = vrot.lane.b32.xlu0 %v1434, 112
      %v1443 = vpop.permute.xlu0 %1442
      %1444 = vrot.lane.b32.xlu0 %v1435, 112
      %v1445 = vpop.permute.xlu0 %1444
      %1446 = vrot.lane.b32.xlu0 %v1436, 112
      %v1447 = vpop.permute.xlu0 %1446
      %v1448 = vsel %vm812, %v1443, %v1445
      %v1449 = vsel %vm812, %v1445, %v1447
      %v1451 = vsel %vm1252, %v1438, 0
      %v1453 = vsel %vm1256, %v1448, 0
      %v1455 = vsel %vm1256, %v1449, 0
      %1457 = vmatpush.msra.mxu0 0.0
      %1458 = vmatpush.msra.mxu0 0.0
      %1459 = vmatpush.msra.mxu0 0.0
      %1460 = vmatpush.msra.mxu0 0.0
      %1461 = vmatpush.msra.mxu0 0.0
      %1462 = vmatpush.msra.mxu0 0.0
      %1463 = vmatpush.msra.mxu0 0.0
      %1464 = vmatpush.msra.mxu0 0.0
      %1465 = vmatpush.msra.mxu0 0.0
      %1466 = vmatpush.msra.mxu0 0.0
      %1467 = vmatpush.msra.mxu0 0.0
      %1468 = vmatpush.msra.mxu0 0.0
      %1469 = vmatpush.msra.mxu0 0.0
      %1470 = vmatpush.msra.mxu0 0.0
      %1471 = vmatpush.msra.mxu0 0.0
      %1472 = vmatpush.msra.mxu0 %v1453
      %1473 = vmatmul.f32.gmra.mxu0 %v1451
      %v1474 = vpop.f32.mrf.mxu0
      %v1475 = vadd.f32 0.0, %v1474
      %1476 = vdwg.mxu0
      %1477 = vmatpush.msra.mxu0 0.0
      %1478 = vmatpush.msra.mxu0 0.0
      %1479 = vmatpush.msra.mxu0 0.0
      %1480 = vmatpush.msra.mxu0 0.0
      %1481 = vmatpush.msra.mxu0 0.0
      %1482 = vmatpush.msra.mxu0 0.0
      %1483 = vmatpush.msra.mxu0 0.0
      %1484 = vmatpush.msra.mxu0 0.0
      %1485 = vmatpush.msra.mxu0 0.0
      %1486 = vmatpush.msra.mxu0 0.0
      %1487 = vmatpush.msra.mxu0 0.0
      %1488 = vmatpush.msra.mxu0 0.0
      %1489 = vmatpush.msra.mxu0 0.0
      %1490 = vmatpush.msra.mxu0 0.0
      %1491 = vmatpush.msra.mxu0 0.0
      %1492 = vmatpush.msra.mxu0 %v1455
      %1493 = vmatmul.f32.gmra.mxu0 %v1451
      %v1494 = vpop.f32.mrf.mxu0
      %v1495 = vadd.f32 0.0, %v1494
      %1496 = vdwg.mxu0
      %v1497 = vadd.f32 %v1424, %v1475
      %v1498 = vadd.f32 %v1425, %v1495
      %s1499 = scalar_lea.vmem %s2, 16
      %v1500 = vld [vmem:[%s1499] sm:$0xf]
      %1501 = vrot.lane.b32.xlu0 %v1228, 111
      %v1502 = vpop.permute.xlu0 %1501
      %1503 = vrot.lane.b32.xlu0 %v1229, 111
      %v1504 = vpop.permute.xlu0 %1503
      %1505 = vrot.lane.b32.xlu0 %v1238, 111
      %v1506 = vpop.permute.xlu0 %1505
      %v1507 = vsel %vm872, %v1502, %v1504
      %v1508 = vsel %vm872, %v1504, %v1506
      %v1510 = vsel %vm1252, %v1500, 0
      %v1512 = vsel %vm1256, %v1507, 0
      %v1514 = vsel %vm1256, %v1508, 0
      %1516 = vmatpush.msra.mxu0 0.0
      %1517 = vmatpush.msra.mxu0 0.0
      %1518 = vmatpush.msra.mxu0 0.0
      %1519 = vmatpush.msra.mxu0 0.0
      %1520 = vmatpush.msra.mxu0 0.0
      %1521 = vmatpush.msra.mxu0 0.0
      %1522 = vmatpush.msra.mxu0 0.0
      %1523 = vmatpush.msra.mxu0 0.0
      %1524 = vmatpush.msra.mxu0 0.0
      %1525 = vmatpush.msra.mxu0 0.0
      %1526 = vmatpush.msra.mxu0 0.0
      %1527 = vmatpush.msra.mxu0 0.0
      %1528 = vmatpush.msra.mxu0 0.0
      %1529 = vmatpush.msra.mxu0 0.0
      %1530 = vmatpush.msra.mxu0 0.0
      %1531 = vmatpush.msra.mxu0 %v1512
      %1532 = vmatmul.f32.gmra.mxu0 %v1510
      %v1533 = vpop.f32.mrf.mxu0
      %v1534 = vadd.f32 0.0, %v1533
      %1535 = vdwg.mxu0
      %1536 = vmatpush.msra.mxu0 0.0
      %1537 = vmatpush.msra.mxu0 0.0
      %1538 = vmatpush.msra.mxu0 0.0
      %1539 = vmatpush.msra.mxu0 0.0
      %1540 = vmatpush.msra.mxu0 0.0
      %1541 = vmatpush.msra.mxu0 0.0
      %1542 = vmatpush.msra.mxu0 0.0
      %1543 = vmatpush.msra.mxu0 0.0
      %1544 = vmatpush.msra.mxu0 0.0
      %1545 = vmatpush.msra.mxu0 0.0
      %1546 = vmatpush.msra.mxu0 0.0
      %1547 = vmatpush.msra.mxu0 0.0
      %1548 = vmatpush.msra.mxu0 0.0
      %1549 = vmatpush.msra.mxu0 0.0
      %1550 = vmatpush.msra.mxu0 0.0
      %1551 = vmatpush.msra.mxu0 %v1514
      %1552 = vmatmul.f32.gmra.mxu0 %v1510
      %v1553 = vpop.f32.mrf.mxu0
      %v1554 = vadd.f32 0.0, %v1553
      %1555 = vdwg.mxu0
      %v1556 = vadd.f32 %v1497, %v1534
      %v1557 = vadd.f32 %v1498, %v1554
      %1558 = vrot.lane.b32.xlu0 %v1351, 18
      %v1559 = vpop.permute.xlu0 %1558
      %1560 = vrot.lane.b32.xlu0 %v1352, 18
      %v1561 = vpop.permute.xlu0 %1560
      %v1562 = vsel %vm928, %v1559, %v1561
      %v1566 = vmul.f32 %v1228, %v1559
      %v1567 = vmul.f32 %v1229, %v1562
      %v1568 = vmul.f32 %v1238, %v1561
      %s1569 = scalar_lea.vmem %s2, 20
      %v1570 = vld [vmem:[%s1569] sm:$0xf]
      %1574 = vrot.lane.b32.xlu0 %v1566, 110
      %v1575 = vpop.permute.xlu0 %1574
      %1576 = vrot.lane.b32.xlu0 %v1567, 110
      %v1577 = vpop.permute.xlu0 %1576
      %1578 = vrot.lane.b32.xlu0 %v1568, 110
      %v1579 = vpop.permute.xlu0 %1578
      %v1580 = vsel %vm947, %v1575, %v1577
      %v1581 = vsel %vm947, %v1577, %v1579
      %v1583 = vsel %vm1252, %v1570, 0
      %v1585 = vsel %vm1256, %v1580, 0
      %v1587 = vsel %vm1256, %v1581, 0
      %1589 = vmatpush.msra.mxu0 0.0
      %1590 = vmatpush.msra.mxu0 0.0
      %1591 = vmatpush.msra.mxu0 0.0
      %1592 = vmatpush.msra.mxu0 0.0
      %1593 = vmatpush.msra.mxu0 0.0
      %1594 = vmatpush.msra.mxu0 0.0
      %1595 = vmatpush.msra.mxu0 0.0
      %1596 = vmatpush.msra.mxu0 0.0
      %1597 = vmatpush.msra.mxu0 0.0
      %1598 = vmatpush.msra.mxu0 0.0
      %1599 = vmatpush.msra.mxu0 0.0
      %1600 = vmatpush.msra.mxu0 0.0
      %1601 = vmatpush.msra.mxu0 0.0
      %1602 = vmatpush.msra.mxu0 0.0
      %1603 = vmatpush.msra.mxu0 0.0
      %1604 = vmatpush.msra.mxu0 %v1585
      %1605 = vmatmul.f32.gmra.mxu0 %v1583
      %v1606 = vpop.f32.mrf.mxu0
      %v1607 = vadd.f32 0.0, %v1606
      %1608 = vdwg.mxu0
      %1609 = vmatpush.msra.mxu0 0.0
      %1610 = vmatpush.msra.mxu0 0.0
      %1611 = vmatpush.msra.mxu0 0.0
      %1612 = vmatpush.msra.mxu0 0.0
      %1613 = vmatpush.msra.mxu0 0.0
      %1614 = vmatpush.msra.mxu0 0.0
      %1615 = vmatpush.msra.mxu0 0.0
      %1616 = vmatpush.msra.mxu0 0.0
      %1617 = vmatpush.msra.mxu0 0.0
      %1618 = vmatpush.msra.mxu0 0.0
      %1619 = vmatpush.msra.mxu0 0.0
      %1620 = vmatpush.msra.mxu0 0.0
      %1621 = vmatpush.msra.mxu0 0.0
      %1622 = vmatpush.msra.mxu0 0.0
      %1623 = vmatpush.msra.mxu0 0.0
      %1624 = vmatpush.msra.mxu0 %v1587
      %1625 = vmatmul.f32.gmra.mxu0 %v1583
      %v1626 = vpop.f32.mrf.mxu0
      %v1627 = vadd.f32 0.0, %v1626
      %1628 = vdwg.mxu0
      %v1629 = vadd.f32 %v1556, %v1607
      %v1630 = vadd.f32 %v1557, %v1627
      %1631 = vrot.lane.b32.xlu0 %v1231, 32
      %v1632 = vpop.permute.xlu0 %1631
      %1633 = vrot.lane.b32.xlu0 %v1232, 32
      %v1634 = vpop.permute.xlu0 %1633
      %v1635 = vsel %vm1003, %v1632, %v1634
      %v1639 = vmul.f32 %v1228, %v1632
      %v1640 = vmul.f32 %v1229, %v1635
      %v1641 = vmul.f32 %v1238, %v1634
      %s1642 = scalar_lea.vmem %s2, 24
      %v1643 = vld [vmem:[%s1642] sm:$0xf]
      %1647 = vrot.lane.b32.xlu0 %v1639, 96
      %v1648 = vpop.permute.xlu0 %1647
      %1649 = vrot.lane.b32.xlu0 %v1640, 96
      %v1650 = vpop.permute.xlu0 %1649
      %1651 = vrot.lane.b32.xlu0 %v1641, 96
      %v1652 = vpop.permute.xlu0 %1651
      %v1653 = vsel %vm1022, %v1648, %v1650
      %v1654 = vsel %vm1022, %v1650, %v1652
      %v1656 = vsel %vm1252, %v1643, 0
      %v1658 = vsel %vm1256, %v1653, 0
      %v1660 = vsel %vm1256, %v1654, 0
      %1662 = vmatpush.msra.mxu0 0.0
      %1663 = vmatpush.msra.mxu0 0.0
      %1664 = vmatpush.msra.mxu0 0.0
      %1665 = vmatpush.msra.mxu0 0.0
      %1666 = vmatpush.msra.mxu0 0.0
      %1667 = vmatpush.msra.mxu0 0.0
      %1668 = vmatpush.msra.mxu0 0.0
      %1669 = vmatpush.msra.mxu0 0.0
      %1670 = vmatpush.msra.mxu0 0.0
      %1671 = vmatpush.msra.mxu0 0.0
      %1672 = vmatpush.msra.mxu0 0.0
      %1673 = vmatpush.msra.mxu0 0.0
      %1674 = vmatpush.msra.mxu0 0.0
      %1675 = vmatpush.msra.mxu0 0.0
      %1676 = vmatpush.msra.mxu0 0.0
      %1677 = vmatpush.msra.mxu0 %v1658
      %1678 = vmatmul.f32.gmra.mxu0 %v1656
      %v1679 = vpop.f32.mrf.mxu0
      %v1680 = vadd.f32 0.0, %v1679
      %1681 = vdwg.mxu0
      %1682 = vmatpush.msra.mxu0 0.0
      %1683 = vmatpush.msra.mxu0 0.0
      %1684 = vmatpush.msra.mxu0 0.0
      %1685 = vmatpush.msra.mxu0 0.0
      %1686 = vmatpush.msra.mxu0 0.0
      %1687 = vmatpush.msra.mxu0 0.0
      %1688 = vmatpush.msra.mxu0 0.0
      %1689 = vmatpush.msra.mxu0 0.0
      %1690 = vmatpush.msra.mxu0 0.0
      %1691 = vmatpush.msra.mxu0 0.0
      %1692 = vmatpush.msra.mxu0 0.0
      %1693 = vmatpush.msra.mxu0 0.0
      %1694 = vmatpush.msra.mxu0 0.0
      %1695 = vmatpush.msra.mxu0 0.0
      %1696 = vmatpush.msra.mxu0 0.0
      %1697 = vmatpush.msra.mxu0 %v1660
      %1698 = vmatmul.f32.gmra.mxu0 %v1656
      %v1699 = vpop.f32.mrf.mxu0
      %v1700 = vadd.f32 0.0, %v1699
      %1701 = vdwg.mxu0
      %v1702 = vadd.f32 %v1629, %v1680
      %v1703 = vadd.f32 %v1630, %v1700
      %s1704 = scalar_lea.vmem %s2, 28
      %v1705 = vld [vmem:[%s1704] sm:$0xf]
      %1706 = vrot.lane.b32.xlu0 %v1228, 95
      %v1707 = vpop.permute.xlu0 %1706
      %1708 = vrot.lane.b32.xlu0 %v1229, 95
      %v1709 = vpop.permute.xlu0 %1708
      %1710 = vrot.lane.b32.xlu0 %v1238, 95
      %v1711 = vpop.permute.xlu0 %1710
      %v1712 = vsel %vm1082, %v1707, %v1709
      %v1713 = vsel %vm1082, %v1709, %v1711
      %v1715 = vsel %vm1252, %v1705, 0
      %v1717 = vsel %vm1256, %v1712, 0
      %v1719 = vsel %vm1256, %v1713, 0
      %1721 = vmatpush.msra.mxu0 0.0
      %1722 = vmatpush.msra.mxu0 0.0
      %1723 = vmatpush.msra.mxu0 0.0
      %1724 = vmatpush.msra.mxu0 0.0
      %1725 = vmatpush.msra.mxu0 0.0
      %1726 = vmatpush.msra.mxu0 0.0
      %1727 = vmatpush.msra.mxu0 0.0
      %1728 = vmatpush.msra.mxu0 0.0
      %1729 = vmatpush.msra.mxu0 0.0
      %1730 = vmatpush.msra.mxu0 0.0
      %1731 = vmatpush.msra.mxu0 0.0
      %1732 = vmatpush.msra.mxu0 0.0
      %1733 = vmatpush.msra.mxu0 0.0
      %1734 = vmatpush.msra.mxu0 0.0
      %1735 = vmatpush.msra.mxu0 0.0
      %1736 = vmatpush.msra.mxu0 %v1717
      %1737 = vmatmul.f32.gmra.mxu0 %v1715
      %v1738 = vpop.f32.mrf.mxu0
      %v1739 = vadd.f32 0.0, %v1738
      %1740 = vdwg.mxu0
      %1741 = vmatpush.msra.mxu0 0.0
      %1742 = vmatpush.msra.mxu0 0.0
      %1743 = vmatpush.msra.mxu0 0.0
      %1744 = vmatpush.msra.mxu0 0.0
      %1745 = vmatpush.msra.mxu0 0.0
      %1746 = vmatpush.msra.mxu0 0.0
      %1747 = vmatpush.msra.mxu0 0.0
      %1748 = vmatpush.msra.mxu0 0.0
      %1749 = vmatpush.msra.mxu0 0.0
      %1750 = vmatpush.msra.mxu0 0.0
      %1751 = vmatpush.msra.mxu0 0.0
      %1752 = vmatpush.msra.mxu0 0.0
      %1753 = vmatpush.msra.mxu0 0.0
      %1754 = vmatpush.msra.mxu0 0.0
      %1755 = vmatpush.msra.mxu0 0.0
      %1756 = vmatpush.msra.mxu0 %v1719
      %1757 = vmatmul.f32.gmra.mxu0 %v1715
      %v1758 = vpop.f32.mrf.mxu0
      %v1759 = vadd.f32 0.0, %v1758
      %1760 = vdwg.mxu0
      %v1761 = vadd.f32 %v1702, %v1739
      %v1762 = vadd.f32 %v1703, %v1759
      %1763 = vrot.lane.b32.xlu0 %v1351, 34
      %v1764 = vpop.permute.xlu0 %1763
      %1765 = vrot.lane.b32.xlu0 %v1352, 34
      %v1766 = vpop.permute.xlu0 %1765
      %v1767 = vsel %vm1138, %v1764, %v1766
      %v1771 = vmul.f32 %v1228, %v1764
      %v1772 = vmul.f32 %v1229, %v1767
      %v1773 = vmul.f32 %v1238, %v1766
      %s1774 = scalar_lea.vmem %s2, 32
      %v1775 = vld [vmem:[%s1774] sm:$0xf]
      %1779 = vrot.lane.b32.xlu0 %v1771, 94
      %v1780 = vpop.permute.xlu0 %1779
      %1781 = vrot.lane.b32.xlu0 %v1772, 94
      %v1782 = vpop.permute.xlu0 %1781
      %1783 = vrot.lane.b32.xlu0 %v1773, 94
      %v1784 = vpop.permute.xlu0 %1783
      %v1785 = vsel %vm1157, %v1780, %v1782
      %v1786 = vsel %vm1157, %v1782, %v1784
      %v1788 = vsel %vm1252, %v1775, 0
      %v1790 = vsel %vm1256, %v1785, 0
      %v1792 = vsel %vm1256, %v1786, 0
      %1794 = vmatpush.msra.mxu0 0.0
      %1795 = vmatpush.msra.mxu0 0.0
      %1796 = vmatpush.msra.mxu0 0.0
      %1797 = vmatpush.msra.mxu0 0.0
      %1798 = vmatpush.msra.mxu0 0.0
      %1799 = vmatpush.msra.mxu0 0.0
      %1800 = vmatpush.msra.mxu0 0.0
      %1801 = vmatpush.msra.mxu0 0.0
      %1802 = vmatpush.msra.mxu0 0.0
      %1803 = vmatpush.msra.mxu0 0.0
      %1804 = vmatpush.msra.mxu0 0.0
      %1805 = vmatpush.msra.mxu0 0.0
      %1806 = vmatpush.msra.mxu0 0.0
      %1807 = vmatpush.msra.mxu0 0.0
      %1808 = vmatpush.msra.mxu0 0.0
      %1809 = vmatpush.msra.mxu0 %v1790
      %1810 = vmatmul.f32.gmra.mxu0 %v1788
      %v1811 = vpop.f32.mrf.mxu0
      %v1812 = vadd.f32 0.0, %v1811
      %1813 = vdwg.mxu0
      %1814 = vmatpush.msra.mxu0 0.0
      %1815 = vmatpush.msra.mxu0 0.0
      %1816 = vmatpush.msra.mxu0 0.0
      %1817 = vmatpush.msra.mxu0 0.0
      %1818 = vmatpush.msra.mxu0 0.0
      %1819 = vmatpush.msra.mxu0 0.0
      %1820 = vmatpush.msra.mxu0 0.0
      %1821 = vmatpush.msra.mxu0 0.0
      %1822 = vmatpush.msra.mxu0 0.0
      %1823 = vmatpush.msra.mxu0 0.0
      %1824 = vmatpush.msra.mxu0 0.0
      %1825 = vmatpush.msra.mxu0 0.0
      %1826 = vmatpush.msra.mxu0 0.0
      %1827 = vmatpush.msra.mxu0 0.0
      %1828 = vmatpush.msra.mxu0 0.0
      %1829 = vmatpush.msra.mxu0 %v1792
      %1830 = vmatmul.f32.gmra.mxu0 %v1788
      %v1831 = vpop.f32.mrf.mxu0
      %v1832 = vadd.f32 0.0, %v1831
      %1833 = vdwg.mxu0
      %v1834 = vadd.f32 %v1761, %v1812
      %v1835 = vadd.f32 %v1762, %v1832
      %v1836 = vmax.f32 %v1834, 0.0
      %v1837 = vmax.f32 %v1835, 0.0
      %1840 = vrot.lane.b32.xlu0 %v1836, 17
      %v1841 = vpop.permute.xlu0 %1840
      %1842 = vrot.lane.b32.xlu0 %v1837, 17
      %v1843 = vpop.permute.xlu0 %1842
      %v1844 = vsel %vm549, %v1841, %v1843
      %1848 = vst.msk [vmem:[#allocation2] sm:$0xf] %vm1221, %v1841
      %1849 = vst [vmem:[#allocation2 + $0x8] sm:$0xf] %v1844
      %1850 = vst.msk [vmem:[#allocation2 + $0x10] sm:$0xf] %vm1224, %v1843
      %v1851 = vld [vmem:[%s12] ss:$2 sm:$0x3]
      %v1852 = vld [vmem:[%s586] ss:$2 sm:$0x3]
      %v1853 = vld [vmem:[#allocation2] sm:$0xf]
      %v1854 = vld [vmem:[#allocation2 + $0x8] sm:$0xf]
      %v1856 = vperm.slane %v1851, 0
      %v1857 = vperm.slane %v1851, 1
      %v1860 = vmul.f32 %v1853, %v1856
      %v1861 = vmul.f32 %v1854, %v1857
      %v1862 = vld [vmem:[%s3] sm:$0xf]
      %v1863 = vld [vmem:[#allocation2 + $0x10] sm:$0xf]
      %s1864 = scalar_lea.vmem %s3, 4
      %v1865 = vld [vmem:[%s1864] sm:$0xf]
      %1869 = vrot.lane.b32.xlu0 %v1853, 127
      %v1870 = vpop.permute.xlu0 %1869
      %1871 = vrot.lane.b32.xlu0 %v1854, 127
      %v1872 = vpop.permute.xlu0 %1871
      %1873 = vrot.lane.b32.xlu0 %v1863, 127
      %v1874 = vpop.permute.xlu0 %1873
      %v1875 = vsel %vm610, %v1870, %v1872
      %v1876 = vsel %vm610, %v1872, %v1874
      %v1878 = vsel %vm1252, %v1865, 0
      %v1880 = vsel %vm1256, %v1875, 0
      %v1882 = vsel %vm1256, %v1876, 0
      %1884 = vmatpush.msra.mxu0 0.0
      %1885 = vmatpush.msra.mxu0 0.0
      %1886 = vmatpush.msra.mxu0 0.0
      %1887 = vmatpush.msra.mxu0 0.0
      %1888 = vmatpush.msra.mxu0 0.0
      %1889 = vmatpush.msra.mxu0 0.0
      %1890 = vmatpush.msra.mxu0 0.0
      %1891 = vmatpush.msra.mxu0 0.0
      %1892 = vmatpush.msra.mxu0 0.0
      %1893 = vmatpush.msra.mxu0 0.0
      %1894 = vmatpush.msra.mxu0 0.0
      %1895 = vmatpush.msra.mxu0 0.0
      %1896 = vmatpush.msra.mxu0 0.0
      %1897 = vmatpush.msra.mxu0 0.0
      %1898 = vmatpush.msra.mxu0 0.0
      %1899 = vmatpush.msra.mxu0 %v1880
      %1900 = vmatmul.f32.gmra.mxu0 %v1878
      %v1901 = vpop.f32.mrf.mxu0
      %v1902 = vadd.f32 0.0, %v1901
      %1903 = vdwg.mxu0
      %1904 = vmatpush.msra.mxu0 0.0
      %1905 = vmatpush.msra.mxu0 0.0
      %1906 = vmatpush.msra.mxu0 0.0
      %1907 = vmatpush.msra.mxu0 0.0
      %1908 = vmatpush.msra.mxu0 0.0
      %1909 = vmatpush.msra.mxu0 0.0
      %1910 = vmatpush.msra.mxu0 0.0
      %1911 = vmatpush.msra.mxu0 0.0
      %1912 = vmatpush.msra.mxu0 0.0
      %1913 = vmatpush.msra.mxu0 0.0
      %1914 = vmatpush.msra.mxu0 0.0
      %1915 = vmatpush.msra.mxu0 0.0
      %1916 = vmatpush.msra.mxu0 0.0
      %1917 = vmatpush.msra.mxu0 0.0
      %1918 = vmatpush.msra.mxu0 0.0
      %1919 = vmatpush.msra.mxu0 %v1882
      %1920 = vmatmul.f32.gmra.mxu0 %v1878
      %v1921 = vpop.f32.mrf.mxu0
      %v1922 = vadd.f32 0.0, %v1921
      %1923 = vdwg.mxu0
      %v1925 = vsel %vm1252, %v1862, 0
      %v1928 = vsel %vm1256, %v1860, 0
      %v1931 = vsel %vm1256, %v1861, 0
      %1933 = vmatpush.msra.mxu0 0.0
      %1934 = vmatpush.msra.mxu0 0.0
      %1935 = vmatpush.msra.mxu0 0.0
      %1936 = vmatpush.msra.mxu0 0.0
      %1937 = vmatpush.msra.mxu0 0.0
      %1938 = vmatpush.msra.mxu0 0.0
      %1939 = vmatpush.msra.mxu0 0.0
      %1940 = vmatpush.msra.mxu0 0.0
      %1941 = vmatpush.msra.mxu0 0.0
      %1942 = vmatpush.msra.mxu0 0.0
      %1943 = vmatpush.msra.mxu0 0.0
      %1944 = vmatpush.msra.mxu0 0.0
      %1945 = vmatpush.msra.mxu0 0.0
      %1946 = vmatpush.msra.mxu0 0.0
      %1947 = vmatpush.msra.mxu0 0.0
      %1948 = vmatpush.msra.mxu0 %v1928
      %1949 = vmatmul.f32.gmra.mxu0 %v1925
      %v1950 = vpop.f32.mrf.mxu0
      %v1951 = vadd.f32 %v1902, %v1950
      %1952 = vdwg.mxu0
      %1953 = vmatpush.msra.mxu0 0.0
      %1954 = vmatpush.msra.mxu0 0.0
      %1955 = vmatpush.msra.mxu0 0.0
      %1956 = vmatpush.msra.mxu0 0.0
      %1957 = vmatpush.msra.mxu0 0.0
      %1958 = vmatpush.msra.mxu0 0.0
      %1959 = vmatpush.msra.mxu0 0.0
      %1960 = vmatpush.msra.mxu0 0.0
      %1961 = vmatpush.msra.mxu0 0.0
      %1962 = vmatpush.msra.mxu0 0.0
      %1963 = vmatpush.msra.mxu0 0.0
      %1964 = vmatpush.msra.mxu0 0.0
      %1965 = vmatpush.msra.mxu0 0.0
      %1966 = vmatpush.msra.mxu0 0.0
      %1967 = vmatpush.msra.mxu0 0.0
      %1968 = vmatpush.msra.mxu0 %v1931
      %1969 = vmatmul.f32.gmra.mxu0 %v1925
      %v1970 = vpop.f32.mrf.mxu0
      %v1971 = vadd.f32 %v1922, %v1970
      %1972 = vdwg.mxu0
      %v1974 = vperm.slane %v1852, 0
      %v1975 = vperm.slane %v1852, 1
      %1976 = vrot.lane.b32.xlu0 %v1974, 2
      %v1977 = vpop.permute.xlu0 %1976
      %1978 = vrot.lane.b32.xlu0 %v1975, 2
      %v1979 = vpop.permute.xlu0 %1978
      %v1980 = vsel %vm718, %v1977, %v1979
      %v1984 = vmul.f32 %v1853, %v1977
      %v1985 = vmul.f32 %v1854, %v1980
      %v1986 = vmul.f32 %v1863, %v1979
      %s1987 = scalar_lea.vmem %s3, 8
      %v1988 = vld [vmem:[%s1987] sm:$0xf]
      %1992 = vrot.lane.b32.xlu0 %v1984, 126
      %v1993 = vpop.permute.xlu0 %1992
      %1994 = vrot.lane.b32.xlu0 %v1985, 126
      %v1995 = vpop.permute.xlu0 %1994
      %1996 = vrot.lane.b32.xlu0 %v1986, 126
      %v1997 = vpop.permute.xlu0 %1996
      %v1998 = vsel %vm737, %v1993, %v1995
      %v1999 = vsel %vm737, %v1995, %v1997
      %v2001 = vsel %vm1252, %v1988, 0
      %v2003 = vsel %vm1256, %v1998, 0
      %v2005 = vsel %vm1256, %v1999, 0
      %2007 = vmatpush.msra.mxu0 0.0
      %2008 = vmatpush.msra.mxu0 0.0
      %2009 = vmatpush.msra.mxu0 0.0
      %2010 = vmatpush.msra.mxu0 0.0
      %2011 = vmatpush.msra.mxu0 0.0
      %2012 = vmatpush.msra.mxu0 0.0
      %2013 = vmatpush.msra.mxu0 0.0
      %2014 = vmatpush.msra.mxu0 0.0
      %2015 = vmatpush.msra.mxu0 0.0
      %2016 = vmatpush.msra.mxu0 0.0
      %2017 = vmatpush.msra.mxu0 0.0
      %2018 = vmatpush.msra.mxu0 0.0
      %2019 = vmatpush.msra.mxu0 0.0
      %2020 = vmatpush.msra.mxu0 0.0
      %2021 = vmatpush.msra.mxu0 0.0
      %2022 = vmatpush.msra.mxu0 %v2003
      %2023 = vmatmul.f32.gmra.mxu0 %v2001
      %v2024 = vpop.f32.mrf.mxu0
      %v2025 = vadd.f32 0.0, %v2024
      %2026 = vdwg.mxu0
      %2027 = vmatpush.msra.mxu0 0.0
      %2028 = vmatpush.msra.mxu0 0.0
      %2029 = vmatpush.msra.mxu0 0.0
      %2030 = vmatpush.msra.mxu0 0.0
      %2031 = vmatpush.msra.mxu0 0.0
      %2032 = vmatpush.msra.mxu0 0.0
      %2033 = vmatpush.msra.mxu0 0.0
      %2034 = vmatpush.msra.mxu0 0.0
      %2035 = vmatpush.msra.mxu0 0.0
      %2036 = vmatpush.msra.mxu0 0.0
      %2037 = vmatpush.msra.mxu0 0.0
      %2038 = vmatpush.msra.mxu0 0.0
      %2039 = vmatpush.msra.mxu0 0.0
      %2040 = vmatpush.msra.mxu0 0.0
      %2041 = vmatpush.msra.mxu0 0.0
      %2042 = vmatpush.msra.mxu0 %v2005
      %2043 = vmatmul.f32.gmra.mxu0 %v2001
      %v2044 = vpop.f32.mrf.mxu0
      %v2045 = vadd.f32 0.0, %v2044
      %2046 = vdwg.mxu0
      %v2047 = vadd.f32 %v1951, %v2025
      %v2048 = vadd.f32 %v1971, %v2045
      %2049 = vrot.lane.b32.xlu0 %v1856, 16
      %v2050 = vpop.permute.xlu0 %2049
      %2051 = vrot.lane.b32.xlu0 %v1857, 16
      %v2052 = vpop.permute.xlu0 %2051
      %v2053 = vsel %vm793, %v2050, %v2052
      %v2057 = vmul.f32 %v1853, %v2050
      %v2058 = vmul.f32 %v1854, %v2053
      %v2059 = vmul.f32 %v1863, %v2052
      %s2060 = scalar_lea.vmem %s3, 12
      %v2061 = vld [vmem:[%s2060] sm:$0xf]
      %2065 = vrot.lane.b32.xlu0 %v2057, 112
      %v2066 = vpop.permute.xlu0 %2065
      %2067 = vrot.lane.b32.xlu0 %v2058, 112
      %v2068 = vpop.permute.xlu0 %2067
      %2069 = vrot.lane.b32.xlu0 %v2059, 112
      %v2070 = vpop.permute.xlu0 %2069
      %v2071 = vsel %vm812, %v2066, %v2068
      %v2072 = vsel %vm812, %v2068, %v2070
      %v2074 = vsel %vm1252, %v2061, 0
      %v2076 = vsel %vm1256, %v2071, 0
      %v2078 = vsel %vm1256, %v2072, 0
      %2080 = vmatpush.msra.mxu0 0.0
      %2081 = vmatpush.msra.mxu0 0.0
      %2082 = vmatpush.msra.mxu0 0.0
      %2083 = vmatpush.msra.mxu0 0.0
      %2084 = vmatpush.msra.mxu0 0.0
      %2085 = vmatpush.msra.mxu0 0.0
      %2086 = vmatpush.msra.mxu0 0.0
      %2087 = vmatpush.msra.mxu0 0.0
      %2088 = vmatpush.msra.mxu0 0.0
      %2089 = vmatpush.msra.mxu0 0.0
      %2090 = vmatpush.msra.mxu0 0.0
      %2091 = vmatpush.msra.mxu0 0.0
      %2092 = vmatpush.msra.mxu0 0.0
      %2093 = vmatpush.msra.mxu0 0.0
      %2094 = vmatpush.msra.mxu0 0.0
      %2095 = vmatpush.msra.mxu0 %v2076
      %2096 = vmatmul.f32.gmra.mxu0 %v2074
      %v2097 = vpop.f32.mrf.mxu0
      %v2098 = vadd.f32 0.0, %v2097
      %2099 = vdwg.mxu0
      %2100 = vmatpush.msra.mxu0 0.0
      %2101 = vmatpush.msra.mxu0 0.0
      %2102 = vmatpush.msra.mxu0 0.0
      %2103 = vmatpush.msra.mxu0 0.0
      %2104 = vmatpush.msra.mxu0 0.0
      %2105 = vmatpush.msra.mxu0 0.0
      %2106 = vmatpush.msra.mxu0 0.0
      %2107 = vmatpush.msra.mxu0 0.0
      %2108 = vmatpush.msra.mxu0 0.0
      %2109 = vmatpush.msra.mxu0 0.0
      %2110 = vmatpush.msra.mxu0 0.0
      %2111 = vmatpush.msra.mxu0 0.0
      %2112 = vmatpush.msra.mxu0 0.0
      %2113 = vmatpush.msra.mxu0 0.0
      %2114 = vmatpush.msra.mxu0 0.0
      %2115 = vmatpush.msra.mxu0 %v2078
      %2116 = vmatmul.f32.gmra.mxu0 %v2074
      %v2117 = vpop.f32.mrf.mxu0
      %v2118 = vadd.f32 0.0, %v2117
      %2119 = vdwg.mxu0
      %v2120 = vadd.f32 %v2047, %v2098
      %v2121 = vadd.f32 %v2048, %v2118
      %s2122 = scalar_lea.vmem %s3, 16
      %v2123 = vld [vmem:[%s2122] sm:$0xf]
      %2124 = vrot.lane.b32.xlu0 %v1853, 111
      %v2125 = vpop.permute.xlu0 %2124
      %2126 = vrot.lane.b32.xlu0 %v1854, 111
      %v2127 = vpop.permute.xlu0 %2126
      %2128 = vrot.lane.b32.xlu0 %v1863, 111
      %v2129 = vpop.permute.xlu0 %2128
      %v2130 = vsel %vm872, %v2125, %v2127
      %v2131 = vsel %vm872, %v2127, %v2129
      %v2133 = vsel %vm1252, %v2123, 0
      %v2135 = vsel %vm1256, %v2130, 0
      %v2137 = vsel %vm1256, %v2131, 0
      %2139 = vmatpush.msra.mxu0 0.0
      %2140 = vmatpush.msra.mxu0 0.0
      %2141 = vmatpush.msra.mxu0 0.0
      %2142 = vmatpush.msra.mxu0 0.0
      %2143 = vmatpush.msra.mxu0 0.0
      %2144 = vmatpush.msra.mxu0 0.0
      %2145 = vmatpush.msra.mxu0 0.0
      %2146 = vmatpush.msra.mxu0 0.0
      %2147 = vmatpush.msra.mxu0 0.0
      %2148 = vmatpush.msra.mxu0 0.0
      %2149 = vmatpush.msra.mxu0 0.0
      %2150 = vmatpush.msra.mxu0 0.0
      %2151 = vmatpush.msra.mxu0 0.0
      %2152 = vmatpush.msra.mxu0 0.0
      %2153 = vmatpush.msra.mxu0 0.0
      %2154 = vmatpush.msra.mxu0 %v2135
      %2155 = vmatmul.f32.gmra.mxu0 %v2133
      %v2156 = vpop.f32.mrf.mxu0
      %v2157 = vadd.f32 0.0, %v2156
      %2158 = vdwg.mxu0
      %2159 = vmatpush.msra.mxu0 0.0
      %2160 = vmatpush.msra.mxu0 0.0
      %2161 = vmatpush.msra.mxu0 0.0
      %2162 = vmatpush.msra.mxu0 0.0
      %2163 = vmatpush.msra.mxu0 0.0
      %2164 = vmatpush.msra.mxu0 0.0
      %2165 = vmatpush.msra.mxu0 0.0
      %2166 = vmatpush.msra.mxu0 0.0
      %2167 = vmatpush.msra.mxu0 0.0
      %2168 = vmatpush.msra.mxu0 0.0
      %2169 = vmatpush.msra.mxu0 0.0
      %2170 = vmatpush.msra.mxu0 0.0
      %2171 = vmatpush.msra.mxu0 0.0
      %2172 = vmatpush.msra.mxu0 0.0
      %2173 = vmatpush.msra.mxu0 0.0
      %2174 = vmatpush.msra.mxu0 %v2137
      %2175 = vmatmul.f32.gmra.mxu0 %v2133
      %v2176 = vpop.f32.mrf.mxu0
      %v2177 = vadd.f32 0.0, %v2176
      %2178 = vdwg.mxu0
      %v2179 = vadd.f32 %v2120, %v2157
      %v2180 = vadd.f32 %v2121, %v2177
      %2181 = vrot.lane.b32.xlu0 %v1974, 18
      %v2182 = vpop.permute.xlu0 %2181
      %2183 = vrot.lane.b32.xlu0 %v1975, 18
      %v2184 = vpop.permute.xlu0 %2183
      %v2185 = vsel %vm928, %v2182, %v2184
      %v2189 = vmul.f32 %v1853, %v2182
      %v2190 = vmul.f32 %v1854, %v2185
      %v2191 = vmul.f32 %v1863, %v2184
      %s2192 = scalar_lea.vmem %s3, 20
      %v2193 = vld [vmem:[%s2192] sm:$0xf]
      %2197 = vrot.lane.b32.xlu0 %v2189, 110
      %v2198 = vpop.permute.xlu0 %2197
      %2199 = vrot.lane.b32.xlu0 %v2190, 110
      %v2200 = vpop.permute.xlu0 %2199
      %2201 = vrot.lane.b32.xlu0 %v2191, 110
      %v2202 = vpop.permute.xlu0 %2201
      %v2203 = vsel %vm947, %v2198, %v2200
      %v2204 = vsel %vm947, %v2200, %v2202
      %v2206 = vsel %vm1252, %v2193, 0
      %v2208 = vsel %vm1256, %v2203, 0
      %v2210 = vsel %vm1256, %v2204, 0
      %2212 = vmatpush.msra.mxu0 0.0
      %2213 = vmatpush.msra.mxu0 0.0
      %2214 = vmatpush.msra.mxu0 0.0
      %2215 = vmatpush.msra.mxu0 0.0
      %2216 = vmatpush.msra.mxu0 0.0
      %2217 = vmatpush.msra.mxu0 0.0
      %2218 = vmatpush.msra.mxu0 0.0
      %2219 = vmatpush.msra.mxu0 0.0
      %2220 = vmatpush.msra.mxu0 0.0
      %2221 = vmatpush.msra.mxu0 0.0
      %2222 = vmatpush.msra.mxu0 0.0
      %2223 = vmatpush.msra.mxu0 0.0
      %2224 = vmatpush.msra.mxu0 0.0
      %2225 = vmatpush.msra.mxu0 0.0
      %2226 = vmatpush.msra.mxu0 0.0
      %2227 = vmatpush.msra.mxu0 %v2208
      %2228 = vmatmul.f32.gmra.mxu0 %v2206
      %v2229 = vpop.f32.mrf.mxu0
      %v2230 = vadd.f32 0.0, %v2229
      %2231 = vdwg.mxu0
      %2232 = vmatpush.msra.mxu0 0.0
      %2233 = vmatpush.msra.mxu0 0.0
      %2234 = vmatpush.msra.mxu0 0.0
      %2235 = vmatpush.msra.mxu0 0.0
      %2236 = vmatpush.msra.mxu0 0.0
      %2237 = vmatpush.msra.mxu0 0.0
      %2238 = vmatpush.msra.mxu0 0.0
      %2239 = vmatpush.msra.mxu0 0.0
      %2240 = vmatpush.msra.mxu0 0.0
      %2241 = vmatpush.msra.mxu0 0.0
      %2242 = vmatpush.msra.mxu0 0.0
      %2243 = vmatpush.msra.mxu0 0.0
      %2244 = vmatpush.msra.mxu0 0.0
      %2245 = vmatpush.msra.mxu0 0.0
      %2246 = vmatpush.msra.mxu0 0.0
      %2247 = vmatpush.msra.mxu0 %v2210
      %2248 = vmatmul.f32.gmra.mxu0 %v2206
      %v2249 = vpop.f32.mrf.mxu0
      %v2250 = vadd.f32 0.0, %v2249
      %2251 = vdwg.mxu0
      %v2252 = vadd.f32 %v2179, %v2230
      %v2253 = vadd.f32 %v2180, %v2250
      %2254 = vrot.lane.b32.xlu0 %v1856, 32
      %v2255 = vpop.permute.xlu0 %2254
      %2256 = vrot.lane.b32.xlu0 %v1857, 32
      %v2257 = vpop.permute.xlu0 %2256
      %v2258 = vsel %vm1003, %v2255, %v2257
      %v2262 = vmul.f32 %v1853, %v2255
      %v2263 = vmul.f32 %v1854, %v2258
      %v2264 = vmul.f32 %v1863, %v2257
      %s2265 = scalar_lea.vmem %s3, 24
      %v2266 = vld [vmem:[%s2265] sm:$0xf]
      %2270 = vrot.lane.b32.xlu0 %v2262, 96
      %v2271 = vpop.permute.xlu0 %2270
      %2272 = vrot.lane.b32.xlu0 %v2263, 96
      %v2273 = vpop.permute.xlu0 %2272
      %2274 = vrot.lane.b32.xlu0 %v2264, 96
      %v2275 = vpop.permute.xlu0 %2274
      %v2276 = vsel %vm1022, %v2271, %v2273
      %v2277 = vsel %vm1022, %v2273, %v2275
      %v2279 = vsel %vm1252, %v2266, 0
      %v2281 = vsel %vm1256, %v2276, 0
      %v2283 = vsel %vm1256, %v2277, 0
      %2285 = vmatpush.msra.mxu0 0.0
      %2286 = vmatpush.msra.mxu0 0.0
      %2287 = vmatpush.msra.mxu0 0.0
      %2288 = vmatpush.msra.mxu0 0.0
      %2289 = vmatpush.msra.mxu0 0.0
      %2290 = vmatpush.msra.mxu0 0.0
      %2291 = vmatpush.msra.mxu0 0.0
      %2292 = vmatpush.msra.mxu0 0.0
      %2293 = vmatpush.msra.mxu0 0.0
      %2294 = vmatpush.msra.mxu0 0.0
      %2295 = vmatpush.msra.mxu0 0.0
      %2296 = vmatpush.msra.mxu0 0.0
      %2297 = vmatpush.msra.mxu0 0.0
      %2298 = vmatpush.msra.mxu0 0.0
      %2299 = vmatpush.msra.mxu0 0.0
      %2300 = vmatpush.msra.mxu0 %v2281
      %2301 = vmatmul.f32.gmra.mxu0 %v2279
      %v2302 = vpop.f32.mrf.mxu0
      %v2303 = vadd.f32 0.0, %v2302
      %2304 = vdwg.mxu0
      %2305 = vmatpush.msra.mxu0 0.0
      %2306 = vmatpush.msra.mxu0 0.0
      %2307 = vmatpush.msra.mxu0 0.0
      %2308 = vmatpush.msra.mxu0 0.0
      %2309 = vmatpush.msra.mxu0 0.0
      %2310 = vmatpush.msra.mxu0 0.0
      %2311 = vmatpush.msra.mxu0 0.0
      %2312 = vmatpush.msra.mxu0 0.0
      %2313 = vmatpush.msra.mxu0 0.0
      %2314 = vmatpush.msra.mxu0 0.0
      %2315 = vmatpush.msra.mxu0 0.0
      %2316 = vmatpush.msra.mxu0 0.0
      %2317 = vmatpush.msra.mxu0 0.0
      %2318 = vmatpush.msra.mxu0 0.0
      %2319 = vmatpush.msra.mxu0 0.0
      %2320 = vmatpush.msra.mxu0 %v2283
      %2321 = vmatmul.f32.gmra.mxu0 %v2279
      %v2322 = vpop.f32.mrf.mxu0
      %v2323 = vadd.f32 0.0, %v2322
      %2324 = vdwg.mxu0
      %v2325 = vadd.f32 %v2252, %v2303
      %v2326 = vadd.f32 %v2253, %v2323
      %s2327 = scalar_lea.vmem %s3, 28
      %v2328 = vld [vmem:[%s2327] sm:$0xf]
      %2329 = vrot.lane.b32.xlu0 %v1853, 95
      %v2330 = vpop.permute.xlu0 %2329
      %2331 = vrot.lane.b32.xlu0 %v1854, 95
      %v2332 = vpop.permute.xlu0 %2331
      %2333 = vrot.lane.b32.xlu0 %v1863, 95
      %v2334 = vpop.permute.xlu0 %2333
      %v2335 = vsel %vm1082, %v2330, %v2332
      %v2336 = vsel %vm1082, %v2332, %v2334
      %v2338 = vsel %vm1252, %v2328, 0
      %v2340 = vsel %vm1256, %v2335, 0
      %v2342 = vsel %vm1256, %v2336, 0
      %2344 = vmatpush.msra.mxu0 0.0
      %2345 = vmatpush.msra.mxu0 0.0
      %2346 = vmatpush.msra.mxu0 0.0
      %2347 = vmatpush.msra.mxu0 0.0
      %2348 = vmatpush.msra.mxu0 0.0
      %2349 = vmatpush.msra.mxu0 0.0
      %2350 = vmatpush.msra.mxu0 0.0
      %2351 = vmatpush.msra.mxu0 0.0
      %2352 = vmatpush.msra.mxu0 0.0
      %2353 = vmatpush.msra.mxu0 0.0
      %2354 = vmatpush.msra.mxu0 0.0
      %2355 = vmatpush.msra.mxu0 0.0
      %2356 = vmatpush.msra.mxu0 0.0
      %2357 = vmatpush.msra.mxu0 0.0
      %2358 = vmatpush.msra.mxu0 0.0
      %2359 = vmatpush.msra.mxu0 %v2340
      %2360 = vmatmul.f32.gmra.mxu0 %v2338
      %v2361 = vpop.f32.mrf.mxu0
      %v2362 = vadd.f32 0.0, %v2361
      %2363 = vdwg.mxu0
      %2364 = vmatpush.msra.mxu0 0.0
      %2365 = vmatpush.msra.mxu0 0.0
      %2366 = vmatpush.msra.mxu0 0.0
      %2367 = vmatpush.msra.mxu0 0.0
      %2368 = vmatpush.msra.mxu0 0.0
      %2369 = vmatpush.msra.mxu0 0.0
      %2370 = vmatpush.msra.mxu0 0.0
      %2371 = vmatpush.msra.mxu0 0.0
      %2372 = vmatpush.msra.mxu0 0.0
      %2373 = vmatpush.msra.mxu0 0.0
      %2374 = vmatpush.msra.mxu0 0.0
      %2375 = vmatpush.msra.mxu0 0.0
      %2376 = vmatpush.msra.mxu0 0.0
      %2377 = vmatpush.msra.mxu0 0.0
      %2378 = vmatpush.msra.mxu0 0.0
      %2379 = vmatpush.msra.mxu0 %v2342
      %2380 = vmatmul.f32.gmra.mxu0 %v2338
      %v2381 = vpop.f32.mrf.mxu0
      %v2382 = vadd.f32 0.0, %v2381
      %2383 = vdwg.mxu0
      %v2384 = vadd.f32 %v2325, %v2362
      %v2385 = vadd.f32 %v2326, %v2382
      %2386 = vrot.lane.b32.xlu0 %v1974, 34
      %v2387 = vpop.permute.xlu0 %2386
      %2388 = vrot.lane.b32.xlu0 %v1975, 34
      %v2389 = vpop.permute.xlu0 %2388
      %v2390 = vsel %vm1138, %v2387, %v2389
      %v2394 = vmul.f32 %v1853, %v2387
      %v2395 = vmul.f32 %v1854, %v2390
      %v2396 = vmul.f32 %v1863, %v2389
      %s2397 = scalar_lea.vmem %s3, 32
      %v2398 = vld [vmem:[%s2397] sm:$0xf]
      %2402 = vrot.lane.b32.xlu0 %v2394, 94
      %v2403 = vpop.permute.xlu0 %2402
      %2404 = vrot.lane.b32.xlu0 %v2395, 94
      %v2405 = vpop.permute.xlu0 %2404
      %2406 = vrot.lane.b32.xlu0 %v2396, 94
      %v2407 = vpop.permute.xlu0 %2406
      %v2408 = vsel %vm1157, %v2403, %v2405
      %v2409 = vsel %vm1157, %v2405, %v2407
      %v2411 = vsel %vm1252, %v2398, 0
      %v2413 = vsel %vm1256, %v2408, 0
      %v2415 = vsel %vm1256, %v2409, 0
      %2417 = vmatpush.msra.mxu0 0.0
      %2418 = vmatpush.msra.mxu0 0.0
      %2419 = vmatpush.msra.mxu0 0.0
      %2420 = vmatpush.msra.mxu0 0.0
      %2421 = vmatpush.msra.mxu0 0.0
      %2422 = vmatpush.msra.mxu0 0.0
      %2423 = vmatpush.msra.mxu0 0.0
      %2424 = vmatpush.msra.mxu0 0.0
      %2425 = vmatpush.msra.mxu0 0.0
      %2426 = vmatpush.msra.mxu0 0.0
      %2427 = vmatpush.msra.mxu0 0.0
      %2428 = vmatpush.msra.mxu0 0.0
      %2429 = vmatpush.msra.mxu0 0.0
      %2430 = vmatpush.msra.mxu0 0.0
      %2431 = vmatpush.msra.mxu0 0.0
      %2432 = vmatpush.msra.mxu0 %v2413
      %2433 = vmatmul.f32.gmra.mxu0 %v2411
      %v2434 = vpop.f32.mrf.mxu0
      %v2435 = vadd.f32 0.0, %v2434
      %2436 = vdwg.mxu0
      %2437 = vmatpush.msra.mxu0 0.0
      %2438 = vmatpush.msra.mxu0 0.0
      %2439 = vmatpush.msra.mxu0 0.0
      %2440 = vmatpush.msra.mxu0 0.0
      %2441 = vmatpush.msra.mxu0 0.0
      %2442 = vmatpush.msra.mxu0 0.0
      %2443 = vmatpush.msra.mxu0 0.0
      %2444 = vmatpush.msra.mxu0 0.0
      %2445 = vmatpush.msra.mxu0 0.0
      %2446 = vmatpush.msra.mxu0 0.0
      %2447 = vmatpush.msra.mxu0 0.0
      %2448 = vmatpush.msra.mxu0 0.0
      %2449 = vmatpush.msra.mxu0 0.0
      %2450 = vmatpush.msra.mxu0 0.0
      %2451 = vmatpush.msra.mxu0 0.0
      %2452 = vmatpush.msra.mxu0 %v2415
      %2453 = vmatmul.f32.gmra.mxu0 %v2411
      %v2454 = vpop.f32.mrf.mxu0
      %v2455 = vadd.f32 0.0, %v2454
      %2456 = vdwg.mxu0
      %v2457 = vadd.f32 %v2384, %v2435
      %v2458 = vadd.f32 %v2385, %v2455
      %v2459 = vadd.f32 %v2457, %v1209
      %v2460 = vadd.f32 %v2458, %v1210
      %v2461 = vmax.f32 %v2459, 0.0
      %v2462 = vmax.f32 %v2460, 0.0
      %2465 = vrot.lane.b32.xlu0 %v2461, 17
      %v2466 = vpop.permute.xlu0 %2465
      %2467 = vrot.lane.b32.xlu0 %v2462, 17
      %v2468 = vpop.permute.xlu0 %2467
      %v2469 = vsel %vm549, %v2466, %v2468
      %2473 = vst.msk [vmem:[#allocation2] sm:$0xf] %vm1221, %v2466
      %2474 = vst [vmem:[#allocation2 + $0x8] sm:$0xf] %v2469
      %2475 = vst.msk [vmem:[#allocation2 + $0x10] sm:$0xf] %vm1224, %v2468
      %v2476 = vld [vmem:[%s12] ss:$2 sm:$0x3]
      %v2477 = vld [vmem:[%s586] ss:$2 sm:$0x3]
      %v2478 = vld [vmem:[#allocation2] sm:$0xf]
      %v2479 = vld [vmem:[#allocation2 + $0x8] sm:$0xf]
      %v2481 = vperm.slane %v2476, 0
      %v2482 = vperm.slane %v2476, 1
      %v2485 = vmul.f32 %v2478, %v2481
      %v2486 = vmul.f32 %v2479, %v2482
      %v2487 = vld [vmem:[%s4] sm:$0xff]
      %v2488 = vld [vmem:[#allocation2 + $0x10] sm:$0xf]
      %s2489 = scalar_lea.vmem %s4, 8
      %v2490 = vld [vmem:[%s2489] sm:$0xff]
      %2494 = vrot.lane.b32.xlu0 %v2478, 127
      %v2495 = vpop.permute.xlu0 %2494
      %2496 = vrot.lane.b32.xlu0 %v2479, 127
      %v2497 = vpop.permute.xlu0 %2496
      %2498 = vrot.lane.b32.xlu0 %v2488, 127
      %v2499 = vpop.permute.xlu0 %2498
      %v2500 = vsel %vm610, %v2495, %v2497
      %v2501 = vsel %vm610, %v2497, %v2499
      %v2503 = vsel %vm1252, %v2490, 0
      %v2505 = vsel %vm1256, %v2500, 0
      %v2507 = vsel %vm1256, %v2501, 0
      %2509 = vmatpush.msra.mxu0 0.0
      %2510 = vmatpush.msra.mxu0 0.0
      %2511 = vmatpush.msra.mxu0 0.0
      %2512 = vmatpush.msra.mxu0 0.0
      %2513 = vmatpush.msra.mxu0 0.0
      %2514 = vmatpush.msra.mxu0 0.0
      %2515 = vmatpush.msra.mxu0 0.0
      %2516 = vmatpush.msra.mxu0 0.0
      %2517 = vmatpush.msra.mxu0 0.0
      %2518 = vmatpush.msra.mxu0 0.0
      %2519 = vmatpush.msra.mxu0 0.0
      %2520 = vmatpush.msra.mxu0 0.0
      %2521 = vmatpush.msra.mxu0 0.0
      %2522 = vmatpush.msra.mxu0 0.0
      %2523 = vmatpush.msra.mxu0 0.0
      %2524 = vmatpush.msra.mxu0 %v2505
      %2525 = vmatmul.f32.gmra.mxu0 %v2503
      %v2526 = vpop.f32.mrf.mxu0
      %v2527 = vadd.f32 0.0, %v2526
      %2528 = vdwg.mxu0
      %2529 = vmatpush.msra.mxu0 0.0
      %2530 = vmatpush.msra.mxu0 0.0
      %2531 = vmatpush.msra.mxu0 0.0
      %2532 = vmatpush.msra.mxu0 0.0
      %2533 = vmatpush.msra.mxu0 0.0
      %2534 = vmatpush.msra.mxu0 0.0
      %2535 = vmatpush.msra.mxu0 0.0
      %2536 = vmatpush.msra.mxu0 0.0
      %2537 = vmatpush.msra.mxu0 0.0
      %2538 = vmatpush.msra.mxu0 0.0
      %2539 = vmatpush.msra.mxu0 0.0
      %2540 = vmatpush.msra.mxu0 0.0
      %2541 = vmatpush.msra.mxu0 0.0
      %2542 = vmatpush.msra.mxu0 0.0
      %2543 = vmatpush.msra.mxu0 0.0
      %2544 = vmatpush.msra.mxu0 %v2507
      %2545 = vmatmul.f32.gmra.mxu0 %v2503
      %v2546 = vpop.f32.mrf.mxu0
      %v2547 = vadd.f32 0.0, %v2546
      %2548 = vdwg.mxu0
      %v2550 = vsel %vm1252, %v2487, 0
      %v2553 = vsel %vm1256, %v2485, 0
      %v2556 = vsel %vm1256, %v2486, 0
      %2558 = vmatpush.msra.mxu0 0.0
      %2559 = vmatpush.msra.mxu0 0.0
      %2560 = vmatpush.msra.mxu0 0.0
      %2561 = vmatpush.msra.mxu0 0.0
      %2562 = vmatpush.msra.mxu0 0.0
      %2563 = vmatpush.msra.mxu0 0.0
      %2564 = vmatpush.msra.mxu0 0.0
      %2565 = vmatpush.msra.mxu0 0.0
      %2566 = vmatpush.msra.mxu0 0.0
      %2567 = vmatpush.msra.mxu0 0.0
      %2568 = vmatpush.msra.mxu0 0.0
      %2569 = vmatpush.msra.mxu0 0.0
      %2570 = vmatpush.msra.mxu0 0.0
      %2571 = vmatpush.msra.mxu0 0.0
      %2572 = vmatpush.msra.mxu0 0.0
      %2573 = vmatpush.msra.mxu0 %v2553
      %2574 = vmatmul.f32.gmra.mxu0 %v2550
      %v2575 = vpop.f32.mrf.mxu0
      %v2576 = vadd.f32 %v2527, %v2575
      %2577 = vdwg.mxu0
      %2578 = vmatpush.msra.mxu0 0.0
      %2579 = vmatpush.msra.mxu0 0.0
      %2580 = vmatpush.msra.mxu0 0.0
      %2581 = vmatpush.msra.mxu0 0.0
      %2582 = vmatpush.msra.mxu0 0.0
      %2583 = vmatpush.msra.mxu0 0.0
      %2584 = vmatpush.msra.mxu0 0.0
      %2585 = vmatpush.msra.mxu0 0.0
      %2586 = vmatpush.msra.mxu0 0.0
      %2587 = vmatpush.msra.mxu0 0.0
      %2588 = vmatpush.msra.mxu0 0.0
      %2589 = vmatpush.msra.mxu0 0.0
      %2590 = vmatpush.msra.mxu0 0.0
      %2591 = vmatpush.msra.mxu0 0.0
      %2592 = vmatpush.msra.mxu0 0.0
      %2593 = vmatpush.msra.mxu0 %v2556
      %2594 = vmatmul.f32.gmra.mxu0 %v2550
      %v2595 = vpop.f32.mrf.mxu0
      %v2596 = vadd.f32 %v2547, %v2595
      %2597 = vdwg.mxu0
      %v2599 = vperm.slane %v2477, 0
      %v2600 = vperm.slane %v2477, 1
      %2601 = vrot.lane.b32.xlu0 %v2599, 2
      %v2602 = vpop.permute.xlu0 %2601
      %2603 = vrot.lane.b32.xlu0 %v2600, 2
      %v2604 = vpop.permute.xlu0 %2603
      %v2605 = vsel %vm718, %v2602, %v2604
      %v2609 = vmul.f32 %v2478, %v2602
      %v2610 = vmul.f32 %v2479, %v2605
      %v2611 = vmul.f32 %v2488, %v2604
      %s2612 = scalar_lea.vmem %s4, 16
      %v2613 = vld [vmem:[%s2612] sm:$0xff]
      %2617 = vrot.lane.b32.xlu0 %v2609, 126
      %v2618 = vpop.permute.xlu0 %2617
      %2619 = vrot.lane.b32.xlu0 %v2610, 126
      %v2620 = vpop.permute.xlu0 %2619
      %2621 = vrot.lane.b32.xlu0 %v2611, 126
      %v2622 = vpop.permute.xlu0 %2621
      %v2623 = vsel %vm737, %v2618, %v2620
      %v2624 = vsel %vm737, %v2620, %v2622
      %v2626 = vsel %vm1252, %v2613, 0
      %v2628 = vsel %vm1256, %v2623, 0
      %v2630 = vsel %vm1256, %v2624, 0
      %2632 = vmatpush.msra.mxu0 0.0
      %2633 = vmatpush.msra.mxu0 0.0
      %2634 = vmatpush.msra.mxu0 0.0
      %2635 = vmatpush.msra.mxu0 0.0
      %2636 = vmatpush.msra.mxu0 0.0
      %2637 = vmatpush.msra.mxu0 0.0
      %2638 = vmatpush.msra.mxu0 0.0
      %2639 = vmatpush.msra.mxu0 0.0
      %2640 = vmatpush.msra.mxu0 0.0
      %2641 = vmatpush.msra.mxu0 0.0
      %2642 = vmatpush.msra.mxu0 0.0
      %2643 = vmatpush.msra.mxu0 0.0
      %2644 = vmatpush.msra.mxu0 0.0
      %2645 = vmatpush.msra.mxu0 0.0
      %2646 = vmatpush.msra.mxu0 0.0
      %2647 = vmatpush.msra.mxu0 %v2628
      %2648 = vmatmul.f32.gmra.mxu0 %v2626
      %v2649 = vpop.f32.mrf.mxu0
      %v2650 = vadd.f32 0.0, %v2649
      %2651 = vdwg.mxu0
      %2652 = vmatpush.msra.mxu0 0.0
      %2653 = vmatpush.msra.mxu0 0.0
      %2654 = vmatpush.msra.mxu0 0.0
      %2655 = vmatpush.msra.mxu0 0.0
      %2656 = vmatpush.msra.mxu0 0.0
      %2657 = vmatpush.msra.mxu0 0.0
      %2658 = vmatpush.msra.mxu0 0.0
      %2659 = vmatpush.msra.mxu0 0.0
      %2660 = vmatpush.msra.mxu0 0.0
      %2661 = vmatpush.msra.mxu0 0.0
      %2662 = vmatpush.msra.mxu0 0.0
      %2663 = vmatpush.msra.mxu0 0.0
      %2664 = vmatpush.msra.mxu0 0.0
      %2665 = vmatpush.msra.mxu0 0.0
      %2666 = vmatpush.msra.mxu0 0.0
      %2667 = vmatpush.msra.mxu0 %v2630
      %2668 = vmatmul.f32.gmra.mxu0 %v2626
      %v2669 = vpop.f32.mrf.mxu0
      %v2670 = vadd.f32 0.0, %v2669
      %2671 = vdwg.mxu0
      %v2672 = vadd.f32 %v2576, %v2650
      %v2673 = vadd.f32 %v2596, %v2670
      %2674 = vrot.lane.b32.xlu0 %v2481, 16
      %v2675 = vpop.permute.xlu0 %2674
      %2676 = vrot.lane.b32.xlu0 %v2482, 16
      %v2677 = vpop.permute.xlu0 %2676
      %v2678 = vsel %vm793, %v2675, %v2677
      %v2682 = vmul.f32 %v2478, %v2675
      %v2683 = vmul.f32 %v2479, %v2678
      %v2684 = vmul.f32 %v2488, %v2677
      %s2685 = scalar_lea.vmem %s4, 24
      %v2686 = vld [vmem:[%s2685] sm:$0xff]
      %2690 = vrot.lane.b32.xlu0 %v2682, 112
      %v2691 = vpop.permute.xlu0 %2690
      %2692 = vrot.lane.b32.xlu0 %v2683, 112
      %v2693 = vpop.permute.xlu0 %2692
      %2694 = vrot.lane.b32.xlu0 %v2684, 112
      %v2695 = vpop.permute.xlu0 %2694
      %v2696 = vsel %vm812, %v2691, %v2693
      %v2697 = vsel %vm812, %v2693, %v2695
      %v2699 = vsel %vm1252, %v2686, 0
      %v2701 = vsel %vm1256, %v2696, 0
      %v2703 = vsel %vm1256, %v2697, 0
      %2705 = vmatpush.msra.mxu0 0.0
      %2706 = vmatpush.msra.mxu0 0.0
      %2707 = vmatpush.msra.mxu0 0.0
      %2708 = vmatpush.msra.mxu0 0.0
      %2709 = vmatpush.msra.mxu0 0.0
      %2710 = vmatpush.msra.mxu0 0.0
      %2711 = vmatpush.msra.mxu0 0.0
      %2712 = vmatpush.msra.mxu0 0.0
      %2713 = vmatpush.msra.mxu0 0.0
      %2714 = vmatpush.msra.mxu0 0.0
      %2715 = vmatpush.msra.mxu0 0.0
      %2716 = vmatpush.msra.mxu0 0.0
      %2717 = vmatpush.msra.mxu0 0.0
      %2718 = vmatpush.msra.mxu0 0.0
      %2719 = vmatpush.msra.mxu0 0.0
      %2720 = vmatpush.msra.mxu0 %v2701
      %2721 = vmatmul.f32.gmra.mxu0 %v2699
      %v2722 = vpop.f32.mrf.mxu0
      %v2723 = vadd.f32 0.0, %v2722
      %2724 = vdwg.mxu0
      %2725 = vmatpush.msra.mxu0 0.0
      %2726 = vmatpush.msra.mxu0 0.0
      %2727 = vmatpush.msra.mxu0 0.0
      %2728 = vmatpush.msra.mxu0 0.0
      %2729 = vmatpush.msra.mxu0 0.0
      %2730 = vmatpush.msra.mxu0 0.0
      %2731 = vmatpush.msra.mxu0 0.0
      %2732 = vmatpush.msra.mxu0 0.0
      %2733 = vmatpush.msra.mxu0 0.0
      %2734 = vmatpush.msra.mxu0 0.0
      %2735 = vmatpush.msra.mxu0 0.0
      %2736 = vmatpush.msra.mxu0 0.0
      %2737 = vmatpush.msra.mxu0 0.0
      %2738 = vmatpush.msra.mxu0 0.0
      %2739 = vmatpush.msra.mxu0 0.0
      %2740 = vmatpush.msra.mxu0 %v2703
      %2741 = vmatmul.f32.gmra.mxu0 %v2699
      %v2742 = vpop.f32.mrf.mxu0
      %v2743 = vadd.f32 0.0, %v2742
      %2744 = vdwg.mxu0
      %v2745 = vadd.f32 %v2672, %v2723
      %v2746 = vadd.f32 %v2673, %v2743
      %s2747 = scalar_lea.vmem %s4, 32
      %v2748 = vld [vmem:[%s2747] sm:$0xff]
      %2749 = vrot.lane.b32.xlu0 %v2478, 111
      %v2750 = vpop.permute.xlu0 %2749
      %2751 = vrot.lane.b32.xlu0 %v2479, 111
      %v2752 = vpop.permute.xlu0 %2751
      %2753 = vrot.lane.b32.xlu0 %v2488, 111
      %v2754 = vpop.permute.xlu0 %2753
      %v2755 = vsel %vm872, %v2750, %v2752
      %v2756 = vsel %vm872, %v2752, %v2754
      %v2758 = vsel %vm1252, %v2748, 0
      %v2760 = vsel %vm1256, %v2755, 0
      %v2762 = vsel %vm1256, %v2756, 0
      %2764 = vmatpush.msra.mxu0 0.0
      %2765 = vmatpush.msra.mxu0 0.0
      %2766 = vmatpush.msra.mxu0 0.0
      %2767 = vmatpush.msra.mxu0 0.0
      %2768 = vmatpush.msra.mxu0 0.0
      %2769 = vmatpush.msra.mxu0 0.0
      %2770 = vmatpush.msra.mxu0 0.0
      %2771 = vmatpush.msra.mxu0 0.0
      %2772 = vmatpush.msra.mxu0 0.0
      %2773 = vmatpush.msra.mxu0 0.0
      %2774 = vmatpush.msra.mxu0 0.0
      %2775 = vmatpush.msra.mxu0 0.0
      %2776 = vmatpush.msra.mxu0 0.0
      %2777 = vmatpush.msra.mxu0 0.0
      %2778 = vmatpush.msra.mxu0 0.0
      %2779 = vmatpush.msra.mxu0 %v2760
      %2780 = vmatmul.f32.gmra.mxu0 %v2758
      %v2781 = vpop.f32.mrf.mxu0
      %v2782 = vadd.f32 0.0, %v2781
      %2783 = vdwg.mxu0
      %2784 = vmatpush.msra.mxu0 0.0
      %2785 = vmatpush.msra.mxu0 0.0
      %2786 = vmatpush.msra.mxu0 0.0
      %2787 = vmatpush.msra.mxu0 0.0
      %2788 = vmatpush.msra.mxu0 0.0
      %2789 = vmatpush.msra.mxu0 0.0
      %2790 = vmatpush.msra.mxu0 0.0
      %2791 = vmatpush.msra.mxu0 0.0
      %2792 = vmatpush.msra.mxu0 0.0
      %2793 = vmatpush.msra.mxu0 0.0
      %2794 = vmatpush.msra.mxu0 0.0
      %2795 = vmatpush.msra.mxu0 0.0
      %2796 = vmatpush.msra.mxu0 0.0
      %2797 = vmatpush.msra.mxu0 0.0
      %2798 = vmatpush.msra.mxu0 0.0
      %2799 = vmatpush.msra.mxu0 %v2762
      %2800 = vmatmul.f32.gmra.mxu0 %v2758
      %v2801 = vpop.f32.mrf.mxu0
      %v2802 = vadd.f32 0.0, %v2801
      %2803 = vdwg.mxu0
      %v2804 = vadd.f32 %v2745, %v2782
      %v2805 = vadd.f32 %v2746, %v2802
      %2806 = vrot.lane.b32.xlu0 %v2599, 18
      %v2807 = vpop.permute.xlu0 %2806
      %2808 = vrot.lane.b32.xlu0 %v2600, 18
      %v2809 = vpop.permute.xlu0 %2808
      %v2810 = vsel %vm928, %v2807, %v2809
      %v2814 = vmul.f32 %v2478, %v2807
      %v2815 = vmul.f32 %v2479, %v2810
      %v2816 = vmul.f32 %v2488, %v2809
      %s2817 = scalar_lea.vmem %s4, 40
      %v2818 = vld [vmem:[%s2817] sm:$0xff]
      %2822 = vrot.lane.b32.xlu0 %v2814, 110
      %v2823 = vpop.permute.xlu0 %2822
      %2824 = vrot.lane.b32.xlu0 %v2815, 110
      %v2825 = vpop.permute.xlu0 %2824
      %2826 = vrot.lane.b32.xlu0 %v2816, 110
      %v2827 = vpop.permute.xlu0 %2826
      %v2828 = vsel %vm947, %v2823, %v2825
      %v2829 = vsel %vm947, %v2825, %v2827
      %v2831 = vsel %vm1252, %v2818, 0
      %v2833 = vsel %vm1256, %v2828, 0
      %v2835 = vsel %vm1256, %v2829, 0
      %2837 = vmatpush.msra.mxu0 0.0
      %2838 = vmatpush.msra.mxu0 0.0
      %2839 = vmatpush.msra.mxu0 0.0
      %2840 = vmatpush.msra.mxu0 0.0
      %2841 = vmatpush.msra.mxu0 0.0
      %2842 = vmatpush.msra.mxu0 0.0
      %2843 = vmatpush.msra.mxu0 0.0
      %2844 = vmatpush.msra.mxu0 0.0
      %2845 = vmatpush.msra.mxu0 0.0
      %2846 = vmatpush.msra.mxu0 0.0
      %2847 = vmatpush.msra.mxu0 0.0
      %2848 = vmatpush.msra.mxu0 0.0
      %2849 = vmatpush.msra.mxu0 0.0
      %2850 = vmatpush.msra.mxu0 0.0
      %2851 = vmatpush.msra.mxu0 0.0
      %2852 = vmatpush.msra.mxu0 %v2833
      %2853 = vmatmul.f32.gmra.mxu0 %v2831
      %v2854 = vpop.f32.mrf.mxu0
      %v2855 = vadd.f32 0.0, %v2854
      %2856 = vdwg.mxu0
      %2857 = vmatpush.msra.mxu0 0.0
      %2858 = vmatpush.msra.mxu0 0.0
      %2859 = vmatpush.msra.mxu0 0.0
      %2860 = vmatpush.msra.mxu0 0.0
      %2861 = vmatpush.msra.mxu0 0.0
      %2862 = vmatpush.msra.mxu0 0.0
      %2863 = vmatpush.msra.mxu0 0.0
      %2864 = vmatpush.msra.mxu0 0.0
      %2865 = vmatpush.msra.mxu0 0.0
      %2866 = vmatpush.msra.mxu0 0.0
      %2867 = vmatpush.msra.mxu0 0.0
      %2868 = vmatpush.msra.mxu0 0.0
      %2869 = vmatpush.msra.mxu0 0.0
      %2870 = vmatpush.msra.mxu0 0.0
      %2871 = vmatpush.msra.mxu0 0.0
      %2872 = vmatpush.msra.mxu0 %v2835
      %2873 = vmatmul.f32.gmra.mxu0 %v2831
      %v2874 = vpop.f32.mrf.mxu0
      %v2875 = vadd.f32 0.0, %v2874
      %2876 = vdwg.mxu0
      %v2877 = vadd.f32 %v2804, %v2855
      %v2878 = vadd.f32 %v2805, %v2875
      %2879 = vrot.lane.b32.xlu0 %v2481, 32
      %v2880 = vpop.permute.xlu0 %2879
      %2881 = vrot.lane.b32.xlu0 %v2482, 32
      %v2882 = vpop.permute.xlu0 %2881
      %v2883 = vsel %vm1003, %v2880, %v2882
      %v2887 = vmul.f32 %v2478, %v2880
      %v2888 = vmul.f32 %v2479, %v2883
      %v2889 = vmul.f32 %v2488, %v2882
      %s2890 = scalar_lea.vmem %s4, 48
      %v2891 = vld [vmem:[%s2890] sm:$0xff]
      %2895 = vrot.lane.b32.xlu0 %v2887, 96
      %v2896 = vpop.permute.xlu0 %2895
      %2897 = vrot.lane.b32.xlu0 %v2888, 96
      %v2898 = vpop.permute.xlu0 %2897
      %2899 = vrot.lane.b32.xlu0 %v2889, 96
      %v2900 = vpop.permute.xlu0 %2899
      %v2901 = vsel %vm1022, %v2896, %v2898
      %v2902 = vsel %vm1022, %v2898, %v2900
      %v2904 = vsel %vm1252, %v2891, 0
      %v2906 = vsel %vm1256, %v2901, 0
      %v2908 = vsel %vm1256, %v2902, 0
      %2910 = vmatpush.msra.mxu0 0.0
      %2911 = vmatpush.msra.mxu0 0.0
      %2912 = vmatpush.msra.mxu0 0.0
      %2913 = vmatpush.msra.mxu0 0.0
      %2914 = vmatpush.msra.mxu0 0.0
      %2915 = vmatpush.msra.mxu0 0.0
      %2916 = vmatpush.msra.mxu0 0.0
      %2917 = vmatpush.msra.mxu0 0.0
      %2918 = vmatpush.msra.mxu0 0.0
      %2919 = vmatpush.msra.mxu0 0.0
      %2920 = vmatpush.msra.mxu0 0.0
      %2921 = vmatpush.msra.mxu0 0.0
      %2922 = vmatpush.msra.mxu0 0.0
      %2923 = vmatpush.msra.mxu0 0.0
      %2924 = vmatpush.msra.mxu0 0.0
      %2925 = vmatpush.msra.mxu0 %v2906
      %2926 = vmatmul.f32.gmra.mxu0 %v2904
      %v2927 = vpop.f32.mrf.mxu0
      %v2928 = vadd.f32 0.0, %v2927
      %2929 = vdwg.mxu0
      %2930 = vmatpush.msra.mxu0 0.0
      %2931 = vmatpush.msra.mxu0 0.0
      %2932 = vmatpush.msra.mxu0 0.0
      %2933 = vmatpush.msra.mxu0 0.0
      %2934 = vmatpush.msra.mxu0 0.0
      %2935 = vmatpush.msra.mxu0 0.0
      %2936 = vmatpush.msra.mxu0 0.0
      %2937 = vmatpush.msra.mxu0 0.0
      %2938 = vmatpush.msra.mxu0 0.0
      %2939 = vmatpush.msra.mxu0 0.0
      %2940 = vmatpush.msra.mxu0 0.0
      %2941 = vmatpush.msra.mxu0 0.0
      %2942 = vmatpush.msra.mxu0 0.0
      %2943 = vmatpush.msra.mxu0 0.0
      %2944 = vmatpush.msra.mxu0 0.0
      %2945 = vmatpush.msra.mxu0 %v2908
      %2946 = vmatmul.f32.gmra.mxu0 %v2904
      %v2947 = vpop.f32.mrf.mxu0
      %v2948 = vadd.f32 0.0, %v2947
      %2949 = vdwg.mxu0
      %v2950 = vadd.f32 %v2877, %v2928
      %v2951 = vadd.f32 %v2878, %v2948
      %s2952 = scalar_lea.vmem %s4, 56
      %v2953 = vld [vmem:[%s2952] sm:$0xff]
      %2954 = vrot.lane.b32.xlu0 %v2478, 95
      %v2955 = vpop.permute.xlu0 %2954
      %2956 = vrot.lane.b32.xlu0 %v2479, 95
      %v2957 = vpop.permute.xlu0 %2956
      %2958 = vrot.lane.b32.xlu0 %v2488, 95
      %v2959 = vpop.permute.xlu0 %2958
      %v2960 = vsel %vm1082, %v2955, %v2957
      %v2961 = vsel %vm1082, %v2957, %v2959
      %v2963 = vsel %vm1252, %v2953, 0
      %v2965 = vsel %vm1256, %v2960, 0
      %v2967 = vsel %vm1256, %v2961, 0
      %2969 = vmatpush.msra.mxu0 0.0
      %2970 = vmatpush.msra.mxu0 0.0
      %2971 = vmatpush.msra.mxu0 0.0
      %2972 = vmatpush.msra.mxu0 0.0
      %2973 = vmatpush.msra.mxu0 0.0
      %2974 = vmatpush.msra.mxu0 0.0
      %2975 = vmatpush.msra.mxu0 0.0
      %2976 = vmatpush.msra.mxu0 0.0
      %2977 = vmatpush.msra.mxu0 0.0
      %2978 = vmatpush.msra.mxu0 0.0
      %2979 = vmatpush.msra.mxu0 0.0
      %2980 = vmatpush.msra.mxu0 0.0
      %2981 = vmatpush.msra.mxu0 0.0
      %2982 = vmatpush.msra.mxu0 0.0
      %2983 = vmatpush.msra.mxu0 0.0
      %2984 = vmatpush.msra.mxu0 %v2965
      %2985 = vmatmul.f32.gmra.mxu0 %v2963
      %v2986 = vpop.f32.mrf.mxu0
      %v2987 = vadd.f32 0.0, %v2986
      %2988 = vdwg.mxu0
      %2989 = vmatpush.msra.mxu0 0.0
      %2990 = vmatpush.msra.mxu0 0.0
      %2991 = vmatpush.msra.mxu0 0.0
      %2992 = vmatpush.msra.mxu0 0.0
      %2993 = vmatpush.msra.mxu0 0.0
      %2994 = vmatpush.msra.mxu0 0.0
      %2995 = vmatpush.msra.mxu0 0.0
      %2996 = vmatpush.msra.mxu0 0.0
      %2997 = vmatpush.msra.mxu0 0.0
      %2998 = vmatpush.msra.mxu0 0.0
      %2999 = vmatpush.msra.mxu0 0.0
      %3000 = vmatpush.msra.mxu0 0.0
      %3001 = vmatpush.msra.mxu0 0.0
      %3002 = vmatpush.msra.mxu0 0.0
      %3003 = vmatpush.msra.mxu0 0.0
      %3004 = vmatpush.msra.mxu0 %v2967
      %3005 = vmatmul.f32.gmra.mxu0 %v2963
      %v3006 = vpop.f32.mrf.mxu0
      %v3007 = vadd.f32 0.0, %v3006
      %3008 = vdwg.mxu0
      %v3009 = vadd.f32 %v2950, %v2987
      %v3010 = vadd.f32 %v2951, %v3007
      %3011 = vrot.lane.b32.xlu0 %v2599, 34
      %v3012 = vpop.permute.xlu0 %3011
      %3013 = vrot.lane.b32.xlu0 %v2600, 34
      %v3014 = vpop.permute.xlu0 %3013
      %v3015 = vsel %vm1138, %v3012, %v3014
      %v3019 = vmul.f32 %v2478, %v3012
      %v3020 = vmul.f32 %v2479, %v3015
      %v3021 = vmul.f32 %v2488, %v3014
      %s3022 = scalar_lea.vmem %s4, 64
      %v3023 = vld [vmem:[%s3022] sm:$0xff]
      %3027 = vrot.lane.b32.xlu0 %v3019, 94
      %v3028 = vpop.permute.xlu0 %3027
      %3029 = vrot.lane.b32.xlu0 %v3020, 94
      %v3030 = vpop.permute.xlu0 %3029
      %3031 = vrot.lane.b32.xlu0 %v3021, 94
      %v3032 = vpop.permute.xlu0 %3031
      %v3033 = vsel %vm1157, %v3028, %v3030
      %v3034 = vsel %vm1157, %v3030, %v3032
      %v3036 = vsel %vm1252, %v3023, 0
      %v3038 = vsel %vm1256, %v3033, 0
      %v3040 = vsel %vm1256, %v3034, 0
      %3042 = vmatpush.msra.mxu0 0.0
      %3043 = vmatpush.msra.mxu0 0.0
      %3044 = vmatpush.msra.mxu0 0.0
      %3045 = vmatpush.msra.mxu0 0.0
      %3046 = vmatpush.msra.mxu0 0.0
      %3047 = vmatpush.msra.mxu0 0.0
      %3048 = vmatpush.msra.mxu0 0.0
      %3049 = vmatpush.msra.mxu0 0.0
      %3050 = vmatpush.msra.mxu0 0.0
      %3051 = vmatpush.msra.mxu0 0.0
      %3052 = vmatpush.msra.mxu0 0.0
      %3053 = vmatpush.msra.mxu0 0.0
      %3054 = vmatpush.msra.mxu0 0.0
      %3055 = vmatpush.msra.mxu0 0.0
      %3056 = vmatpush.msra.mxu0 0.0
      %3057 = vmatpush.msra.mxu0 %v3038
      %3058 = vmatmul.f32.gmra.mxu0 %v3036
      %v3059 = vpop.f32.mrf.mxu0
      %v3060 = vadd.f32 0.0, %v3059
      %3061 = vdwg.mxu0
      %3062 = vmatpush.msra.mxu0 0.0
      %3063 = vmatpush.msra.mxu0 0.0
      %3064 = vmatpush.msra.mxu0 0.0
      %3065 = vmatpush.msra.mxu0 0.0
      %3066 = vmatpush.msra.mxu0 0.0
      %3067 = vmatpush.msra.mxu0 0.0
      %3068 = vmatpush.msra.mxu0 0.0
      %3069 = vmatpush.msra.mxu0 0.0
      %3070 = vmatpush.msra.mxu0 0.0
      %3071 = vmatpush.msra.mxu0 0.0
      %3072 = vmatpush.msra.mxu0 0.0
      %3073 = vmatpush.msra.mxu0 0.0
      %3074 = vmatpush.msra.mxu0 0.0
      %3075 = vmatpush.msra.mxu0 0.0
      %3076 = vmatpush.msra.mxu0 0.0
      %3077 = vmatpush.msra.mxu0 %v3040
      %3078 = vmatmul.f32.gmra.mxu0 %v3036
      %v3079 = vpop.f32.mrf.mxu0
      %v3080 = vadd.f32 0.0, %v3079
      %3081 = vdwg.mxu0
      %v3082 = vadd.f32 %v3009, %v3060
      %v3083 = vadd.f32 %v3010, %v3080
      %v3084 = vld [vmem:[%s7] sm:$0xff]
      %v3085 = vld [vmem:[%s7 + $0x8] sm:$0xff]
      %v3086 = vld [vmem:[%s7 + $0x10] sm:$0xff]
      %v3087 = vld [vmem:[%s7 + $0x18] sm:$0xff]
      %v3088 = vld [vmem:[%s7 + $0x20] sm:$0xff]
      %v3089 = vld [vmem:[%s7 + $0x28] sm:$0xff]
      %v3090 = vld [vmem:[%s7 + $0x30] sm:$0xff]
      %v3091 = vld [vmem:[%s7 + $0x38] sm:$0xff]
      %v3092 = vld [vmem:[%s7 + $0x40] sm:$0xff]
      %v3093 = vld [vmem:[%s7 + $0x48] sm:$0xff]
      %v3094 = vld [vmem:[%s7 + $0x50] sm:$0xff]
      %v3095 = vld [vmem:[%s7 + $0x58] sm:$0xff]
      %v3096 = vld [vmem:[%s7 + $0x60] sm:$0xff]
      %v3097 = vld [vmem:[%s7 + $0x68] sm:$0xff]
      %v3098 = vld [vmem:[%s7 + $0x70] sm:$0xff]
      %v3099 = vld [vmem:[%s7 + $0x78] sm:$0xff]
      %v3100 = vld [vmem:[%s7 + $0x80] sm:$0xff]
      %v3101 = vld [vmem:[%s7 + $0x88] sm:$0xff]
      %v3102 = vld [vmem:[%s7 + $0x90] sm:$0xff]
      %v3103 = vld [vmem:[%s7 + $0x98] sm:$0xff]
      %v3104 = vld [vmem:[%s7 + $0xa0] sm:$0xff]
      %v3105 = vld [vmem:[%s7 + $0xa8] sm:$0xff]
      %v3106 = vld [vmem:[%s7 + $0xb0] sm:$0xff]
      %v3107 = vld [vmem:[%s7 + $0xb8] sm:$0xff]
      %v3108 = vld [vmem:[%s7 + $0xc0] sm:$0xff]
      %v3109 = vld [vmem:[%s7 + $0xc8] sm:$0xff]
      %v3110 = vld [vmem:[%s7 + $0xd0] sm:$0xff]
      %v3111 = vld [vmem:[%s7 + $0xd8] sm:$0xff]
      %v3112 = vld [vmem:[%s7 + $0xe0] sm:$0xff]
      %v3113 = vld [vmem:[%s7 + $0xe8] sm:$0xff]
      %v3114 = vld [vmem:[%s7 + $0xf0] sm:$0xff]
      %v3115 = vld [vmem:[%s7 + $0xf8] sm:$0xff]
      %3116 = vmatpush.msra.mxu0 %v3099
      %3117 = vmatpush.msra.mxu0 %v3098
      %3118 = vmatpush.msra.mxu0 %v3097
      %3119 = vmatpush.msra.mxu0 %v3096
      %3120 = vmatpush.msra.mxu0 %v3095
      %3121 = vmatpush.msra.mxu0 %v3094
      %3122 = vmatpush.msra.mxu0 %v3093
      %3123 = vmatpush.msra.mxu0 %v3092
      %3124 = vmatpush.msra.mxu0 %v3091
      %3125 = vmatpush.msra.mxu0 %v3090
      %3126 = vmatpush.msra.mxu0 %v3089
      %3127 = vmatpush.msra.mxu0 %v3088
      %3128 = vmatpush.msra.mxu0 %v3087
      %3129 = vmatpush.msra.mxu0 %v3086
      %3130 = vmatpush.msra.mxu0 %v3085
      %3131 = vmatpush.msra.mxu0 %v3084
      %3132 = vmatmul.f32.gmra.mxu0 %v3082
      %v3133 = vpop.f32.mrf.mxu0
      %v3134 = vadd.f32 0.0, %v3133
      %3135 = vdwg.mxu0
      %3136 = vmatpush.msra.mxu0 %v3115
      %3137 = vmatpush.msra.mxu0 %v3114
      %3138 = vmatpush.msra.mxu0 %v3113
      %3139 = vmatpush.msra.mxu0 %v3112
      %3140 = vmatpush.msra.mxu0 %v3111
      %3141 = vmatpush.msra.mxu0 %v3110
      %3142 = vmatpush.msra.mxu0 %v3109
      %3143 = vmatpush.msra.mxu0 %v3108
      %3144 = vmatpush.msra.mxu0 %v3107
      %3145 = vmatpush.msra.mxu0 %v3106
      %3146 = vmatpush.msra.mxu0 %v3105
      %3147 = vmatpush.msra.mxu0 %v3104
      %3148 = vmatpush.msra.mxu0 %v3103
      %3149 = vmatpush.msra.mxu0 %v3102
      %3150 = vmatpush.msra.mxu0 %v3101
      %3151 = vmatpush.msra.mxu0 %v3100
      %3152 = vmatmul.f32.gmra.mxu0 %v3083
      %v3153 = vpop.f32.mrf.mxu0
      %v3154 = vadd.f32 %v3134, %v3153
      %3155 = vdwg.mxu0
      %3156 = vmatpush.msra.mxu0 %v3099
      %3157 = vmatpush.msra.mxu0 %v3098
      %3158 = vmatpush.msra.mxu0 %v3097
      %3159 = vmatpush.msra.mxu0 %v3096
      %3160 = vmatpush.msra.mxu0 %v3095
      %3161 = vmatpush.msra.mxu0 %v3094
      %3162 = vmatpush.msra.mxu0 %v3093
      %3163 = vmatpush.msra.mxu0 %v3092
      %3164 = vmatpush.msra.mxu0 %v3091
      %3165 = vmatpush.msra.mxu0 %v3090
      %3166 = vmatpush.msra.mxu0 %v3089
      %3167 = vmatpush.msra.mxu0 %v3088
      %3168 = vmatpush.msra.mxu0 %v3087
      %3169 = vmatpush.msra.mxu0 %v3086
      %3170 = vmatpush.msra.mxu0 %v3085
      %3171 = vmatpush.msra.mxu0 %v3084
      %3172 = vmatmul.f32.gmra.mxu0 %v2461
      %v3173 = vpop.f32.mrf.mxu0
      %v3174 = vadd.f32 0.0, %v3173
      %3175 = vdwg.mxu0
      %3176 = vmatpush.msra.mxu0 %v3115
      %3177 = vmatpush.msra.mxu0 %v3114
      %3178 = vmatpush.msra.mxu0 %v3113
      %3179 = vmatpush.msra.mxu0 %v3112
      %3180 = vmatpush.msra.mxu0 %v3111
      %3181 = vmatpush.msra.mxu0 %v3110
      %3182 = vmatpush.msra.mxu0 %v3109
      %3183 = vmatpush.msra.mxu0 %v3108
      %3184 = vmatpush.msra.mxu0 %v3107
      %3185 = vmatpush.msra.mxu0 %v3106
      %3186 = vmatpush.msra.mxu0 %v3105
      %3187 = vmatpush.msra.mxu0 %v3104
      %3188 = vmatpush.msra.mxu0 %v3103
      %3189 = vmatpush.msra.mxu0 %v3102
      %3190 = vmatpush.msra.mxu0 %v3101
      %3191 = vmatpush.msra.mxu0 %v3100
      %3192 = vmatmul.f32.gmra.mxu0 %v2462
      %v3193 = vpop.f32.mrf.mxu0
      %v3194 = vadd.f32 %v3174, %v3193
      %3195 = vdwg.mxu0
      %v3196 = vmax.f32 %v3154, 0.0
      %3198 = vrot.lane.b32.xlu0 %v3196, 43
      %v3199 = vpop.permute.xlu0 %3198
      %vm3201 = vcmask 875864
      %3202 = vst.msk [vmem:[#allocation2 + $0x10] sm:$0xff] %vm3201, %v3199
      %v3203 = vld [vmem:[%s13] sm:$0x1]
      %v3204 = vld [vmem:[%s13 + $0x1] sm:$0x1]
      %v3205 = vld [vmem:[#allocation2 + $0x10] sm:$0xff]
      %v3206 = vperm.slane %v3203, 0
      %3208 = vrot.lane.b32.xlu0 %v3206, 34
      %v3209 = vpop.permute.xlu0 %3208
      %v3211 = vmul.f32 %v3205, %v3209
      %v3212 = vld [vmem:[%s5] sm:$0xff]
      %s3213 = scalar_lea.vmem %s5, 8
      %v3214 = vld [vmem:[%s3213] sm:$0xff]
      %3216 = vrot.lane.b32.xlu0 %v3205, 93
      %v3217 = vpop.permute.xlu0 %3216
      %vm3219 = vcmask 64512
      %v3221 = vsel %vm3219, %v3214, 0
      %3223 = vmatpush.msra.mxu0 0.0
      %3224 = vmatpush.msra.mxu0 0.0
      %3225 = vmatpush.msra.mxu0 0.0
      %3226 = vmatpush.msra.mxu0 0.0
      %3227 = vmatpush.msra.mxu0 0.0
      %3228 = vmatpush.msra.mxu0 0.0
      %3229 = vmatpush.msra.mxu0 0.0
      %3230 = vmatpush.msra.mxu0 0.0
      %3231 = vmatpush.msra.mxu0 0.0
      %3232 = vmatpush.msra.mxu0 0.0
      %3233 = vmatpush.msra.mxu0 0.0
      %3234 = vmatpush.msra.mxu0 0.0
      %3235 = vmatpush.msra.mxu0 0.0
      %3236 = vmatpush.msra.mxu0 0.0
      %3237 = vmatpush.msra.mxu0 0.0
      %3238 = vmatpush.msra.mxu0 %v3217
      %3239 = vmatmul.f32.gmra.mxu0 %v3221
      %v3240 = vpop.f32.mrf.mxu0
      %v3241 = vadd.f32 0.0, %v3240
      %3242 = vdwg.mxu0
      %3244 = vrot.lane.b32.xlu0 %v3211, 94
      %v3245 = vpop.permute.xlu0 %3244
      %v3248 = vsel %vm3219, %v3212, 0
      %3250 = vmatpush.msra.mxu0 0.0
      %3251 = vmatpush.msra.mxu0 0.0
      %3252 = vmatpush.msra.mxu0 0.0
      %3253 = vmatpush.msra.mxu0 0.0
      %3254 = vmatpush.msra.mxu0 0.0
      %3255 = vmatpush.msra.mxu0 0.0
      %3256 = vmatpush.msra.mxu0 0.0
      %3257 = vmatpush.msra.mxu0 0.0
      %3258 = vmatpush.msra.mxu0 0.0
      %3259 = vmatpush.msra.mxu0 0.0
      %3260 = vmatpush.msra.mxu0 0.0
      %3261 = vmatpush.msra.mxu0 0.0
      %3262 = vmatpush.msra.mxu0 0.0
      %3263 = vmatpush.msra.mxu0 0.0
      %3264 = vmatpush.msra.mxu0 0.0
      %3265 = vmatpush.msra.mxu0 %v3245
      %3266 = vmatmul.f32.gmra.mxu0 %v3248
      %v3267 = vpop.f32.mrf.mxu0
      %v3268 = vadd.f32 %v3241, %v3267
      %3269 = vdwg.mxu0
      %v3270 = vperm.slane %v3204, 0
      %3272 = vrot.lane.b32.xlu0 %v3270, 36
      %v3273 = vpop.permute.xlu0 %3272
      %v3275 = vmul.f32 %v3205, %v3273
      %s3276 = scalar_lea.vmem %s5, 16
      %v3277 = vld [vmem:[%s3276] sm:$0xff]
      %3279 = vrot.lane.b32.xlu0 %v3275, 92
      %v3280 = vpop.permute.xlu0 %3279
      %v3283 = vsel %vm3219, %v3277, 0
      %3285 = vmatpush.msra.mxu0 0.0
      %3286 = vmatpush.msra.mxu0 0.0
      %3287 = vmatpush.msra.mxu0 0.0
      %3288 = vmatpush.msra.mxu0 0.0
      %3289 = vmatpush.msra.mxu0 0.0
      %3290 = vmatpush.msra.mxu0 0.0
      %3291 = vmatpush.msra.mxu0 0.0
      %3292 = vmatpush.msra.mxu0 0.0
      %3293 = vmatpush.msra.mxu0 0.0
      %3294 = vmatpush.msra.mxu0 0.0
      %3295 = vmatpush.msra.mxu0 0.0
      %3296 = vmatpush.msra.mxu0 0.0
      %3297 = vmatpush.msra.mxu0 0.0
      %3298 = vmatpush.msra.mxu0 0.0
      %3299 = vmatpush.msra.mxu0 0.0
      %3300 = vmatpush.msra.mxu0 %v3280
      %3301 = vmatmul.f32.gmra.mxu0 %v3283
      %v3302 = vpop.f32.mrf.mxu0
      %v3303 = vadd.f32 0.0, %v3302
      %3304 = vdwg.mxu0
      %v3305 = vadd.f32 %v3268, %v3303
      %3306 = vrot.lane.b32.xlu0 %v3206, 42
      %v3307 = vpop.permute.xlu0 %3306
      %v3309 = vmul.f32 %v3205, %v3307
      %s3310 = scalar_lea.vmem %s5, 24
      %v3311 = vld [vmem:[%s3310] sm:$0xff]
      %3313 = vrot.lane.b32.xlu0 %v3309, 86
      %v3314 = vpop.permute.xlu0 %3313
      %v3317 = vsel %vm3219, %v3311, 0
      %3319 = vmatpush.msra.mxu0 0.0
      %3320 = vmatpush.msra.mxu0 0.0
      %3321 = vmatpush.msra.mxu0 0.0
      %3322 = vmatpush.msra.mxu0 0.0
      %3323 = vmatpush.msra.mxu0 0.0
      %3324 = vmatpush.msra.mxu0 0.0
      %3325 = vmatpush.msra.mxu0 0.0
      %3326 = vmatpush.msra.mxu0 0.0
      %3327 = vmatpush.msra.mxu0 0.0
      %3328 = vmatpush.msra.mxu0 0.0
      %3329 = vmatpush.msra.mxu0 0.0
      %3330 = vmatpush.msra.mxu0 0.0
      %3331 = vmatpush.msra.mxu0 0.0
      %3332 = vmatpush.msra.mxu0 0.0
      %3333 = vmatpush.msra.mxu0 0.0
      %3334 = vmatpush.msra.mxu0 %v3314
      %3335 = vmatmul.f32.gmra.mxu0 %v3317
      %v3336 = vpop.f32.mrf.mxu0
      %v3337 = vadd.f32 0.0, %v3336
      %3338 = vdwg.mxu0
      %v3339 = vadd.f32 %v3305, %v3337
      %s3340 = scalar_lea.vmem %s5, 32
      %v3341 = vld [vmem:[%s3340] sm:$0xff]
      %3342 = vrot.lane.b32.xlu0 %v3205, 85
      %v3343 = vpop.permute.xlu0 %3342
      %v3346 = vsel %vm3219, %v3341, 0
      %3348 = vmatpush.msra.mxu0 0.0
      %3349 = vmatpush.msra.mxu0 0.0
      %3350 = vmatpush.msra.mxu0 0.0
      %3351 = vmatpush.msra.mxu0 0.0
      %3352 = vmatpush.msra.mxu0 0.0
      %3353 = vmatpush.msra.mxu0 0.0
      %3354 = vmatpush.msra.mxu0 0.0
      %3355 = vmatpush.msra.mxu0 0.0
      %3356 = vmatpush.msra.mxu0 0.0
      %3357 = vmatpush.msra.mxu0 0.0
      %3358 = vmatpush.msra.mxu0 0.0
      %3359 = vmatpush.msra.mxu0 0.0
      %3360 = vmatpush.msra.mxu0 0.0
      %3361 = vmatpush.msra.mxu0 0.0
      %3362 = vmatpush.msra.mxu0 0.0
      %3363 = vmatpush.msra.mxu0 %v3343
      %3364 = vmatmul.f32.gmra.mxu0 %v3346
      %v3365 = vpop.f32.mrf.mxu0
      %v3366 = vadd.f32 0.0, %v3365
      %3367 = vdwg.mxu0
      %v3368 = vadd.f32 %v3339, %v3366
      %3369 = vrot.lane.b32.xlu0 %v3270, 44
      %v3370 = vpop.permute.xlu0 %3369
      %v3372 = vmul.f32 %v3205, %v3370
      %s3373 = scalar_lea.vmem %s5, 40
      %v3374 = vld [vmem:[%s3373] sm:$0xff]
      %3376 = vrot.lane.b32.xlu0 %v3372, 84
      %v3377 = vpop.permute.xlu0 %3376
      %v3380 = vsel %vm3219, %v3374, 0
      %3382 = vmatpush.msra.mxu0 0.0
      %3383 = vmatpush.msra.mxu0 0.0
      %3384 = vmatpush.msra.mxu0 0.0
      %3385 = vmatpush.msra.mxu0 0.0
      %3386 = vmatpush.msra.mxu0 0.0
      %3387 = vmatpush.msra.mxu0 0.0
      %3388 = vmatpush.msra.mxu0 0.0
      %3389 = vmatpush.msra.mxu0 0.0
      %3390 = vmatpush.msra.mxu0 0.0
      %3391 = vmatpush.msra.mxu0 0.0
      %3392 = vmatpush.msra.mxu0 0.0
      %3393 = vmatpush.msra.mxu0 0.0
      %3394 = vmatpush.msra.mxu0 0.0
      %3395 = vmatpush.msra.mxu0 0.0
      %3396 = vmatpush.msra.mxu0 0.0
      %3397 = vmatpush.msra.mxu0 %v3377
      %3398 = vmatmul.f32.gmra.mxu0 %v3380
      %v3399 = vpop.f32.mrf.mxu0
      %v3400 = vadd.f32 0.0, %v3399
      %3401 = vdwg.mxu0
      %v3402 = vadd.f32 %v3368, %v3400
      %3403 = vrot.lane.b32.xlu0 %v3206, 50
      %v3404 = vpop.permute.xlu0 %3403
      %v3406 = vmul.f32 %v3205, %v3404
      %s3407 = scalar_lea.vmem %s5, 48
      %v3408 = vld [vmem:[%s3407] sm:$0xff]
      %3410 = vrot.lane.b32.xlu0 %v3406, 78
      %v3411 = vpop.permute.xlu0 %3410
      %v3414 = vsel %vm3219, %v3408, 0
      %3416 = vmatpush.msra.mxu0 0.0
      %3417 = vmatpush.msra.mxu0 0.0
      %3418 = vmatpush.msra.mxu0 0.0
      %3419 = vmatpush.msra.mxu0 0.0
      %3420 = vmatpush.msra.mxu0 0.0
      %3421 = vmatpush.msra.mxu0 0.0
      %3422 = vmatpush.msra.mxu0 0.0
      %3423 = vmatpush.msra.mxu0 0.0
      %3424 = vmatpush.msra.mxu0 0.0
      %3425 = vmatpush.msra.mxu0 0.0
      %3426 = vmatpush.msra.mxu0 0.0
      %3427 = vmatpush.msra.mxu0 0.0
      %3428 = vmatpush.msra.mxu0 0.0
      %3429 = vmatpush.msra.mxu0 0.0
      %3430 = vmatpush.msra.mxu0 0.0
      %3431 = vmatpush.msra.mxu0 %v3411
      %3432 = vmatmul.f32.gmra.mxu0 %v3414
      %v3433 = vpop.f32.mrf.mxu0
      %v3434 = vadd.f32 0.0, %v3433
      %3435 = vdwg.mxu0
      %v3436 = vadd.f32 %v3402, %v3434
      %s3437 = scalar_lea.vmem %s5, 56
      %v3438 = vld [vmem:[%s3437] sm:$0xff]
      %3439 = vrot.lane.b32.xlu0 %v3205, 77
      %v3440 = vpop.permute.xlu0 %3439
      %v3443 = vsel %vm3219, %v3438, 0
      %3445 = vmatpush.msra.mxu0 0.0
      %3446 = vmatpush.msra.mxu0 0.0
      %3447 = vmatpush.msra.mxu0 0.0
      %3448 = vmatpush.msra.mxu0 0.0
      %3449 = vmatpush.msra.mxu0 0.0
      %3450 = vmatpush.msra.mxu0 0.0
      %3451 = vmatpush.msra.mxu0 0.0
      %3452 = vmatpush.msra.mxu0 0.0
      %3453 = vmatpush.msra.mxu0 0.0
      %3454 = vmatpush.msra.mxu0 0.0
      %3455 = vmatpush.msra.mxu0 0.0
      %3456 = vmatpush.msra.mxu0 0.0
      %3457 = vmatpush.msra.mxu0 0.0
      %3458 = vmatpush.msra.mxu0 0.0
      %3459 = vmatpush.msra.mxu0 0.0
      %3460 = vmatpush.msra.mxu0 %v3440
      %3461 = vmatmul.f32.gmra.mxu0 %v3443
      %v3462 = vpop.f32.mrf.mxu0
      %v3463 = vadd.f32 0.0, %v3462
      %3464 = vdwg.mxu0
      %v3465 = vadd.f32 %v3436, %v3463
      %3466 = vrot.lane.b32.xlu0 %v3270, 52
      %v3467 = vpop.permute.xlu0 %3466
      %v3469 = vmul.f32 %v3205, %v3467
      %s3470 = scalar_lea.vmem %s5, 64
      %v3471 = vld [vmem:[%s3470] sm:$0xff]
      %3473 = vrot.lane.b32.xlu0 %v3469, 76
      %v3474 = vpop.permute.xlu0 %3473
      %v3477 = vsel %vm3219, %v3471, 0
      %3479 = vmatpush.msra.mxu0 0.0
      %3480 = vmatpush.msra.mxu0 0.0
      %3481 = vmatpush.msra.mxu0 0.0
      %3482 = vmatpush.msra.mxu0 0.0
      %3483 = vmatpush.msra.mxu0 0.0
      %3484 = vmatpush.msra.mxu0 0.0
      %3485 = vmatpush.msra.mxu0 0.0
      %3486 = vmatpush.msra.mxu0 0.0
      %3487 = vmatpush.msra.mxu0 0.0
      %3488 = vmatpush.msra.mxu0 0.0
      %3489 = vmatpush.msra.mxu0 0.0
      %3490 = vmatpush.msra.mxu0 0.0
      %3491 = vmatpush.msra.mxu0 0.0
      %3492 = vmatpush.msra.mxu0 0.0
      %3493 = vmatpush.msra.mxu0 0.0
      %3494 = vmatpush.msra.mxu0 %v3474
      %3495 = vmatmul.f32.gmra.mxu0 %v3477
      %v3496 = vpop.f32.mrf.mxu0
      %v3497 = vadd.f32 0.0, %v3496
      %3498 = vdwg.mxu0
      %v3499 = vadd.f32 %v3465, %v3497
      %v3500 = vld [vmem:[%s6] sm:$0xff]
      %v3502 = vsel %vm1252, %v3500, 0
      %v3505 = vsel %vm1256, %v3194, 0
      %3507 = vmatpush.msra.mxu0 0.0
      %3508 = vmatpush.msra.mxu0 0.0
      %3509 = vmatpush.msra.mxu0 0.0
      %3510 = vmatpush.msra.mxu0 0.0
      %3511 = vmatpush.msra.mxu0 0.0
      %3512 = vmatpush.msra.mxu0 0.0
      %3513 = vmatpush.msra.mxu0 0.0
      %3514 = vmatpush.msra.mxu0 0.0
      %3515 = vmatpush.msra.mxu0 0.0
      %3516 = vmatpush.msra.mxu0 0.0
      %3517 = vmatpush.msra.mxu0 0.0
      %3518 = vmatpush.msra.mxu0 0.0
      %3519 = vmatpush.msra.mxu0 0.0
      %3520 = vmatpush.msra.mxu0 0.0
      %3521 = vmatpush.msra.mxu0 0.0
      %3522 = vmatpush.msra.mxu0 %v3505
      %3523 = vmatmul.f32.gmra.mxu0 %v3502
      %v3524 = vpop.f32.mrf.mxu0
      %v3525 = vadd.f32 0.0, %v3524
      %3526 = vdwg.mxu0
      %v3527 = vadd.f32 %v3499, %v3525
      %v3528 = vmax.f32 %v3527, 0.0
      %3530 = vrot.lane.b32.xlu0 %v3528, 43
      %v3531 = vpop.permute.xlu0 %3530
      %3533 = vst.msk [vmem:[#allocation2 + $0x10] sm:$0xff] %vm3201, %v3531
      %v3534 = vld [vmem:[%s13] sm:$0x1]
      %v3535 = vld [vmem:[%s13 + $0x1] sm:$0x1]
      %v3536 = vld [vmem:[#allocation2 + $0x10] sm:$0xff]
      %v3537 = vperm.slane %v3534, 0
      %3539 = vrot.lane.b32.xlu0 %v3537, 34
      %v3540 = vpop.permute.xlu0 %3539
      %v3542 = vmul.f32 %v3536, %v3540
      %v3543 = vld [vmem:[%s8] sm:$0xff]
      %v3544 = vld [vmem:[%s8 + $0x8] sm:$0xff]
      %s3545 = scalar_lea.vmem %s8, 16
      %v3546 = vld [vmem:[%s3545] sm:$0xff]
      %v3547 = vld [vmem:[%s3545 + $0x8] sm:$0xff]
      %3549 = vrot.lane.b32.xlu0 %v3536, 93
      %v3550 = vpop.permute.xlu0 %3549
      %v3553 = vsel %vm3219, %v3546, 0
      %v3556 = vsel %vm3219, %v3547, 0
      %3558 = vmatpush.msra.mxu0 0.0
      %3559 = vmatpush.msra.mxu0 0.0
      %3560 = vmatpush.msra.mxu0 0.0
      %3561 = vmatpush.msra.mxu0 0.0
      %3562 = vmatpush.msra.mxu0 0.0
      %3563 = vmatpush.msra.mxu0 0.0
      %3564 = vmatpush.msra.mxu0 0.0
      %3565 = vmatpush.msra.mxu0 0.0
      %3566 = vmatpush.msra.mxu0 0.0
      %3567 = vmatpush.msra.mxu0 0.0
      %3568 = vmatpush.msra.mxu0 0.0
      %3569 = vmatpush.msra.mxu0 0.0
      %3570 = vmatpush.msra.mxu0 0.0
      %3571 = vmatpush.msra.mxu0 0.0
      %3572 = vmatpush.msra.mxu0 0.0
      %3573 = vmatpush.msra.mxu0 %v3550
      %3574 = vmatmul.f32.gmra.mxu0 %v3553
      %v3575 = vpop.f32.mrf.mxu0
      %v3576 = vadd.f32 0.0, %v3575
      %3577 = vmatmul.f32.gmra.mxu0 %v3556
      %v3578 = vpop.f32.mrf.mxu0
      %v3579 = vadd.f32 0.0, %v3578
      %3580 = vdwg.mxu0
      %3582 = vrot.lane.b32.xlu0 %v3542, 94
      %v3583 = vpop.permute.xlu0 %3582
      %v3586 = vsel %vm3219, %v3543, 0
      %v3589 = vsel %vm3219, %v3544, 0
      %3591 = vmatpush.msra.mxu0 0.0
      %3592 = vmatpush.msra.mxu0 0.0
      %3593 = vmatpush.msra.mxu0 0.0
      %3594 = vmatpush.msra.mxu0 0.0
      %3595 = vmatpush.msra.mxu0 0.0
      %3596 = vmatpush.msra.mxu0 0.0
      %3597 = vmatpush.msra.mxu0 0.0
      %3598 = vmatpush.msra.mxu0 0.0
      %3599 = vmatpush.msra.mxu0 0.0
      %3600 = vmatpush.msra.mxu0 0.0
      %3601 = vmatpush.msra.mxu0 0.0
      %3602 = vmatpush.msra.mxu0 0.0
      %3603 = vmatpush.msra.mxu0 0.0
      %3604 = vmatpush.msra.mxu0 0.0
      %3605 = vmatpush.msra.mxu0 0.0
      %3606 = vmatpush.msra.mxu0 %v3583
      %3607 = vmatmul.f32.gmra.mxu0 %v3586
      %v3608 = vpop.f32.mrf.mxu0
      %v3609 = vadd.f32 %v3576, %v3608
      %3610 = vmatmul.f32.gmra.mxu0 %v3589
      %v3611 = vpop.f32.mrf.mxu0
      %v3612 = vadd.f32 %v3579, %v3611
      %3613 = vdwg.mxu0
      %v3614 = vperm.slane %v3535, 0
      %3616 = vrot.lane.b32.xlu0 %v3614, 36
      %v3617 = vpop.permute.xlu0 %3616
      %v3619 = vmul.f32 %v3536, %v3617
      %s3620 = scalar_lea.vmem %s8, 32
      %v3621 = vld [vmem:[%s3620] sm:$0xff]
      %v3622 = vld [vmem:[%s3620 + $0x8] sm:$0xff]
      %3624 = vrot.lane.b32.xlu0 %v3619, 92
      %v3625 = vpop.permute.xlu0 %3624
      %v3628 = vsel %vm3219, %v3621, 0
      %v3631 = vsel %vm3219, %v3622, 0
      %3633 = vmatpush.msra.mxu0 0.0
      %3634 = vmatpush.msra.mxu0 0.0
      %3635 = vmatpush.msra.mxu0 0.0
      %3636 = vmatpush.msra.mxu0 0.0
      %3637 = vmatpush.msra.mxu0 0.0
      %3638 = vmatpush.msra.mxu0 0.0
      %3639 = vmatpush.msra.mxu0 0.0
      %3640 = vmatpush.msra.mxu0 0.0
      %3641 = vmatpush.msra.mxu0 0.0
      %3642 = vmatpush.msra.mxu0 0.0
      %3643 = vmatpush.msra.mxu0 0.0
      %3644 = vmatpush.msra.mxu0 0.0
      %3645 = vmatpush.msra.mxu0 0.0
      %3646 = vmatpush.msra.mxu0 0.0
      %3647 = vmatpush.msra.mxu0 0.0
      %3648 = vmatpush.msra.mxu0 %v3625
      %3649 = vmatmul.f32.gmra.mxu0 %v3628
      %v3650 = vpop.f32.mrf.mxu0
      %v3651 = vadd.f32 0.0, %v3650
      %3652 = vmatmul.f32.gmra.mxu0 %v3631
      %v3653 = vpop.f32.mrf.mxu0
      %v3654 = vadd.f32 0.0, %v3653
      %3655 = vdwg.mxu0
      %v3656 = vadd.f32 %v3609, %v3651
      %v3657 = vadd.f32 %v3612, %v3654
      %3658 = vrot.lane.b32.xlu0 %v3537, 42
      %v3659 = vpop.permute.xlu0 %3658
      %v3661 = vmul.f32 %v3536, %v3659
      %s3662 = scalar_lea.vmem %s8, 48
      %v3663 = vld [vmem:[%s3662] sm:$0xff]
      %v3664 = vld [vmem:[%s3662 + $0x8] sm:$0xff]
      %3666 = vrot.lane.b32.xlu0 %v3661, 86
      %v3667 = vpop.permute.xlu0 %3666
      %v3670 = vsel %vm3219, %v3663, 0
      %v3673 = vsel %vm3219, %v3664, 0
      %3675 = vmatpush.msra.mxu0 0.0
      %3676 = vmatpush.msra.mxu0 0.0
      %3677 = vmatpush.msra.mxu0 0.0
      %3678 = vmatpush.msra.mxu0 0.0
      %3679 = vmatpush.msra.mxu0 0.0
      %3680 = vmatpush.msra.mxu0 0.0
      %3681 = vmatpush.msra.mxu0 0.0
      %3682 = vmatpush.msra.mxu0 0.0
      %3683 = vmatpush.msra.mxu0 0.0
      %3684 = vmatpush.msra.mxu0 0.0
      %3685 = vmatpush.msra.mxu0 0.0
      %3686 = vmatpush.msra.mxu0 0.0
      %3687 = vmatpush.msra.mxu0 0.0
      %3688 = vmatpush.msra.mxu0 0.0
      %3689 = vmatpush.msra.mxu0 0.0
      %3690 = vmatpush.msra.mxu0 %v3667
      %3691 = vmatmul.f32.gmra.mxu0 %v3670
      %v3692 = vpop.f32.mrf.mxu0
      %v3693 = vadd.f32 0.0, %v3692
      %3694 = vmatmul.f32.gmra.mxu0 %v3673
      %v3695 = vpop.f32.mrf.mxu0
      %v3696 = vadd.f32 0.0, %v3695
      %3697 = vdwg.mxu0
      %v3698 = vadd.f32 %v3656, %v3693
      %v3699 = vadd.f32 %v3657, %v3696
      %s3700 = scalar_lea.vmem %s8, 64
      %v3701 = vld [vmem:[%s3700] sm:$0xff]
      %v3702 = vld [vmem:[%s3700 + $0x8] sm:$0xff]
      %3703 = vrot.lane.b32.xlu0 %v3536, 85
      %v3704 = vpop.permute.xlu0 %3703
      %v3707 = vsel %vm3219, %v3701, 0
      %v3710 = vsel %vm3219, %v3702, 0
      %3712 = vmatpush.msra.mxu0 0.0
      %3713 = vmatpush.msra.mxu0 0.0
      %3714 = vmatpush.msra.mxu0 0.0
      %3715 = vmatpush.msra.mxu0 0.0
      %3716 = vmatpush.msra.mxu0 0.0
      %3717 = vmatpush.msra.mxu0 0.0
      %3718 = vmatpush.msra.mxu0 0.0
      %3719 = vmatpush.msra.mxu0 0.0
      %3720 = vmatpush.msra.mxu0 0.0
      %3721 = vmatpush.msra.mxu0 0.0
      %3722 = vmatpush.msra.mxu0 0.0
      %3723 = vmatpush.msra.mxu0 0.0
      %3724 = vmatpush.msra.mxu0 0.0
      %3725 = vmatpush.msra.mxu0 0.0
      %3726 = vmatpush.msra.mxu0 0.0
      %3727 = vmatpush.msra.mxu0 %v3704
      %3728 = vmatmul.f32.gmra.mxu0 %v3707
      %v3729 = vpop.f32.mrf.mxu0
      %v3730 = vadd.f32 0.0, %v3729
      %3731 = vmatmul.f32.gmra.mxu0 %v3710
      %v3732 = vpop.f32.mrf.mxu0
      %v3733 = vadd.f32 0.0, %v3732
      %3734 = vdwg.mxu0
      %v3735 = vadd.f32 %v3698, %v3730
      %v3736 = vadd.f32 %v3699, %v3733
      %3737 = vrot.lane.b32.xlu0 %v3614, 44
      %v3738 = vpop.permute.xlu0 %3737
      %v3740 = vmul.f32 %v3536, %v3738
      %s3741 = scalar_lea.vmem %s8, 80
      %v3742 = vld [vmem:[%s3741] sm:$0xff]
      %v3743 = vld [vmem:[%s3741 + $0x8] sm:$0xff]
      %3745 = vrot.lane.b32.xlu0 %v3740, 84
      %v3746 = vpop.permute.xlu0 %3745
      %v3749 = vsel %vm3219, %v3742, 0
      %v3752 = vsel %vm3219, %v3743, 0
      %3754 = vmatpush.msra.mxu0 0.0
      %3755 = vmatpush.msra.mxu0 0.0
      %3756 = vmatpush.msra.mxu0 0.0
      %3757 = vmatpush.msra.mxu0 0.0
      %3758 = vmatpush.msra.mxu0 0.0
      %3759 = vmatpush.msra.mxu0 0.0
      %3760 = vmatpush.msra.mxu0 0.0
      %3761 = vmatpush.msra.mxu0 0.0
      %3762 = vmatpush.msra.mxu0 0.0
      %3763 = vmatpush.msra.mxu0 0.0
      %3764 = vmatpush.msra.mxu0 0.0
      %3765 = vmatpush.msra.mxu0 0.0
      %3766 = vmatpush.msra.mxu0 0.0
      %3767 = vmatpush.msra.mxu0 0.0
      %3768 = vmatpush.msra.mxu0 0.0
      %3769 = vmatpush.msra.mxu0 %v3746
      %3770 = vmatmul.f32.gmra.mxu0 %v3749
      %v3771 = vpop.f32.mrf.mxu0
      %v3772 = vadd.f32 0.0, %v3771
      %3773 = vmatmul.f32.gmra.mxu0 %v3752
      %v3774 = vpop.f32.mrf.mxu0
      %v3775 = vadd.f32 0.0, %v3774
      %3776 = vdwg.mxu0
      %v3777 = vadd.f32 %v3735, %v3772
      %v3778 = vadd.f32 %v3736, %v3775
      %3779 = vrot.lane.b32.xlu0 %v3537, 50
      %v3780 = vpop.permute.xlu0 %3779
      %v3782 = vmul.f32 %v3536, %v3780
      %s3783 = scalar_lea.vmem %s8, 96
      %v3784 = vld [vmem:[%s3783] sm:$0xff]
      %v3785 = vld [vmem:[%s3783 + $0x8] sm:$0xff]
      %3787 = vrot.lane.b32.xlu0 %v3782, 78
      %v3788 = vpop.permute.xlu0 %3787
      %v3791 = vsel %vm3219, %v3784, 0
      %v3794 = vsel %vm3219, %v3785, 0
      %3796 = vmatpush.msra.mxu0 0.0
      %3797 = vmatpush.msra.mxu0 0.0
      %3798 = vmatpush.msra.mxu0 0.0
      %3799 = vmatpush.msra.mxu0 0.0
      %3800 = vmatpush.msra.mxu0 0.0
      %3801 = vmatpush.msra.mxu0 0.0
      %3802 = vmatpush.msra.mxu0 0.0
      %3803 = vmatpush.msra.mxu0 0.0
      %3804 = vmatpush.msra.mxu0 0.0
      %3805 = vmatpush.msra.mxu0 0.0
      %3806 = vmatpush.msra.mxu0 0.0
      %3807 = vmatpush.msra.mxu0 0.0
      %3808 = vmatpush.msra.mxu0 0.0
      %3809 = vmatpush.msra.mxu0 0.0
      %3810 = vmatpush.msra.mxu0 0.0
      %3811 = vmatpush.msra.mxu0 %v3788
      %3812 = vmatmul.f32.gmra.mxu0 %v3791
      %v3813 = vpop.f32.mrf.mxu0
      %v3814 = vadd.f32 0.0, %v3813
      %3815 = vmatmul.f32.gmra.mxu0 %v3794
      %v3816 = vpop.f32.mrf.mxu0
      %v3817 = vadd.f32 0.0, %v3816
      %3818 = vdwg.mxu0
      %v3819 = vadd.f32 %v3777, %v3814
      %v3820 = vadd.f32 %v3778, %v3817
      %s3821 = scalar_lea.vmem %s8, 112
      %v3822 = vld [vmem:[%s3821] sm:$0xff]
      %v3823 = vld [vmem:[%s3821 + $0x8] sm:$0xff]
      %3824 = vrot.lane.b32.xlu0 %v3536, 77
      %v3825 = vpop.permute.xlu0 %3824
      %v3828 = vsel %vm3219, %v3822, 0
      %v3831 = vsel %vm3219, %v3823, 0
      %3833 = vmatpush.msra.mxu0 0.0
      %3834 = vmatpush.msra.mxu0 0.0
      %3835 = vmatpush.msra.mxu0 0.0
      %3836 = vmatpush.msra.mxu0 0.0
      %3837 = vmatpush.msra.mxu0 0.0
      %3838 = vmatpush.msra.mxu0 0.0
      %3839 = vmatpush.msra.mxu0 0.0
      %3840 = vmatpush.msra.mxu0 0.0
      %3841 = vmatpush.msra.mxu0 0.0
      %3842 = vmatpush.msra.mxu0 0.0
      %3843 = vmatpush.msra.mxu0 0.0
      %3844 = vmatpush.msra.mxu0 0.0
      %3845 = vmatpush.msra.mxu0 0.0
      %3846 = vmatpush.msra.mxu0 0.0
      %3847 = vmatpush.msra.mxu0 0.0
      %3848 = vmatpush.msra.mxu0 %v3825
      %3849 = vmatmul.f32.gmra.mxu0 %v3828
      %v3850 = vpop.f32.mrf.mxu0
      %v3851 = vadd.f32 0.0, %v3850
      %3852 = vmatmul.f32.gmra.mxu0 %v3831
      %v3853 = vpop.f32.mrf.mxu0
      %v3854 = vadd.f32 0.0, %v3853
      %3855 = vdwg.mxu0
      %v3856 = vadd.f32 %v3819, %v3851
      %v3857 = vadd.f32 %v3820, %v3854
      %3858 = vrot.lane.b32.xlu0 %v3614, 52
      %v3859 = vpop.permute.xlu0 %3858
      %v3861 = vmul.f32 %v3536, %v3859
      %s3862 = scalar_lea.vmem %s8, 128
      %v3863 = vld [vmem:[%s3862] sm:$0xff]
      %v3864 = vld [vmem:[%s3862 + $0x8] sm:$0xff]
      %3866 = vrot.lane.b32.xlu0 %v3861, 76
      %v3867 = vpop.permute.xlu0 %3866
      %v3870 = vsel %vm3219, %v3863, 0
      %v3873 = vsel %vm3219, %v3864, 0
      %3875 = vmatpush.msra.mxu0 0.0
      %3876 = vmatpush.msra.mxu0 0.0
      %3877 = vmatpush.msra.mxu0 0.0
      %3878 = vmatpush.msra.mxu0 0.0
      %3879 = vmatpush.msra.mxu0 0.0
      %3880 = vmatpush.msra.mxu0 0.0
      %3881 = vmatpush.msra.mxu0 0.0
      %3882 = vmatpush.msra.mxu0 0.0
      %3883 = vmatpush.msra.mxu0 0.0
      %3884 = vmatpush.msra.mxu0 0.0
      %3885 = vmatpush.msra.mxu0 0.0
      %3886 = vmatpush.msra.mxu0 0.0
      %3887 = vmatpush.msra.mxu0 0.0
      %3888 = vmatpush.msra.mxu0 0.0
      %3889 = vmatpush.msra.mxu0 0.0
      %3890 = vmatpush.msra.mxu0 %v3867
      %3891 = vmatmul.f32.gmra.mxu0 %v3870
      %v3892 = vpop.f32.mrf.mxu0
      %v3893 = vadd.f32 0.0, %v3892
      %3894 = vmatmul.f32.gmra.mxu0 %v3873
      %v3895 = vpop.f32.mrf.mxu0
      %v3896 = vadd.f32 0.0, %v3895
      %3897 = vdwg.mxu0
      %v3898 = vadd.f32 %v3856, %v3893
      %v3899 = vadd.f32 %v3857, %v3896
      %v3900 = vld [vmem:[%s11] sm:$0xff]
      %v3901 = vld [vmem:[%s11 + $0x8] sm:$0xff]
      %v3902 = vld [vmem:[%s11 + $0x10] sm:$0xff]
      %v3903 = vld [vmem:[%s11 + $0x18] sm:$0xff]
      %v3904 = vld [vmem:[%s11 + $0x20] sm:$0xff]
      %v3905 = vld [vmem:[%s11 + $0x28] sm:$0xff]
      %v3906 = vld [vmem:[%s11 + $0x30] sm:$0xff]
      %v3907 = vld [vmem:[%s11 + $0x38] sm:$0xff]
      %vm3908 = vcmask 523264
      %v3910 = vsel %vm3908, %v3898, 0
      %v3913 = vsel %vm3908, %v3899, 0
      %3915 = vmatpush.msra.mxu0 0.0
      %3916 = vmatpush.msra.mxu0 0.0
      %3917 = vmatpush.msra.mxu0 0.0
      %3918 = vmatpush.msra.mxu0 0.0
      %3919 = vmatpush.msra.mxu0 0.0
      %3920 = vmatpush.msra.mxu0 0.0
      %3921 = vmatpush.msra.mxu0 0.0
      %3922 = vmatpush.msra.mxu0 0.0
      %3923 = vmatpush.msra.mxu0 %v3907
      %3924 = vmatpush.msra.mxu0 %v3906
      %3925 = vmatpush.msra.mxu0 %v3905
      %3926 = vmatpush.msra.mxu0 %v3904
      %3927 = vmatpush.msra.mxu0 %v3903
      %3928 = vmatpush.msra.mxu0 %v3902
      %3929 = vmatpush.msra.mxu0 %v3901
      %3930 = vmatpush.msra.mxu0 %v3900
      %3931 = vmatmul.f32.gmra.mxu0 %v3910
      %v3932 = vpop.f32.mrf.mxu0
      %v3933 = vadd.f32 0.0, %v3932
      %3934 = vmatmul.f32.gmra.mxu0 %v3913
      %v3935 = vpop.f32.mrf.mxu0
      %v3936 = vadd.f32 0.0, %v3935
      %3937 = vdwg.mxu0
      %v3938 = vsel %vm3908, %v3528, 0
      %3940 = vmatpush.msra.mxu0 0.0
      %3941 = vmatpush.msra.mxu0 0.0
      %3942 = vmatpush.msra.mxu0 0.0
      %3943 = vmatpush.msra.mxu0 0.0
      %3944 = vmatpush.msra.mxu0 0.0
      %3945 = vmatpush.msra.mxu0 0.0
      %3946 = vmatpush.msra.mxu0 0.0
      %3947 = vmatpush.msra.mxu0 0.0
      %3948 = vmatpush.msra.mxu0 %v3907
      %3949 = vmatpush.msra.mxu0 %v3906
      %3950 = vmatpush.msra.mxu0 %v3905
      %3951 = vmatpush.msra.mxu0 %v3904
      %3952 = vmatpush.msra.mxu0 %v3903
      %3953 = vmatpush.msra.mxu0 %v3902
      %3954 = vmatpush.msra.mxu0 %v3901
      %3955 = vmatpush.msra.mxu0 %v3900
      %3956 = vmatmul.f32.gmra.mxu0 %v3938
      %v3957 = vpop.f32.mrf.mxu0
      %v3958 = vadd.f32 0.0, %v3957
      %3959 = vdwg.mxu0
      %v3960 = vmax.f32 %v3933, 0.0
      %v3961 = vmax.f32 %v3936, 0.0
      %3964 = vrot.lane.b32.xlu0 %v3960, 121
      %v3965 = vpop.permute.xlu0 %3964
      %3966 = vrot.lane.b32.xlu0 %v3961, 121
      %v3967 = vpop.permute.xlu0 %3966
      %vm3970 = vcmask 1048520
      %3971 = vst.msk [vmem:[#allocation2 + $0x10] sm:$0xff] %vm3970, %v3965
      %vm3972 = vcmask 72704
      %3973 = vst.msk [vmem:[#allocation2 + $0x18] sm:$0xff] %vm3972, %v3965
      %3974 = vst.msk [vmem:[#allocation2 + $0x30] sm:$0xff] %vm3970, %v3967
      %3975 = vst.msk [vmem:[#allocation2 + $0x38] sm:$0xff] %vm3972, %v3967
      %v3976 = vld [vmem:[%s14] sm:$0x1]
      %v3977 = vld [vmem:[%s14 + $0x1] sm:$0x1]
      %v3978 = vld [vmem:[#allocation2 + $0x10] sm:$0xff]
      %v3979 = vld [vmem:[#allocation2 + $0x18] sm:$0xff]
      %v3980 = vld [vmem:[#allocation2 + $0x30] sm:$0xff]
      %v3981 = vld [vmem:[#allocation2 + $0x38] sm:$0xff]
      %v3982 = vperm.slane %v3976, 0
      %3984 = vrot.lane.b32.xlu0 %v3982, 116
      %v3985 = vpop.permute.xlu0 %3984
      %v3987 = vmul.f32 %v3978, %v3985
      %v3988 = vmul.f32 %v3979, %v3985
      %v3989 = vmul.f32 %v3980, %v3985
      %v3990 = vmul.f32 %v3981, %v3985
      %v3991 = vld [vmem:[%s9] sm:$0xff]
      %v3992 = vld [vmem:[%s9 + $0x8] sm:$0xff]
      %s3993 = scalar_lea.vmem %s9, 16
      %v3994 = vld [vmem:[%s3993] sm:$0xff]
      %v3995 = vld [vmem:[%s3993 + $0x8] sm:$0xff]
      %4000 = vrot.lane.b32.xlu0 %v3978, 11
      %v4001 = vpop.permute.xlu0 %4000
      %4002 = vrot.lane.b32.xlu0 %v3979, 11
      %v4003 = vpop.permute.xlu0 %4002
      %4004 = vrot.lane.b32.xlu0 %v3980, 11
      %v4005 = vpop.permute.xlu0 %4004
      %4006 = vrot.lane.b32.xlu0 %v3981, 11
      %v4007 = vpop.permute.xlu0 %4006
      %vm4008 = vcmask 89088
      %v4009 = vsel %vm4008, %v4001, %v4003
      %v4010 = vsel %vm4008, %v4005, %v4007
      %v4014 = vsel %vm793, %v3994, 0
      %v4017 = vsel %vm793, %v3995, 0
      %4019 = vmatpush.msra.mxu0 0.0
      %4020 = vmatpush.msra.mxu0 0.0
      %4021 = vmatpush.msra.mxu0 0.0
      %4022 = vmatpush.msra.mxu0 0.0
      %4023 = vmatpush.msra.mxu0 0.0
      %4024 = vmatpush.msra.mxu0 0.0
      %4025 = vmatpush.msra.mxu0 0.0
      %4026 = vmatpush.msra.mxu0 0.0
      %4027 = vmatpush.msra.mxu0 0.0
      %4028 = vmatpush.msra.mxu0 0.0
      %4029 = vmatpush.msra.mxu0 0.0
      %4030 = vmatpush.msra.mxu0 0.0
      %4031 = vmatpush.msra.mxu0 0.0
      %4032 = vmatpush.msra.mxu0 0.0
      %4033 = vmatpush.msra.mxu0 %v4010
      %4034 = vmatpush.msra.mxu0 %v4009
      %4035 = vmatmul.f32.gmra.mxu0 %v4014
      %v4036 = vpop.f32.mrf.mxu0
      %v4037 = vadd.f32 0.0, %v4036
      %4038 = vmatmul.f32.gmra.mxu0 %v4017
      %v4039 = vpop.f32.mrf.mxu0
      %v4040 = vadd.f32 0.0, %v4039
      %4041 = vdwg.mxu0
      %4046 = vrot.lane.b32.xlu0 %v3987, 12
      %v4047 = vpop.permute.xlu0 %4046
      %4048 = vrot.lane.b32.xlu0 %v3988, 12
      %v4049 = vpop.permute.xlu0 %4048
      %4050 = vrot.lane.b32.xlu0 %v3989, 12
      %v4051 = vpop.permute.xlu0 %4050
      %4052 = vrot.lane.b32.xlu0 %v3990, 12
      %v4053 = vpop.permute.xlu0 %4052
      %vm4054 = vcmask 97280
      %v4055 = vsel %vm4054, %v4047, %v4049
      %v4056 = vsel %vm4054, %v4051, %v4053
      %v4060 = vsel %vm793, %v3991, 0
      %v4063 = vsel %vm793, %v3992, 0
      %4065 = vmatpush.msra.mxu0 0.0
      %4066 = vmatpush.msra.mxu0 0.0
      %4067 = vmatpush.msra.mxu0 0.0
      %4068 = vmatpush.msra.mxu0 0.0
      %4069 = vmatpush.msra.mxu0 0.0
      %4070 = vmatpush.msra.mxu0 0.0
      %4071 = vmatpush.msra.mxu0 0.0
      %4072 = vmatpush.msra.mxu0 0.0
      %4073 = vmatpush.msra.mxu0 0.0
      %4074 = vmatpush.msra.mxu0 0.0
      %4075 = vmatpush.msra.mxu0 0.0
      %4076 = vmatpush.msra.mxu0 0.0
      %4077 = vmatpush.msra.mxu0 0.0
      %4078 = vmatpush.msra.mxu0 0.0
      %4079 = vmatpush.msra.mxu0 %v4056
      %4080 = vmatpush.msra.mxu0 %v4055
      %4081 = vmatmul.f32.gmra.mxu0 %v4060
      %v4082 = vpop.f32.mrf.mxu0
      %v4083 = vadd.f32 %v4037, %v4082
      %4084 = vmatmul.f32.gmra.mxu0 %v4063
      %v4085 = vpop.f32.mrf.mxu0
      %v4086 = vadd.f32 %v4040, %v4085
      %4087 = vdwg.mxu0
      %v4088 = vperm.slane %v3977, 0
      %4090 = vrot.lane.b32.xlu0 %v4088, 118
      %v4091 = vpop.permute.xlu0 %4090
      %v4093 = vmul.f32 %v3978, %v4091
      %v4094 = vmul.f32 %v3979, %v4091
      %v4095 = vmul.f32 %v3980, %v4091
      %v4096 = vmul.f32 %v3981, %v4091
      %s4097 = scalar_lea.vmem %s9, 32
      %v4098 = vld [vmem:[%s4097] sm:$0xff]
      %v4099 = vld [vmem:[%s4097 + $0x8] sm:$0xff]
      %4104 = vrot.lane.b32.xlu0 %v4093, 10
      %v4105 = vpop.permute.xlu0 %4104
      %4106 = vrot.lane.b32.xlu0 %v4094, 10
      %v4107 = vpop.permute.xlu0 %4106
      %4108 = vrot.lane.b32.xlu0 %v4095, 10
      %v4109 = vpop.permute.xlu0 %4108
      %4110 = vrot.lane.b32.xlu0 %v4096, 10
      %v4111 = vpop.permute.xlu0 %4110
      %vm4112 = vcmask 80896
      %v4113 = vsel %vm4112, %v4105, %v4107
      %v4114 = vsel %vm4112, %v4109, %v4111
      %v4118 = vsel %vm793, %v4098, 0
      %v4121 = vsel %vm793, %v4099, 0
      %4123 = vmatpush.msra.mxu0 0.0
      %4124 = vmatpush.msra.mxu0 0.0
      %4125 = vmatpush.msra.mxu0 0.0
      %4126 = vmatpush.msra.mxu0 0.0
      %4127 = vmatpush.msra.mxu0 0.0
      %4128 = vmatpush.msra.mxu0 0.0
      %4129 = vmatpush.msra.mxu0 0.0
      %4130 = vmatpush.msra.mxu0 0.0
      %4131 = vmatpush.msra.mxu0 0.0
      %4132 = vmatpush.msra.mxu0 0.0
      %4133 = vmatpush.msra.mxu0 0.0
      %4134 = vmatpush.msra.mxu0 0.0
      %4135 = vmatpush.msra.mxu0 0.0
      %4136 = vmatpush.msra.mxu0 0.0
      %4137 = vmatpush.msra.mxu0 %v4114
      %4138 = vmatpush.msra.mxu0 %v4113
      %4139 = vmatmul.f32.gmra.mxu0 %v4118
      %v4140 = vpop.f32.mrf.mxu0
      %v4141 = vadd.f32 0.0, %v4140
      %4142 = vmatmul.f32.gmra.mxu0 %v4121
      %v4143 = vpop.f32.mrf.mxu0
      %v4144 = vadd.f32 0.0, %v4143
      %4145 = vdwg.mxu0
      %v4146 = vadd.f32 %v4083, %v4141
      %v4147 = vadd.f32 %v4086, %v4144
      %4148 = vrot.lane.b32.xlu0 %v3982, 120
      %v4149 = vpop.permute.xlu0 %4148
      %v4151 = vmul.f32 %v3978, %v4149
      %v4152 = vmul.f32 %v3979, %v4149
      %v4153 = vmul.f32 %v3980, %v4149
      %v4154 = vmul.f32 %v3981, %v4149
      %s4155 = scalar_lea.vmem %s9, 48
      %v4156 = vld [vmem:[%s4155] sm:$0xff]
      %v4157 = vld [vmem:[%s4155 + $0x8] sm:$0xff]
      %4162 = vrot.lane.b32.xlu0 %v4151, 8
      %v4163 = vpop.permute.xlu0 %4162
      %4164 = vrot.lane.b32.xlu0 %v4152, 8
      %v4165 = vpop.permute.xlu0 %4164
      %4166 = vrot.lane.b32.xlu0 %v4153, 8
      %v4167 = vpop.permute.xlu0 %4166
      %4168 = vrot.lane.b32.xlu0 %v4154, 8
      %v4169 = vpop.permute.xlu0 %4168
      %v4170 = vsel %vm3219, %v4163, %v4165
      %v4171 = vsel %vm3219, %v4167, %v4169
      %v4175 = vsel %vm793, %v4156, 0
      %v4178 = vsel %vm793, %v4157, 0
      %4180 = vmatpush.msra.mxu0 0.0
      %4181 = vmatpush.msra.mxu0 0.0
      %4182 = vmatpush.msra.mxu0 0.0
      %4183 = vmatpush.msra.mxu0 0.0
      %4184 = vmatpush.msra.mxu0 0.0
      %4185 = vmatpush.msra.mxu0 0.0
      %4186 = vmatpush.msra.mxu0 0.0
      %4187 = vmatpush.msra.mxu0 0.0
      %4188 = vmatpush.msra.mxu0 0.0
      %4189 = vmatpush.msra.mxu0 0.0
      %4190 = vmatpush.msra.mxu0 0.0
      %4191 = vmatpush.msra.mxu0 0.0
      %4192 = vmatpush.msra.mxu0 0.0
      %4193 = vmatpush.msra.mxu0 0.0
      %4194 = vmatpush.msra.mxu0 %v4171
      %4195 = vmatpush.msra.mxu0 %v4170
      %4196 = vmatmul.f32.gmra.mxu0 %v4175
      %v4197 = vpop.f32.mrf.mxu0
      %v4198 = vadd.f32 0.0, %v4197
      %4199 = vmatmul.f32.gmra.mxu0 %v4178
      %v4200 = vpop.f32.mrf.mxu0
      %v4201 = vadd.f32 0.0, %v4200
      %4202 = vdwg.mxu0
      %v4203 = vadd.f32 %v4146, %v4198
      %v4204 = vadd.f32 %v4147, %v4201
      %s4205 = scalar_lea.vmem %s9, 64
      %v4206 = vld [vmem:[%s4205] sm:$0xff]
      %v4207 = vld [vmem:[%s4205 + $0x8] sm:$0xff]
      %4208 = vrot.lane.b32.xlu0 %v3978, 7
      %v4209 = vpop.permute.xlu0 %4208
      %4210 = vrot.lane.b32.xlu0 %v3979, 7
      %v4211 = vpop.permute.xlu0 %4210
      %4212 = vrot.lane.b32.xlu0 %v3980, 7
      %v4213 = vpop.permute.xlu0 %4212
      %4214 = vrot.lane.b32.xlu0 %v3981, 7
      %v4215 = vpop.permute.xlu0 %4214
      %vm4216 = vcmask 56320
      %v4217 = vsel %vm4216, %v4209, %v4211
      %v4218 = vsel %vm4216, %v4213, %v4215
      %v4222 = vsel %vm793, %v4206, 0
      %v4225 = vsel %vm793, %v4207, 0
      %4227 = vmatpush.msra.mxu0 0.0
      %4228 = vmatpush.msra.mxu0 0.0
      %4229 = vmatpush.msra.mxu0 0.0
      %4230 = vmatpush.msra.mxu0 0.0
      %4231 = vmatpush.msra.mxu0 0.0
      %4232 = vmatpush.msra.mxu0 0.0
      %4233 = vmatpush.msra.mxu0 0.0
      %4234 = vmatpush.msra.mxu0 0.0
      %4235 = vmatpush.msra.mxu0 0.0
      %4236 = vmatpush.msra.mxu0 0.0
      %4237 = vmatpush.msra.mxu0 0.0
      %4238 = vmatpush.msra.mxu0 0.0
      %4239 = vmatpush.msra.mxu0 0.0
      %4240 = vmatpush.msra.mxu0 0.0
      %4241 = vmatpush.msra.mxu0 %v4218
      %4242 = vmatpush.msra.mxu0 %v4217
      %4243 = vmatmul.f32.gmra.mxu0 %v4222
      %v4244 = vpop.f32.mrf.mxu0
      %v4245 = vadd.f32 0.0, %v4244
      %4246 = vmatmul.f32.gmra.mxu0 %v4225
      %v4247 = vpop.f32.mrf.mxu0
      %v4248 = vadd.f32 0.0, %v4247
      %4249 = vdwg.mxu0
      %v4250 = vadd.f32 %v4203, %v4245
      %v4251 = vadd.f32 %v4204, %v4248
      %4252 = vrot.lane.b32.xlu0 %v4088, 122
      %v4253 = vpop.permute.xlu0 %4252
      %v4255 = vmul.f32 %v3978, %v4253
      %v4256 = vmul.f32 %v3979, %v4253
      %v4257 = vmul.f32 %v3980, %v4253
      %v4258 = vmul.f32 %v3981, %v4253
      %s4259 = scalar_lea.vmem %s9, 80
      %v4260 = vld [vmem:[%s4259] sm:$0xff]
      %v4261 = vld [vmem:[%s4259 + $0x8] sm:$0xff]
      %4266 = vrot.lane.b32.xlu0 %v4255, 6
      %v4267 = vpop.permute.xlu0 %4266
      %4268 = vrot.lane.b32.xlu0 %v4256, 6
      %v4269 = vpop.permute.xlu0 %4268
      %4270 = vrot.lane.b32.xlu0 %v4257, 6
      %v4271 = vpop.permute.xlu0 %4270
      %4272 = vrot.lane.b32.xlu0 %v4258, 6
      %v4273 = vpop.permute.xlu0 %4272
      %vm4274 = vcmask 48128
      %v4275 = vsel %vm4274, %v4267, %v4269
      %v4276 = vsel %vm4274, %v4271, %v4273
      %v4280 = vsel %vm793, %v4260, 0
      %v4283 = vsel %vm793, %v4261, 0
      %4285 = vmatpush.msra.mxu0 0.0
      %4286 = vmatpush.msra.mxu0 0.0
      %4287 = vmatpush.msra.mxu0 0.0
      %4288 = vmatpush.msra.mxu0 0.0
      %4289 = vmatpush.msra.mxu0 0.0
      %4290 = vmatpush.msra.mxu0 0.0
      %4291 = vmatpush.msra.mxu0 0.0
      %4292 = vmatpush.msra.mxu0 0.0
      %4293 = vmatpush.msra.mxu0 0.0
      %4294 = vmatpush.msra.mxu0 0.0
      %4295 = vmatpush.msra.mxu0 0.0
      %4296 = vmatpush.msra.mxu0 0.0
      %4297 = vmatpush.msra.mxu0 0.0
      %4298 = vmatpush.msra.mxu0 0.0
      %4299 = vmatpush.msra.mxu0 %v4276
      %4300 = vmatpush.msra.mxu0 %v4275
      %4301 = vmatmul.f32.gmra.mxu0 %v4280
      %v4302 = vpop.f32.mrf.mxu0
      %v4303 = vadd.f32 0.0, %v4302
      %4304 = vmatmul.f32.gmra.mxu0 %v4283
      %v4305 = vpop.f32.mrf.mxu0
      %v4306 = vadd.f32 0.0, %v4305
      %4307 = vdwg.mxu0
      %v4308 = vadd.f32 %v4250, %v4303
      %v4309 = vadd.f32 %v4251, %v4306
      %4310 = vrot.lane.b32.xlu0 %v3982, 124
      %v4311 = vpop.permute.xlu0 %4310
      %v4313 = vmul.f32 %v3978, %v4311
      %v4314 = vmul.f32 %v3979, %v4311
      %v4315 = vmul.f32 %v3980, %v4311
      %v4316 = vmul.f32 %v3981, %v4311
      %s4317 = scalar_lea.vmem %s9, 96
      %v4318 = vld [vmem:[%s4317] sm:$0xff]
      %v4319 = vld [vmem:[%s4317 + $0x8] sm:$0xff]
      %4324 = vrot.lane.b32.xlu0 %v4313, 4
      %v4325 = vpop.permute.xlu0 %4324
      %4326 = vrot.lane.b32.xlu0 %v4314, 4
      %v4327 = vpop.permute.xlu0 %4326
      %4328 = vrot.lane.b32.xlu0 %v4315, 4
      %v4329 = vpop.permute.xlu0 %4328
      %4330 = vrot.lane.b32.xlu0 %v4316, 4
      %v4331 = vpop.permute.xlu0 %4330
      %v4332 = vsel %vm1252, %v4325, %v4327
      %v4333 = vsel %vm1252, %v4329, %v4331
      %v4337 = vsel %vm793, %v4318, 0
      %v4340 = vsel %vm793, %v4319, 0
      %4342 = vmatpush.msra.mxu0 0.0
      %4343 = vmatpush.msra.mxu0 0.0
      %4344 = vmatpush.msra.mxu0 0.0
      %4345 = vmatpush.msra.mxu0 0.0
      %4346 = vmatpush.msra.mxu0 0.0
      %4347 = vmatpush.msra.mxu0 0.0
      %4348 = vmatpush.msra.mxu0 0.0
      %4349 = vmatpush.msra.mxu0 0.0
      %4350 = vmatpush.msra.mxu0 0.0
      %4351 = vmatpush.msra.mxu0 0.0
      %4352 = vmatpush.msra.mxu0 0.0
      %4353 = vmatpush.msra.mxu0 0.0
      %4354 = vmatpush.msra.mxu0 0.0
      %4355 = vmatpush.msra.mxu0 0.0
      %4356 = vmatpush.msra.mxu0 %v4333
      %4357 = vmatpush.msra.mxu0 %v4332
      %4358 = vmatmul.f32.gmra.mxu0 %v4337
      %v4359 = vpop.f32.mrf.mxu0
      %v4360 = vadd.f32 0.0, %v4359
      %4361 = vmatmul.f32.gmra.mxu0 %v4340
      %v4362 = vpop.f32.mrf.mxu0
      %v4363 = vadd.f32 0.0, %v4362
      %4364 = vdwg.mxu0
      %v4365 = vadd.f32 %v4308, %v4360
      %v4366 = vadd.f32 %v4309, %v4363
      %s4367 = scalar_lea.vmem %s9, 112
      %v4368 = vld [vmem:[%s4367] sm:$0xff]
      %v4369 = vld [vmem:[%s4367 + $0x8] sm:$0xff]
      %4370 = vrot.lane.b32.xlu0 %v3978, 3
      %v4371 = vpop.permute.xlu0 %4370
      %4372 = vrot.lane.b32.xlu0 %v3979, 3
      %v4373 = vpop.permute.xlu0 %4372
      %4374 = vrot.lane.b32.xlu0 %v3980, 3
      %v4375 = vpop.permute.xlu0 %4374
      %4376 = vrot.lane.b32.xlu0 %v3981, 3
      %v4377 = vpop.permute.xlu0 %4376
      %v4378 = vsel %vm613, %v4371, %v4373
      %v4379 = vsel %vm613, %v4375, %v4377
      %v4383 = vsel %vm793, %v4368, 0
      %v4386 = vsel %vm793, %v4369, 0
      %4388 = vmatpush.msra.mxu0 0.0
      %4389 = vmatpush.msra.mxu0 0.0
      %4390 = vmatpush.msra.mxu0 0.0
      %4391 = vmatpush.msra.mxu0 0.0
      %4392 = vmatpush.msra.mxu0 0.0
      %4393 = vmatpush.msra.mxu0 0.0
      %4394 = vmatpush.msra.mxu0 0.0
      %4395 = vmatpush.msra.mxu0 0.0
      %4396 = vmatpush.msra.mxu0 0.0
      %4397 = vmatpush.msra.mxu0 0.0
      %4398 = vmatpush.msra.mxu0 0.0
      %4399 = vmatpush.msra.mxu0 0.0
      %4400 = vmatpush.msra.mxu0 0.0
      %4401 = vmatpush.msra.mxu0 0.0
      %4402 = vmatpush.msra.mxu0 %v4379
      %4403 = vmatpush.msra.mxu0 %v4378
      %4404 = vmatmul.f32.gmra.mxu0 %v4383
      %v4405 = vpop.f32.mrf.mxu0
      %v4406 = vadd.f32 0.0, %v4405
      %4407 = vmatmul.f32.gmra.mxu0 %v4386
      %v4408 = vpop.f32.mrf.mxu0
      %v4409 = vadd.f32 0.0, %v4408
      %4410 = vdwg.mxu0
      %v4411 = vadd.f32 %v4365, %v4406
      %v4412 = vadd.f32 %v4366, %v4409
      %4413 = vrot.lane.b32.xlu0 %v4088, 126
      %v4414 = vpop.permute.xlu0 %4413
      %v4416 = vmul.f32 %v3978, %v4414
      %v4417 = vmul.f32 %v3979, %v4414
      %v4418 = vmul.f32 %v3980, %v4414
      %v4419 = vmul.f32 %v3981, %v4414
      %s4420 = scalar_lea.vmem %s9, 128
      %v4421 = vld [vmem:[%s4420] sm:$0xff]
      %v4422 = vld [vmem:[%s4420 + $0x8] sm:$0xff]
      %4427 = vrot.lane.b32.xlu0 %v4416, 2
      %v4428 = vpop.permute.xlu0 %4427
      %4429 = vrot.lane.b32.xlu0 %v4417, 2
      %v4430 = vpop.permute.xlu0 %4429
      %4431 = vrot.lane.b32.xlu0 %v4418, 2
      %v4432 = vpop.permute.xlu0 %4431
      %4433 = vrot.lane.b32.xlu0 %v4419, 2
      %v4434 = vpop.permute.xlu0 %4433
      %v4435 = vsel %vm718, %v4428, %v4430
      %v4436 = vsel %vm718, %v4432, %v4434
      %v4440 = vsel %vm793, %v4421, 0
      %v4443 = vsel %vm793, %v4422, 0
      %4445 = vmatpush.msra.mxu0 0.0
      %4446 = vmatpush.msra.mxu0 0.0
      %4447 = vmatpush.msra.mxu0 0.0
      %4448 = vmatpush.msra.mxu0 0.0
      %4449 = vmatpush.msra.mxu0 0.0
      %4450 = vmatpush.msra.mxu0 0.0
      %4451 = vmatpush.msra.mxu0 0.0
      %4452 = vmatpush.msra.mxu0 0.0
      %4453 = vmatpush.msra.mxu0 0.0
      %4454 = vmatpush.msra.mxu0 0.0
      %4455 = vmatpush.msra.mxu0 0.0
      %4456 = vmatpush.msra.mxu0 0.0
      %4457 = vmatpush.msra.mxu0 0.0
      %4458 = vmatpush.msra.mxu0 0.0
      %4459 = vmatpush.msra.mxu0 %v4436
      %4460 = vmatpush.msra.mxu0 %v4435
      %4461 = vmatmul.f32.gmra.mxu0 %v4440
      %v4462 = vpop.f32.mrf.mxu0
      %v4463 = vadd.f32 0.0, %v4462
      %4464 = vmatmul.f32.gmra.mxu0 %v4443
      %v4465 = vpop.f32.mrf.mxu0
      %v4466 = vadd.f32 0.0, %v4465
      %4467 = vdwg.mxu0
      %v4468 = vadd.f32 %v4411, %v4463
      %v4469 = vadd.f32 %v4412, %v4466
      %v4470 = vld [vmem:[%s10] sm:$0xff]
      %v4471 = vld [vmem:[%s10 + $0x8] sm:$0xff]
      %v4473 = vsel %vm3219, %v4470, 0
      %v4476 = vsel %vm3219, %v4471, 0
      %4478 = vmatpush.msra.mxu0 0.0
      %4479 = vmatpush.msra.mxu0 0.0
      %4480 = vmatpush.msra.mxu0 0.0
      %4481 = vmatpush.msra.mxu0 0.0
      %4482 = vmatpush.msra.mxu0 0.0
      %4483 = vmatpush.msra.mxu0 0.0
      %4484 = vmatpush.msra.mxu0 0.0
      %4485 = vmatpush.msra.mxu0 0.0
      %4486 = vmatpush.msra.mxu0 0.0
      %4487 = vmatpush.msra.mxu0 0.0
      %4488 = vmatpush.msra.mxu0 0.0
      %4489 = vmatpush.msra.mxu0 0.0
      %4490 = vmatpush.msra.mxu0 0.0
      %4491 = vmatpush.msra.mxu0 0.0
      %4492 = vmatpush.msra.mxu0 0.0
      %4493 = vmatpush.msra.mxu0 %v3958
      %4494 = vmatmul.f32.gmra.mxu0 %v4473
      %v4495 = vpop.f32.mrf.mxu0
      %v4496 = vadd.f32 0.0, %v4495
      %4497 = vmatmul.f32.gmra.mxu0 %v4476
      %v4498 = vpop.f32.mrf.mxu0
      %v4499 = vadd.f32 0.0, %v4498
      %4500 = vdwg.mxu0
      %v4501 = vadd.f32 %v4468, %v4496
      %v4502 = vadd.f32 %v4469, %v4499
      %v4503 = vmax.f32 %v4501, 0.0
      %v4504 = vmax.f32 %v4502, 0.0
      %v4505 = vld [vmem:[%s15] sm:$0xff]
      %v4506 = vld [vmem:[%s15 + $0x8] sm:$0x3]
      %v4508 = vsel %vm793, %v4505, 0
      %v4511 = vsel %vm793, %v4506, 0
      %4513 = vmatpush.msra.mxu0 0.0
      %4514 = vmatpush.msra.mxu0 0.0
      %4515 = vmatpush.msra.mxu0 0.0
      %4516 = vmatpush.msra.mxu0 0.0
      %4517 = vmatpush.msra.mxu0 0.0
      %4518 = vmatpush.msra.mxu0 0.0
      %4519 = vmatpush.msra.mxu0 0.0
      %4520 = vmatpush.msra.mxu0 0.0
      %4521 = vmatpush.msra.mxu0 0.0
      %4522 = vmatpush.msra.mxu0 0.0
      %4523 = vmatpush.msra.mxu0 0.0
      %4524 = vmatpush.msra.mxu0 0.0
      %4525 = vmatpush.msra.mxu0 0.0
      %4526 = vmatpush.msra.mxu0 0.0
      %4527 = vmatpush.msra.mxu0 %v4504
      %4528 = vmatpush.msra.mxu0 %v4503
      %4529 = vmatmul.f32.gmra.mxu0 %v4508
      %v4530 = vpop.f32.mrf.mxu0
      %v4531 = vadd.f32 0.0, %v4530
      %4532 = vmatmul.f32.gmra.mxu0 %v4511
      %v4533 = vpop.f32.mrf.mxu0
      %v4534 = vadd.f32 0.0, %v4533
      %4535 = vdwg.mxu0
      %v4536 = vsel %vm793, %v4531, 0.0
      %4537 = vadd.xlane.f32.xlu0 %v4536
      %v4538 = vpop.xlane.xlu0 %4537
      %vm4539 = vcmask 123904
      %v4540 = vsel %vm4539, %v4534, 0.0
      %4541 = vadd.xlane.f32.xlu0 %v4540
      %v4542 = vpop.xlane.xlu0 %4541
      %v4543 = vmul.f32 %v4538, 0.0625
      %v4544 = vmul.f32 %v4542, 0.0625
      %v4545 = vld [vmem:[%s16] sm:$0xff]
      %v4546 = vld [vmem:[%s16 + $0x8] sm:$0x3]
      %v4547 = vadd.f32 %v4543, %v4545
      %v4548 = vadd.f32 %v4544, %v4546
      %vm4549 = vcmask 7168
      %4550 = vst.msk [vmem:[%s548] sm:$0xff] %vm4549, %v4547
      %vm4551 = vcmask 1024
      %4552 = vst.msk [vmem:[%s548 + $0x8] sm:$0x3] %vm4551, %v4548
      %p4553 = scmp.lt.s32.totalorder %s28, 1
      %s4554 = scalar_select %p4553, %s28, 1
      %s4555 = smul.addr %s4554, 2
      %s4556 = smul.addr %s4555, 8
      %s4557 = scalar_lea.vmem %s17, %s4556
      // Predicated region
      $region89: #{tpu_custom_call.1} parent=87 // pred_check
        %p4558 = pneg %p408
      $region90: #{tpu_custom_call.1} parent=87 // pred_check_branch
        %4560 = sbr.rel (%p4558) target = $region92
      $region91: #{tpu_custom_call.1} parent=87 // pred_region
        _
      $region92: #{tpu_custom_call.1} parent=87 // pred_fallthru
        _
    $region88: #{tpu_custom_call.1} parent=5 // pred_fallthru
      _
    %p4561 = scmp.le.s32.totalorder 2, %s23
    // Predicated region
    $region93: #{tpu_custom_call.1} parent=5 // pred_check
      %p4562 = pneg %p4561
    $region94: #{tpu_custom_call.1} parent=5 // pred_check_branch
      %4564 = sbr.rel (%p4562) target = $region96
    $region95: #{tpu_custom_call.1} parent=5 // pred_region
      %s4565 = ssub.s32 %s23, 2
      // Predicated region
      $region97: #{tpu_custom_call.1} parent=95 // pred_check
        %p4566 = pneg %p414
      $region98: #{tpu_custom_call.1} parent=95 // pred_check_branch
        %4568 = sbr.rel (%p4566) target = $region100
      $region99: #{tpu_custom_call.1} parent=95 // pred_region
        %p4569 = scmp.lt.s32.totalorder %s29, 1
        %s4570 = scalar_select %p4569, %s29, 1
        %s4571 = smul.addr %s4570, 2
        %s4572 = smul.addr %s4571, 8
        %s4573 = scalar_lea.vmem %s17, %s4572
      $region100: #{tpu_custom_call.1} parent=95 // pred_fallthru
        _
    $region96: #{tpu_custom_call.1} parent=5 // pred_fallthru
      _
  $region6: #{tpu_custom_call.1} parent=0 // loop_footer
    %s27 = sadd.s32 1, %s23
  $region7: #{tpu_custom_call.1} parent=0 // loop_footer_branch
    %22 = sbr.rel target = $region3
  $region8: #{tpu_custom_call.1} parent=0 // loop_exit
    _

</llo_original>
